<compile_context>
chip_gen: v5e
topology: v5e:2x2
jax: 0.10.0
libtpu: 0.0.40
codegen_flags: <defaults>
</compile_context>

<pallas_src>
import functools

import jax
import jax.numpy as jnp
from jax import lax
from jax.experimental import pallas as pl
from jax.experimental.pallas import tpu as pltpu


def _round_up(n, m):
    return (n + m - 1) // m * m


def question_embedding_kernel(
    x_ref,      # (T, bt, E)  f32, time-major batch tile
    wih0_ref,   # (E,  4Hp)   bf16
    whh0_ref,   # (Hp, 4Hp)   bf16
    b0_ref,     # (1,  4Hp)   f32   (b_ih + b_hh, layer 0)
    wih1_ref,   # (Hp, 4Hp)   bf16
    whh1_ref,   # (Hp, 4Hp)   bf16
    b1_ref,     # (1,  4Hp)   f32
    wfc_ref,    # (Hp, 1024)  bf16
    bfc_ref,    # (1,  1024)  f32
    out_ref,    # (bt, 1024)  f32
    *,
    seq_len,
):
    f32, bf16 = jnp.float32, jnp.bfloat16
    T = seq_len
    bt = out_ref.shape[0]
    E = x_ref.shape[2]
    Hp = whh0_ref.shape[0]
    G = whh0_ref.shape[1]            # == 4 * Hp

    def cell_step(gates, c):
        # gates: (bt, 4Hp) pre-activations, PyTorch gate order (i, f, g, o).
        # Hp is a multiple of 128 so every slice is a lane-aligned free view.
        # TODO(synk): on v6e/v7x the sigmoid/tanh could run in bf16 (halves EUP pushes);
        # kept f32 for v5e portability / accuracy.
        i = jax.nn.sigmoid(gates[:, 0 * Hp:1 * Hp])
        f = jax.nn.sigmoid(gates[:, 1 * Hp:2 * Hp])
        g = jnp.tanh(gates[:, 2 * Hp:3 * Hp])
        o = jax.nn.sigmoid(gates[:, 3 * Hp:4 * Hp])
        c_new = f * c + i * g
        h_new = o * jnp.tanh(c_new)
        return h_new, c_new

    # ---- Hoisted layer-0 input projection: one big MXU matmul, bias folded in once.
    # x is time-major, so g0[s] below is a contiguous sublane slab (no per-step gather).
    # Cast x to bf16 in-kernel (HBM read stays f32-once); store g0 in bf16 to halve the
    # projection buffer (the f32 h@Whh partial is added back before the activations).
    x = x_ref[...].astype(bf16).reshape(T * bt, E)            # row = t*bt + b
    g0 = (jnp.dot(x, wih0_ref[...], preferred_element_type=f32)
          + b0_ref[...]).astype(bf16).reshape(T, bt, G)

    whh0 = whh0_ref[...]
    wih1 = wih1_ref[...]
    whh1 = whh1_ref[...]
    b1 = b1_ref[...]

    h0 = jnp.zeros((bt, Hp), f32)
    c0 = jnp.zeros((bt, Hp), f32)
    h1 = jnp.zeros((bt, Hp), f32)
    c1 = jnp.zeros((bt, Hp), f32)

    # ---- Software-pipelined recurrence: interleaved step s computes layer-0 step s and
    # layer-1 step s-1. Both consume only last-iteration state (h0 == h0[s-1],
    # h1 == h1[s-2]) so their matmuls / gate math are independent and overlap; the serial
    # chain is ~T+1 dependent steps instead of ~2T, with no h0_seq / g1 buffers.
    # T is small & static (question length) -> full unroll keeps state in vregs.
    # TODO(synk): for large T switch to lax.fori_loop(..., unroll=2..4) with g0 in VMEM scratch.
    for s in range(T + 1):
        h0b = h0.astype(bf16)
        if s >= 1:
            gates1 = (jnp.dot(h0b, wih1, preferred_element_type=f32)
                      + jnp.dot(h1.astype(bf16), whh1, preferred_element_type=f32)
                      + b1)
        if s < T:
            gates0 = g0[s].astype(f32) + jnp.dot(h0b, whh0,
                                                 preferred_element_type=f32)
            h0, c0 = cell_step(gates0, c0)
        if s >= 1:
            h1, c1 = cell_step(gates1, c1)

    # ---- fc(hidden[-1]); lane-dense (1024) output block.
    out_ref[...] = (jnp.dot(h1.astype(bf16), wfc_ref[...],
                            preferred_element_type=f32) + bfc_ref[...])


def _vmem_limit_bytes():
    # ~3/4 of physical per-core VMEM: ~96 MiB on v5e/v6e (128 MiB), ~48 MiB on v7x (64 MiB).
    try:
        cap = int(pltpu.get_tpu_info().vmem_capacity_bytes)
    except Exception:
        cap = 64 * 1024 * 1024
    return (cap * 3) // 4


def question_embedding(x, params, *, block_b=256):
    """x: (B, T, E) float32, batch_first — same layout as the PyTorch module."""
    B, T, E = x.shape

    # Batch tile: multiple of the f32 sublane (8), at most block_b rows (256 fills the
    # v6e/v7x 256x256 MXU), and >=2 grid tiles whenever B allows so the "parallel"
    # grid axis can shard across v7x's two TensorCores.
    B8 = _round_up(B, 8)
    if B8 >= 16:
        bt = min(block_b, _round_up(pl.cdiv(B8, 2), 8))
    else:
        bt = B8
    Bp = _round_up(B8, bt)
    if Bp != B:
        x = jnp.pad(x, ((0, Bp - B), (0, 0), (0, 0)))

    # Time-major input (one small XLA transpose of x) so the kernel's hoisted projection
    # yields contiguous per-step slabs; x stays f32 (cast to bf16 inside the kernel).
    xt = jnp.swapaxes(x, 0, 1)                     # (T, Bp, E)

    # Constant-index weight/bias blocks stay resident in VMEM across the batch grid.
    # TODO(synk): pipeline_mode=pl.Buffered(1) on these specs would halve their resident
    # footprint for production H on v7x; left off for portability across jax versions.
    def full(a):
        return pl.BlockSpec(a.shape, lambda i: (0,) * a.ndim)

    out = pl.pallas_call(
        functools.partial(question_embedding_kernel, seq_len=T),
        out_shape=jax.ShapeDtypeStruct((Bp, 1024), jnp.float32),
        grid=(Bp // bt,),
        in_specs=[
            pl.BlockSpec((T, bt, E), lambda i: (0, i, 0)),     # time-major batch tile i
            full(params["wih0"]), full(params["whh0"]), full(params["b0"]),
            full(params["wih1"]), full(params["whh1"]), full(params["b1"]),
            full(params["wfc"]), full(params["bfc"]),
        ],
        out_specs=pl.BlockSpec((bt, 1024), lambda i: (i, 0)),
        compiler_params=pltpu.CompilerParams(
            dimension_semantics=("parallel",),     # shard batch tiles across TCs (v7x)
            vmem_limit_bytes=_vmem_limit_bytes(),
        ),
    )(xt, params["wih0"], params["whh0"], params["b0"],
      params["wih1"], params["whh1"], params["b1"],
      params["wfc"], params["bfc"])
    return out[:B]


# ----------------------------------------------------------------------------------
# Parameter construction (PyTorch layouts) and packing into the kernel layout.
# ----------------------------------------------------------------------------------
def init_torch_params(key, word_embedding_size, hidden_size):
    """Deterministic synthetic params with PyTorch nn.LSTM / nn.Linear shapes."""
    E, H = word_embedding_size, hidden_size
    ks = jax.random.split(key, 10)
    s = 1.0 / (H ** 0.5)
    u = lambda k, shape: jax.random.uniform(k, shape, jnp.float32, -s, s)
    return {
        "w_ih0": u(ks[0], (4 * H, E)), "w_hh0": u(ks[1], (4 * H, H)),
        "b_ih0": u(ks[2], (4 * H,)),   "b_hh0": u(ks[3], (4 * H,)),
        "w_ih1": u(ks[4], (4 * H, H)), "w_hh1": u(ks[5], (4 * H, H)),
        "b_ih1": u(ks[6], (4 * H,)),   "b_hh1": u(ks[7], (4 * H,)),
        "w_fc":  u(ks[8], (1024, H)),  "b_fc":  u(ks[9], (1024,)),
    }


def pack_params(raw, hidden_size):
    """Transpose to (in, 4H), pad each gate block H -> Hp (lane aligned), cast to bf16.

    Zero-padding is exact: padded gate pre-activations are 0 -> i=f=o=0.5, g=0, so
    padded c/h stay 0 forever and padded fc rows are zero.
    """
    H = hidden_size
    Hp = _round_up(H, 128)

    def pack_w(w, in_dim, in_pad):
        # w: (4H, in_dim) PyTorch layout -> (in_dim + in_pad, 4*Hp), bf16.
        w4 = w.reshape(4, H, in_dim)
        w4 = jnp.pad(w4, ((0, 0), (0, Hp - H), (0, in_pad)))
        return (jnp.transpose(w4, (2, 0, 1))
                .reshape(in_dim + in_pad, 4 * Hp).astype(jnp.bfloat16))

    def pack_b(b_ih, b_hh):
        b = (b_ih + b_hh).reshape(4, H)
        b = jnp.pad(b, ((0, 0), (0, Hp - H)))
        return b.reshape(1, 4 * Hp).astype(jnp.float32)

    E = raw["w_ih0"].shape[1]
    wfc = jnp.pad(raw["w_fc"].T, ((0, Hp - H), (0, 0))).astype(jnp.bfloat16)
    return {
        "wih0": pack_w(raw["w_ih0"], E, 0),
        "whh0": pack_w(raw["w_hh0"], H, Hp - H),
        "b0":   pack_b(raw["b_ih0"], raw["b_hh0"]),
        "wih1": pack_w(raw["w_ih1"], H, Hp - H),
        "whh1": pack_w(raw["w_hh1"], H, Hp - H),
        "b1":   pack_b(raw["b_ih1"], raw["b_hh1"]),
        "wfc":  wfc,
        "bfc":  raw["b_fc"][None, :].astype(jnp.float32),
    }


def reference(x, raw):
    """Pure-JAX f32 reference mirroring nn.LSTM(num_layers=2, batch_first) + nn.Linear."""
    B, T, E = x.shape
    H = raw["w_hh0"].shape[1]

    def layer(seq, w_ih, w_hh, b_ih, b_hh):
        def cell(carry, x_t):
            h, c = carry
            gates = x_t @ w_ih.T + b_ih + h @ w_hh.T + b_hh
            i = jax.nn.sigmoid(gates[:, 0 * H:1 * H])
            f = jax.nn.sigmoid(gates[:, 1 * H:2 * H])
            g = jnp.tanh(gates[:, 2 * H:3 * H])
            o = jax.nn.sigmoid(gates[:, 3 * H:4 * H])
            c = f * c + i * g
            h = o * jnp.tanh(c)
            return (h, c), h

        init = (jnp.zeros((B, H), jnp.float32), jnp.zeros((B, H), jnp.float32))
        (h_T, _), hs = lax.scan(cell, init, jnp.swapaxes(seq, 0, 1))
        return jnp.swapaxes(hs, 0, 1), h_T

    seq0, _ = layer(x, raw["w_ih0"], raw["w_hh0"], raw["b_ih0"], raw["b_hh0"])
    _, h1 = layer(seq0, raw["w_ih1"], raw["w_hh1"], raw["b_ih1"], raw["b_hh1"])
    return h1 @ raw["w_fc"].T + raw["b_fc"]


if __name__ == "__main__":
    B, T, E, H = 2, 8, 32, 32
    key = jax.random.PRNGKey(0)
    k_x, k_p = jax.random.split(key)

    x = jax.random.normal(k_x, (B, T, E), jnp.float32)
    raw = init_torch_params(k_p, word_embedding_size=E, hidden_size=H)
    params = pack_params(raw, hidden_size=H)

    out = question_embedding(x, params)
    out = jax.block_until_ready(out)

    ref = reference(x, raw)
    assert out.shape == (B, 1024)
    # Kernel uses bf16 matmul inputs / bf16-stored input projection with f32 accumulation
    # and f32 gate math; reference is pure f32 — compare with a bf16-appropriate tolerance.
    assert jnp.allclose(out, ref, atol=5e-2, rtol=5e-2), float(jnp.max(jnp.abs(out - ref)))

    print("KERNEL_OK")
</pallas_src>

<mosaic_0001>
module attributes {stable_mosaic.version = 11 : i64} {
  func.func @question_embedding_kernel(%arg0: i32, %arg1: memref<8x8x32xf32, #tpu.memory_space<vmem>>, %arg2: memref<32x512xbf16, #tpu.memory_space<vmem>>, %arg3: memref<128x512xbf16, #tpu.memory_space<vmem>>, %arg4: memref<1x512xf32, #tpu.memory_space<vmem>>, %arg5: memref<128x512xbf16, #tpu.memory_space<vmem>>, %arg6: memref<128x512xbf16, #tpu.memory_space<vmem>>, %arg7: memref<1x512xf32, #tpu.memory_space<vmem>>, %arg8: memref<128x1024xbf16, #tpu.memory_space<vmem>>, %arg9: memref<1x1024xf32, #tpu.memory_space<vmem>>, %arg10: memref<8x1024xf32, #tpu.memory_space<vmem>>) attributes {dimension_semantics = [#tpu.dimension_semantics<parallel>], iteration_bounds = array<i64: 1>, scalar_prefetch = 0 : i64, scratch_operands = 0 : i64, tpu.core_type = #tpu.core_type<tc>, window_params = [{transform_indices = @transform_0, window_bounds = array<i64: 8, 8, 32>}, {pipeline_mode = #tpu.pipeline_mode<synchronous>, transform_indices = @transform_1, window_bounds = array<i64: 32, 512>}, {pipeline_mode = #tpu.pipeline_mode<synchronous>, transform_indices = @transform_2, window_bounds = array<i64: 128, 512>}, {pipeline_mode = #tpu.pipeline_mode<synchronous>, transform_indices = @transform_3, window_bounds = array<i64: 1, 512>}, {pipeline_mode = #tpu.pipeline_mode<synchronous>, transform_indices = @transform_4, window_bounds = array<i64: 128, 512>}, {pipeline_mode = #tpu.pipeline_mode<synchronous>, transform_indices = @transform_5, window_bounds = array<i64: 128, 512>}, {pipeline_mode = #tpu.pipeline_mode<synchronous>, transform_indices = @transform_6, window_bounds = array<i64: 1, 512>}, {pipeline_mode = #tpu.pipeline_mode<synchronous>, transform_indices = @transform_7, window_bounds = array<i64: 128, 1024>}, {pipeline_mode = #tpu.pipeline_mode<synchronous>, transform_indices = @transform_8, window_bounds = array<i64: 1, 1024>}, {transform_indices = @transform_9, window_bounds = array<i64: 8, 1024>}]} {
    %c0 = arith.constant 0 : index
    %c0_0 = arith.constant 0 : index
    %c0_1 = arith.constant 0 : index
    %0 = vector.load %arg1[%c0, %c0_0, %c0_1] : memref<8x8x32xf32, #tpu.memory_space<vmem>>, vector<8x8x32xf32>
    %1 = arith.truncf %0 : vector<8x8x32xf32> to vector<8x8x32xbf16>
    %2 = vector.shape_cast %1 : vector<8x8x32xbf16> to vector<64x32xbf16>
    %c0_2 = arith.constant 0 : index
    %c0_3 = arith.constant 0 : index
    %3 = vector.load %arg2[%c0_2, %c0_3] : memref<32x512xbf16, #tpu.memory_space<vmem>>, vector<32x512xbf16>
    %cst = arith.constant dense<0.000000e+00> : vector<64x512xf32>
    %4 = tpu.matmul %2, %3, %cst {dimension_numbers = #tpu.dot_dimension_numbers<[1], [0], [0], [1], [0, 0, 1, 1], [], []>} : vector<64x32xbf16>, vector<32x512xbf16>, vector<64x512xf32> -> vector<64x512xf32>
    %c0_4 = arith.constant 0 : index
    %c0_5 = arith.constant 0 : index
    %5 = vector.load %arg4[%c0_4, %c0_5] : memref<1x512xf32, #tpu.memory_space<vmem>>, vector<1x512xf32>
    %6 = vector.broadcast %5 : vector<1x512xf32> to vector<64x512xf32>
    %7 = arith.addf %4, %6 : vector<64x512xf32>
    %8 = arith.truncf %7 : vector<64x512xf32> to vector<64x512xbf16>
    %9 = vector.shape_cast %8 : vector<64x512xbf16> to vector<8x8x512xbf16>
    %c0_6 = arith.constant 0 : index
    %c0_7 = arith.constant 0 : index
    %10 = vector.load %arg3[%c0_6, %c0_7] : memref<128x512xbf16, #tpu.memory_space<vmem>>, vector<128x512xbf16>
    %c0_8 = arith.constant 0 : index
    %c0_9 = arith.constant 0 : index
    %11 = vector.load %arg5[%c0_8, %c0_9] : memref<128x512xbf16, #tpu.memory_space<vmem>>, vector<128x512xbf16>
    %c0_10 = arith.constant 0 : index
    %c0_11 = arith.constant 0 : index
    %12 = vector.load %arg6[%c0_10, %c0_11] : memref<128x512xbf16, #tpu.memory_space<vmem>>, vector<128x512xbf16>
    %c0_12 = arith.constant 0 : index
    %c0_13 = arith.constant 0 : index
    %13 = vector.load %arg7[%c0_12, %c0_13] : memref<1x512xf32, #tpu.memory_space<vmem>>, vector<1x512xf32>
    %cst_14 = arith.constant 0.000000e+00 : f32
    %14 = vector.broadcast %cst_14 : f32 to vector<8x128xf32>
    %cst_15 = arith.constant 0.000000e+00 : f32
    %15 = vector.broadcast %cst_15 : f32 to vector<8x128xf32>
    %cst_16 = arith.constant 0.000000e+00 : f32
    %16 = vector.broadcast %cst_16 : f32 to vector<8x128xf32>
    %cst_17 = arith.constant 0.000000e+00 : f32
    %17 = vector.broadcast %cst_17 : f32 to vector<8x128xf32>
    %18 = arith.truncf %14 : vector<8x128xf32> to vector<8x128xbf16>
    %19 = vector.extract_strided_slice %9 {offsets = [0, 0, 0], sizes = [1, 8, 512], strides = [1, 1, 1]} : vector<8x8x512xbf16> to vector<1x8x512xbf16>
    %20 = vector.shape_cast %19 : vector<1x8x512xbf16> to vector<8x512xbf16>
    %21 = arith.extf %20 : vector<8x512xbf16> to vector<8x512xf32>
    %cst_18 = arith.constant dense<0.000000e+00> : vector<8x512xf32>
    %22 = tpu.matmul %18, %10, %cst_18 {dimension_numbers = #tpu.dot_dimension_numbers<[1], [0], [0], [1], [0, 0, 1, 1], [], []>} : vector<8x128xbf16>, vector<128x512xbf16>, vector<8x512xf32> -> vector<8x512xf32>
    %23 = arith.addf %21, %22 : vector<8x512xf32>
    %24 = vector.extract_strided_slice %23 {offsets = [0, 0], sizes = [8, 128], strides = [1, 1]} : vector<8x512xf32> to vector<8x128xf32>
    %25 = arith.negf %24 : vector<8x128xf32>
    %26 = math.exp %25 : vector<8x128xf32>
    %cst_19 = arith.constant 1.000000e+00 : f32
    %27 = vector.broadcast %cst_19 : f32 to vector<8x128xf32>
    %28 = arith.addf %27, %26 : vector<8x128xf32>
    %29 = arith.divf %27, %28 : vector<8x128xf32>
    %30 = vector.extract_strided_slice %23 {offsets = [0, 128], sizes = [8, 128], strides = [1, 1]} : vector<8x512xf32> to vector<8x128xf32>
    %31 = arith.negf %30 : vector<8x128xf32>
    %32 = math.exp %31 : vector<8x128xf32>
    %cst_20 = arith.constant 1.000000e+00 : f32
    %33 = vector.broadcast %cst_20 : f32 to vector<8x128xf32>
    %34 = arith.addf %33, %32 : vector<8x128xf32>
    %35 = arith.divf %33, %34 : vector<8x128xf32>
    %36 = vector.extract_strided_slice %23 {offsets = [0, 256], sizes = [8, 128], strides = [1, 1]} : vector<8x512xf32> to vector<8x128xf32>
    %37 = math.tanh %36 : vector<8x128xf32>
    %38 = vector.extract_strided_slice %23 {offsets = [0, 384], sizes = [8, 128], strides = [1, 1]} : vector<8x512xf32> to vector<8x128xf32>
    %39 = arith.negf %38 : vector<8x128xf32>
    %40 = math.exp %39 : vector<8x128xf32>
    %cst_21 = arith.constant 1.000000e+00 : f32
    %41 = vector.broadcast %cst_21 : f32 to vector<8x128xf32>
    %42 = arith.addf %41, %40 : vector<8x128xf32>
    %43 = arith.divf %41, %42 : vector<8x128xf32>
    %44 = arith.mulf %35, %15 : vector<8x128xf32>
    %45 = arith.mulf %29, %37 : vector<8x128xf32>
    %46 = arith.addf %44, %45 : vector<8x128xf32>
    %47 = math.tanh %46 : vector<8x128xf32>
    %48 = arith.mulf %43, %47 : vector<8x128xf32>
    %49 = arith.truncf %48 : vector<8x128xf32> to vector<8x128xbf16>
    %cst_22 = arith.constant dense<0.000000e+00> : vector<8x512xf32>
    %50 = tpu.matmul %49, %11, %cst_22 {dimension_numbers = #tpu.dot_dimension_numbers<[1], [0], [0], [1], [0, 0, 1, 1], [], []>} : vector<8x128xbf16>, vector<128x512xbf16>, vector<8x512xf32> -> vector<8x512xf32>
    %51 = arith.truncf %16 : vector<8x128xf32> to vector<8x128xbf16>
    %cst_23 = arith.constant dense<0.000000e+00> : vector<8x512xf32>
    %52 = tpu.matmul %51, %12, %cst_23 {dimension_numbers = #tpu.dot_dimension_numbers<[1], [0], [0], [1], [0, 0, 1, 1], [], []>} : vector<8x128xbf16>, vector<128x512xbf16>, vector<8x512xf32> -> vector<8x512xf32>
    %53 = arith.addf %50, %52 : vector<8x512xf32>
    %54 = vector.broadcast %13 : vector<1x512xf32> to vector<8x512xf32>
    %55 = arith.addf %53, %54 : vector<8x512xf32>
    %56 = vector.extract_strided_slice %9 {offsets = [1, 0, 0], sizes = [1, 8, 512], strides = [1, 1, 1]} : vector<8x8x512xbf16> to vector<1x8x512xbf16>
    %57 = vector.shape_cast %56 : vector<1x8x512xbf16> to vector<8x512xbf16>
    %58 = arith.extf %57 : vector<8x512xbf16> to vector<8x512xf32>
    %cst_24 = arith.constant dense<0.000000e+00> : vector<8x512xf32>
    %59 = tpu.matmul %49, %10, %cst_24 {dimension_numbers = #tpu.dot_dimension_numbers<[1], [0], [0], [1], [0, 0, 1, 1], [], []>} : vector<8x128xbf16>, vector<128x512xbf16>, vector<8x512xf32> -> vector<8x512xf32>
    %60 = arith.addf %58, %59 : vector<8x512xf32>
    %61 = vector.extract_strided_slice %60 {offsets = [0, 0], sizes = [8, 128], strides = [1, 1]} : vector<8x512xf32> to vector<8x128xf32>
    %62 = arith.negf %61 : vector<8x128xf32>
    %63 = math.exp %62 : vector<8x128xf32>
    %cst_25 = arith.constant 1.000000e+00 : f32
    %64 = vector.broadcast %cst_25 : f32 to vector<8x128xf32>
    %65 = arith.addf %64, %63 : vector<8x128xf32>
    %66 = arith.divf %64, %65 : vector<8x128xf32>
    %67 = vector.extract_strided_slice %60 {offsets = [0, 128], sizes = [8, 128], strides = [1, 1]} : vector<8x512xf32> to vector<8x128xf32>
    %68 = arith.negf %67 : vector<8x128xf32>
    %69 = math.exp %68 : vector<8x128xf32>
    %cst_26 = arith.constant 1.000000e+00 : f32
    %70 = vector.broadcast %cst_26 : f32 to vector<8x128xf32>
    %71 = arith.addf %70, %69 : vector<8x128xf32>
    %72 = arith.divf %70, %71 : vector<8x128xf32>
    %73 = vector.extract_strided_slice %60 {offsets = [0, 256], sizes = [8, 128], strides = [1, 1]} : vector<8x512xf32> to vector<8x128xf32>
    %74 = math.tanh %73 : vector<8x128xf32>
    %75 = vector.extract_strided_slice %60 {offsets = [0, 384], sizes = [8, 128], strides = [1, 1]} : vector<8x512xf32> to vector<8x128xf32>
    %76 = arith.negf %75 : vector<8x128xf32>
    %77 = math.exp %76 : vector<8x128xf32>
    %cst_27 = arith.constant 1.000000e+00 : f32
    %78 = vector.broadcast %cst_27 : f32 to vector<8x128xf32>
    %79 = arith.addf %78, %77 : vector<8x128xf32>
    %80 = arith.divf %78, %79 : vector<8x128xf32>
    %81 = arith.mulf %72, %46 : vector<8x128xf32>
    %82 = arith.mulf %66, %74 : vector<8x128xf32>
    %83 = arith.addf %81, %82 : vector<8x128xf32>
    %84 = math.tanh %83 : vector<8x128xf32>
    %85 = arith.mulf %80, %84 : vector<8x128xf32>
    %86 = vector.extract_strided_slice %55 {offsets = [0, 0], sizes = [8, 128], strides = [1, 1]} : vector<8x512xf32> to vector<8x128xf32>
    %87 = arith.negf %86 : vector<8x128xf32>
    %88 = math.exp %87 : vector<8x128xf32>
    %cst_28 = arith.constant 1.000000e+00 : f32
    %89 = vector.broadcast %cst_28 : f32 to vector<8x128xf32>
    %90 = arith.addf %89, %88 : vector<8x128xf32>
    %91 = arith.divf %89, %90 : vector<8x128xf32>
    %92 = vector.extract_strided_slice %55 {offsets = [0, 128], sizes = [8, 128], strides = [1, 1]} : vector<8x512xf32> to vector<8x128xf32>
    %93 = arith.negf %92 : vector<8x128xf32>
    %94 = math.exp %93 : vector<8x128xf32>
    %cst_29 = arith.constant 1.000000e+00 : f32
    %95 = vector.broadcast %cst_29 : f32 to vector<8x128xf32>
    %96 = arith.addf %95, %94 : vector<8x128xf32>
    %97 = arith.divf %95, %96 : vector<8x128xf32>
    %98 = vector.extract_strided_slice %55 {offsets = [0, 256], sizes = [8, 128], strides = [1, 1]} : vector<8x512xf32> to vector<8x128xf32>
    %99 = math.tanh %98 : vector<8x128xf32>
    %100 = vector.extract_strided_slice %55 {offsets = [0, 384], sizes = [8, 128], strides = [1, 1]} : vector<8x512xf32> to vector<8x128xf32>
    %101 = arith.negf %100 : vector<8x128xf32>
    %102 = math.exp %101 : vector<8x128xf32>
    %cst_30 = arith.constant 1.000000e+00 : f32
    %103 = vector.broadcast %cst_30 : f32 to vector<8x128xf32>
    %104 = arith.addf %103, %102 : vector<8x128xf32>
    %105 = arith.divf %103, %104 : vector<8x128xf32>
    %106 = arith.mulf %97, %17 : vector<8x128xf32>
    %107 = arith.mulf %91, %99 : vector<8x128xf32>
    %108 = arith.addf %106, %107 : vector<8x128xf32>
    %109 = math.tanh %108 : vector<8x128xf32>
    %110 = arith.mulf %105, %109 : vector<8x128xf32>
    %111 = arith.truncf %85 : vector<8x128xf32> to vector<8x128xbf16>
    %cst_31 = arith.constant dense<0.000000e+00> : vector<8x512xf32>
    %112 = tpu.matmul %111, %11, %cst_31 {dimension_numbers = #tpu.dot_dimension_numbers<[1], [0], [0], [1], [0, 0, 1, 1], [], []>} : vector<8x128xbf16>, vector<128x512xbf16>, vector<8x512xf32> -> vector<8x512xf32>
    %113 = arith.truncf %110 : vector<8x128xf32> to vector<8x128xbf16>
    %cst_32 = arith.constant dense<0.000000e+00> : vector<8x512xf32>
    %114 = tpu.matmul %113, %12, %cst_32 {dimension_numbers = #tpu.dot_dimension_numbers<[1], [0], [0], [1], [0, 0, 1, 1], [], []>} : vector<8x128xbf16>, vector<128x512xbf16>, vector<8x512xf32> -> vector<8x512xf32>
    %115 = arith.addf %112, %114 : vector<8x512xf32>
    %116 = vector.broadcast %13 : vector<1x512xf32> to vector<8x512xf32>
    %117 = arith.addf %115, %116 : vector<8x512xf32>
    %118 = vector.extract_strided_slice %9 {offsets = [2, 0, 0], sizes = [1, 8, 512], strides = [1, 1, 1]} : vector<8x8x512xbf16> to vector<1x8x512xbf16>
    %119 = vector.shape_cast %118 : vector<1x8x512xbf16> to vector<8x512xbf16>
    %120 = arith.extf %119 : vector<8x512xbf16> to vector<8x512xf32>
    %cst_33 = arith.constant dense<0.000000e+00> : vector<8x512xf32>
    %121 = tpu.matmul %111, %10, %cst_33 {dimension_numbers = #tpu.dot_dimension_numbers<[1], [0], [0], [1], [0, 0, 1, 1], [], []>} : vector<8x128xbf16>, vector<128x512xbf16>, vector<8x512xf32> -> vector<8x512xf32>
    %122 = arith.addf %120, %121 : vector<8x512xf32>
    %123 = vector.extract_strided_slice %122 {offsets = [0, 0], sizes = [8, 128], strides = [1, 1]} : vector<8x512xf32> to vector<8x128xf32>
    %124 = arith.negf %123 : vector<8x128xf32>
    %125 = math.exp %124 : vector<8x128xf32>
    %cst_34 = arith.constant 1.000000e+00 : f32
    %126 = vector.broadcast %cst_34 : f32 to vector<8x128xf32>
    %127 = arith.addf %126, %125 : vector<8x128xf32>
    %128 = arith.divf %126, %127 : vector<8x128xf32>
    %129 = vector.extract_strided_slice %122 {offsets = [0, 128], sizes = [8, 128], strides = [1, 1]} : vector<8x512xf32> to vector<8x128xf32>
    %130 = arith.negf %129 : vector<8x128xf32>
    %131 = math.exp %130 : vector<8x128xf32>
    %cst_35 = arith.constant 1.000000e+00 : f32
    %132 = vector.broadcast %cst_35 : f32 to vector<8x128xf32>
    %133 = arith.addf %132, %131 : vector<8x128xf32>
    %134 = arith.divf %132, %133 : vector<8x128xf32>
    %135 = vector.extract_strided_slice %122 {offsets = [0, 256], sizes = [8, 128], strides = [1, 1]} : vector<8x512xf32> to vector<8x128xf32>
    %136 = math.tanh %135 : vector<8x128xf32>
    %137 = vector.extract_strided_slice %122 {offsets = [0, 384], sizes = [8, 128], strides = [1, 1]} : vector<8x512xf32> to vector<8x128xf32>
    %138 = arith.negf %137 : vector<8x128xf32>
    %139 = math.exp %138 : vector<8x128xf32>
    %cst_36 = arith.constant 1.000000e+00 : f32
    %140 = vector.broadcast %cst_36 : f32 to vector<8x128xf32>
    %141 = arith.addf %140, %139 : vector<8x128xf32>
    %142 = arith.divf %140, %141 : vector<8x128xf32>
    %143 = arith.mulf %134, %83 : vector<8x128xf32>
    %144 = arith.mulf %128, %136 : vector<8x128xf32>
    %145 = arith.addf %143, %144 : vector<8x128xf32>
    %146 = math.tanh %145 : vector<8x128xf32>
    %147 = arith.mulf %142, %146 : vector<8x128xf32>
    %148 = vector.extract_strided_slice %117 {offsets = [0, 0], sizes = [8, 128], strides = [1, 1]} : vector<8x512xf32> to vector<8x128xf32>
    %149 = arith.negf %148 : vector<8x128xf32>
    %150 = math.exp %149 : vector<8x128xf32>
    %cst_37 = arith.constant 1.000000e+00 : f32
    %151 = vector.broadcast %cst_37 : f32 to vector<8x128xf32>
    %152 = arith.addf %151, %150 : vector<8x128xf32>
    %153 = arith.divf %151, %152 : vector<8x128xf32>
    %154 = vector.extract_strided_slice %117 {offsets = [0, 128], sizes = [8, 128], strides = [1, 1]} : vector<8x512xf32> to vector<8x128xf32>
    %155 = arith.negf %154 : vector<8x128xf32>
    %156 = math.exp %155 : vector<8x128xf32>
    %cst_38 = arith.constant 1.000000e+00 : f32
    %157 = vector.broadcast %cst_38 : f32 to vector<8x128xf32>
    %158 = arith.addf %157, %156 : vector<8x128xf32>
    %159 = arith.divf %157, %158 : vector<8x128xf32>
    %160 = vector.extract_strided_slice %117 {offsets = [0, 256], sizes = [8, 128], strides = [1, 1]} : vector<8x512xf32> to vector<8x128xf32>
    %161 = math.tanh %160 : vector<8x128xf32>
    %162 = vector.extract_strided_slice %117 {offsets = [0, 384], sizes = [8, 128], strides = [1, 1]} : vector<8x512xf32> to vector<8x128xf32>
    %163 = arith.negf %162 : vector<8x128xf32>
    %164 = math.exp %163 : vector<8x128xf32>
    %cst_39 = arith.constant 1.000000e+00 : f32
    %165 = vector.broadcast %cst_39 : f32 to vector<8x128xf32>
    %166 = arith.addf %165, %164 : vector<8x128xf32>
    %167 = arith.divf %165, %166 : vector<8x128xf32>
    %168 = arith.mulf %159, %108 : vector<8x128xf32>
    %169 = arith.mulf %153, %161 : vector<8x128xf32>
    %170 = arith.addf %168, %169 : vector<8x128xf32>
    %171 = math.tanh %170 : vector<8x128xf32>
    %172 = arith.mulf %167, %171 : vector<8x128xf32>
    %173 = arith.truncf %147 : vector<8x128xf32> to vector<8x128xbf16>
    %cst_40 = arith.constant dense<0.000000e+00> : vector<8x512xf32>
    %174 = tpu.matmul %173, %11, %cst_40 {dimension_numbers = #tpu.dot_dimension_numbers<[1], [0], [0], [1], [0, 0, 1, 1], [], []>} : vector<8x128xbf16>, vector<128x512xbf16>, vector<8x512xf32> -> vector<8x512xf32>
    %175 = arith.truncf %172 : vector<8x128xf32> to vector<8x128xbf16>
    %cst_41 = arith.constant dense<0.000000e+00> : vector<8x512xf32>
    %176 = tpu.matmul %175, %12, %cst_41 {dimension_numbers = #tpu.dot_dimension_numbers<[1], [0], [0], [1], [0, 0, 1, 1], [], []>} : vector<8x128xbf16>, vector<128x512xbf16>, vector<8x512xf32> -> vector<8x512xf32>
    %177 = arith.addf %174, %176 : vector<8x512xf32>
    %178 = vector.broadcast %13 : vector<1x512xf32> to vector<8x512xf32>
    %179 = arith.addf %177, %178 : vector<8x512xf32>
    %180 = vector.extract_strided_slice %9 {offsets = [3, 0, 0], sizes = [1, 8, 512], strides = [1, 1, 1]} : vector<8x8x512xbf16> to vector<1x8x512xbf16>
    %181 = vector.shape_cast %180 : vector<1x8x512xbf16> to vector<8x512xbf16>
    %182 = arith.extf %181 : vector<8x512xbf16> to vector<8x512xf32>
    %cst_42 = arith.constant dense<0.000000e+00> : vector<8x512xf32>
    %183 = tpu.matmul %173, %10, %cst_42 {dimension_numbers = #tpu.dot_dimension_numbers<[1], [0], [0], [1], [0, 0, 1, 1], [], []>} : vector<8x128xbf16>, vector<128x512xbf16>, vector<8x512xf32> -> vector<8x512xf32>
    %184 = arith.addf %182, %183 : vector<8x512xf32>
    %185 = vector.extract_strided_slice %184 {offsets = [0, 0], sizes = [8, 128], strides = [1, 1]} : vector<8x512xf32> to vector<8x128xf32>
    %186 = arith.negf %185 : vector<8x128xf32>
    %187 = math.exp %186 : vector<8x128xf32>
    %cst_43 = arith.constant 1.000000e+00 : f32
    %188 = vector.broadcast %cst_43 : f32 to vector<8x128xf32>
    %189 = arith.addf %188, %187 : vector<8x128xf32>
    %190 = arith.divf %188, %189 : vector<8x128xf32>
    %191 = vector.extract_strided_slice %184 {offsets = [0, 128], sizes = [8, 128], strides = [1, 1]} : vector<8x512xf32> to vector<8x128xf32>
    %192 = arith.negf %191 : vector<8x128xf32>
    %193 = math.exp %192 : vector<8x128xf32>
    %cst_44 = arith.constant 1.000000e+00 : f32
    %194 = vector.broadcast %cst_44 : f32 to vector<8x128xf32>
    %195 = arith.addf %194, %193 : vector<8x128xf32>
    %196 = arith.divf %194, %195 : vector<8x128xf32>
    %197 = vector.extract_strided_slice %184 {offsets = [0, 256], sizes = [8, 128], strides = [1, 1]} : vector<8x512xf32> to vector<8x128xf32>
    %198 = math.tanh %197 : vector<8x128xf32>
    %199 = vector.extract_strided_slice %184 {offsets = [0, 384], sizes = [8, 128], strides = [1, 1]} : vector<8x512xf32> to vector<8x128xf32>
    %200 = arith.negf %199 : vector<8x128xf32>
    %201 = math.exp %200 : vector<8x128xf32>
    %cst_45 = arith.constant 1.000000e+00 : f32
    %202 = vector.broadcast %cst_45 : f32 to vector<8x128xf32>
    %203 = arith.addf %202, %201 : vector<8x128xf32>
    %204 = arith.divf %202, %203 : vector<8x128xf32>
    %205 = arith.mulf %196, %145 : vector<8x128xf32>
    %206 = arith.mulf %190, %198 : vector<8x128xf32>
    %207 = arith.addf %205, %206 : vector<8x128xf32>
    %208 = math.tanh %207 : vector<8x128xf32>
    %209 = arith.mulf %204, %208 : vector<8x128xf32>
    %210 = vector.extract_strided_slice %179 {offsets = [0, 0], sizes = [8, 128], strides = [1, 1]} : vector<8x512xf32> to vector<8x128xf32>
    %211 = arith.negf %210 : vector<8x128xf32>
    %212 = math.exp %211 : vector<8x128xf32>
    %cst_46 = arith.constant 1.000000e+00 : f32
    %213 = vector.broadcast %cst_46 : f32 to vector<8x128xf32>
    %214 = arith.addf %213, %212 : vector<8x128xf32>
    %215 = arith.divf %213, %214 : vector<8x128xf32>
    %216 = vector.extract_strided_slice %179 {offsets = [0, 128], sizes = [8, 128], strides = [1, 1]} : vector<8x512xf32> to vector<8x128xf32>
    %217 = arith.negf %216 : vector<8x128xf32>
    %218 = math.exp %217 : vector<8x128xf32>
    %cst_47 = arith.constant 1.000000e+00 : f32
    %219 = vector.broadcast %cst_47 : f32 to vector<8x128xf32>
    %220 = arith.addf %219, %218 : vector<8x128xf32>
    %221 = arith.divf %219, %220 : vector<8x128xf32>
    %222 = vector.extract_strided_slice %179 {offsets = [0, 256], sizes = [8, 128], strides = [1, 1]} : vector<8x512xf32> to vector<8x128xf32>
    %223 = math.tanh %222 : vector<8x128xf32>
    %224 = vector.extract_strided_slice %179 {offsets = [0, 384], sizes = [8, 128], strides = [1, 1]} : vector<8x512xf32> to vector<8x128xf32>
    %225 = arith.negf %224 : vector<8x128xf32>
    %226 = math.exp %225 : vector<8x128xf32>
    %cst_48 = arith.constant 1.000000e+00 : f32
    %227 = vector.broadcast %cst_48 : f32 to vector<8x128xf32>
    %228 = arith.addf %227, %226 : vector<8x128xf32>
    %229 = arith.divf %227, %228 : vector<8x128xf32>
    %230 = arith.mulf %221, %170 : vector<8x128xf32>
    %231 = arith.mulf %215, %223 : vector<8x128xf32>
    %232 = arith.addf %230, %231 : vector<8x128xf32>
    %233 = math.tanh %232 : vector<8x128xf32>
    %234 = arith.mulf %229, %233 : vector<8x128xf32>
    %235 = arith.truncf %209 : vector<8x128xf32> to vector<8x128xbf16>
    %cst_49 = arith.constant dense<0.000000e+00> : vector<8x512xf32>
    %236 = tpu.matmul %235, %11, %cst_49 {dimension_numbers = #tpu.dot_dimension_numbers<[1], [0], [0], [1], [0, 0, 1, 1], [], []>} : vector<8x128xbf16>, vector<128x512xbf16>, vector<8x512xf32> -> vector<8x512xf32>
    %237 = arith.truncf %234 : vector<8x128xf32> to vector<8x128xbf16>
    %cst_50 = arith.constant dense<0.000000e+00> : vector<8x512xf32>
    %238 = tpu.matmul %237, %12, %cst_50 {dimension_numbers = #tpu.dot_dimension_numbers<[1], [0], [0], [1], [0, 0, 1, 1], [], []>} : vector<8x128xbf16>, vector<128x512xbf16>, vector<8x512xf32> -> vector<8x512xf32>
    %239 = arith.addf %236, %238 : vector<8x512xf32>
    %240 = vector.broadcast %13 : vector<1x512xf32> to vector<8x512xf32>
    %241 = arith.addf %239, %240 : vector<8x512xf32>
    %242 = vector.extract_strided_slice %9 {offsets = [4, 0, 0], sizes = [1, 8, 512], strides = [1, 1, 1]} : vector<8x8x512xbf16> to vector<1x8x512xbf16>
    %243 = vector.shape_cast %242 : vector<1x8x512xbf16> to vector<8x512xbf16>
    %244 = arith.extf %243 : vector<8x512xbf16> to vector<8x512xf32>
    %cst_51 = arith.constant dense<0.000000e+00> : vector<8x512xf32>
    %245 = tpu.matmul %235, %10, %cst_51 {dimension_numbers = #tpu.dot_dimension_numbers<[1], [0], [0], [1], [0, 0, 1, 1], [], []>} : vector<8x128xbf16>, vector<128x512xbf16>, vector<8x512xf32> -> vector<8x512xf32>
    %246 = arith.addf %244, %245 : vector<8x512xf32>
    %247 = vector.extract_strided_slice %246 {offsets = [0, 0], sizes = [8, 128], strides = [1, 1]} : vector<8x512xf32> to vector<8x128xf32>
    %248 = arith.negf %247 : vector<8x128xf32>
    %249 = math.exp %248 : vector<8x128xf32>
    %cst_52 = arith.constant 1.000000e+00 : f32
    %250 = vector.broadcast %cst_52 : f32 to vector<8x128xf32>
    %251 = arith.addf %250, %249 : vector<8x128xf32>
    %252 = arith.divf %250, %251 : vector<8x128xf32>
    %253 = vector.extract_strided_slice %246 {offsets = [0, 128], sizes = [8, 128], strides = [1, 1]} : vector<8x512xf32> to vector<8x128xf32>
    %254 = arith.negf %253 : vector<8x128xf32>
    %255 = math.exp %254 : vector<8x128xf32>
    %cst_53 = arith.constant 1.000000e+00 : f32
    %256 = vector.broadcast %cst_53 : f32 to vector<8x128xf32>
    %257 = arith.addf %256, %255 : vector<8x128xf32>
    %258 = arith.divf %256, %257 : vector<8x128xf32>
    %259 = vector.extract_strided_slice %246 {offsets = [0, 256], sizes = [8, 128], strides = [1, 1]} : vector<8x512xf32> to vector<8x128xf32>
    %260 = math.tanh %259 : vector<8x128xf32>
    %261 = vector.extract_strided_slice %246 {offsets = [0, 384], sizes = [8, 128], strides = [1, 1]} : vector<8x512xf32> to vector<8x128xf32>
    %262 = arith.negf %261 : vector<8x128xf32>
    %263 = math.exp %262 : vector<8x128xf32>
    %cst_54 = arith.constant 1.000000e+00 : f32
    %264 = vector.broadcast %cst_54 : f32 to vector<8x128xf32>
    %265 = arith.addf %264, %263 : vector<8x128xf32>
    %266 = arith.divf %264, %265 : vector<8x128xf32>
    %267 = arith.mulf %258, %207 : vector<8x128xf32>
    %268 = arith.mulf %252, %260 : vector<8x128xf32>
    %269 = arith.addf %267, %268 : vector<8x128xf32>
    %270 = math.tanh %269 : vector<8x128xf32>
    %271 = arith.mulf %266, %270 : vector<8x128xf32>
    %272 = vector.extract_strided_slice %241 {offsets = [0, 0], sizes = [8, 128], strides = [1, 1]} : vector<8x512xf32> to vector<8x128xf32>
    %273 = arith.negf %272 : vector<8x128xf32>
    %274 = math.exp %273 : vector<8x128xf32>
    %cst_55 = arith.constant 1.000000e+00 : f32
    %275 = vector.broadcast %cst_55 : f32 to vector<8x128xf32>
    %276 = arith.addf %275, %274 : vector<8x128xf32>
    %277 = arith.divf %275, %276 : vector<8x128xf32>
    %278 = vector.extract_strided_slice %241 {offsets = [0, 128], sizes = [8, 128], strides = [1, 1]} : vector<8x512xf32> to vector<8x128xf32>
    %279 = arith.negf %278 : vector<8x128xf32>
    %280 = math.exp %279 : vector<8x128xf32>
    %cst_56 = arith.constant 1.000000e+00 : f32
    %281 = vector.broadcast %cst_56 : f32 to vector<8x128xf32>
    %282 = arith.addf %281, %280 : vector<8x128xf32>
    %283 = arith.divf %281, %282 : vector<8x128xf32>
    %284 = vector.extract_strided_slice %241 {offsets = [0, 256], sizes = [8, 128], strides = [1, 1]} : vector<8x512xf32> to vector<8x128xf32>
    %285 = math.tanh %284 : vector<8x128xf32>
    %286 = vector.extract_strided_slice %241 {offsets = [0, 384], sizes = [8, 128], strides = [1, 1]} : vector<8x512xf32> to vector<8x128xf32>
    %287 = arith.negf %286 : vector<8x128xf32>
    %288 = math.exp %287 : vector<8x128xf32>
    %cst_57 = arith.constant 1.000000e+00 : f32
    %289 = vector.broadcast %cst_57 : f32 to vector<8x128xf32>
    %290 = arith.addf %289, %288 : vector<8x128xf32>
    %291 = arith.divf %289, %290 : vector<8x128xf32>
    %292 = arith.mulf %283, %232 : vector<8x128xf32>
    %293 = arith.mulf %277, %285 : vector<8x128xf32>
    %294 = arith.addf %292, %293 : vector<8x128xf32>
    %295 = math.tanh %294 : vector<8x128xf32>
    %296 = arith.mulf %291, %295 : vector<8x128xf32>
    %297 = arith.truncf %271 : vector<8x128xf32> to vector<8x128xbf16>
    %cst_58 = arith.constant dense<0.000000e+00> : vector<8x512xf32>
    %298 = tpu.matmul %297, %11, %cst_58 {dimension_numbers = #tpu.dot_dimension_numbers<[1], [0], [0], [1], [0, 0, 1, 1], [], []>} : vector<8x128xbf16>, vector<128x512xbf16>, vector<8x512xf32> -> vector<8x512xf32>
    %299 = arith.truncf %296 : vector<8x128xf32> to vector<8x128xbf16>
    %cst_59 = arith.constant dense<0.000000e+00> : vector<8x512xf32>
    %300 = tpu.matmul %299, %12, %cst_59 {dimension_numbers = #tpu.dot_dimension_numbers<[1], [0], [0], [1], [0, 0, 1, 1], [], []>} : vector<8x128xbf16>, vector<128x512xbf16>, vector<8x512xf32> -> vector<8x512xf32>
    %301 = arith.addf %298, %300 : vector<8x512xf32>
    %302 = vector.broadcast %13 : vector<1x512xf32> to vector<8x512xf32>
    %303 = arith.addf %301, %302 : vector<8x512xf32>
    %304 = vector.extract_strided_slice %9 {offsets = [5, 0, 0], sizes = [1, 8, 512], strides = [1, 1, 1]} : vector<8x8x512xbf16> to vector<1x8x512xbf16>
    %305 = vector.shape_cast %304 : vector<1x8x512xbf16> to vector<8x512xbf16>
    %306 = arith.extf %305 : vector<8x512xbf16> to vector<8x512xf32>
    %cst_60 = arith.constant dense<0.000000e+00> : vector<8x512xf32>
    %307 = tpu.matmul %297, %10, %cst_60 {dimension_numbers = #tpu.dot_dimension_numbers<[1], [0], [0], [1], [0, 0, 1, 1], [], []>} : vector<8x128xbf16>, vector<128x512xbf16>, vector<8x512xf32> -> vector<8x512xf32>
    %308 = arith.addf %306, %307 : vector<8x512xf32>
    %309 = vector.extract_strided_slice %308 {offsets = [0, 0], sizes = [8, 128], strides = [1, 1]} : vector<8x512xf32> to vector<8x128xf32>
    %310 = arith.negf %309 : vector<8x128xf32>
    %311 = math.exp %310 : vector<8x128xf32>
    %cst_61 = arith.constant 1.000000e+00 : f32
    %312 = vector.broadcast %cst_61 : f32 to vector<8x128xf32>
    %313 = arith.addf %312, %311 : vector<8x128xf32>
    %314 = arith.divf %312, %313 : vector<8x128xf32>
    %315 = vector.extract_strided_slice %308 {offsets = [0, 128], sizes = [8, 128], strides = [1, 1]} : vector<8x512xf32> to vector<8x128xf32>
    %316 = arith.negf %315 : vector<8x128xf32>
    %317 = math.exp %316 : vector<8x128xf32>
    %cst_62 = arith.constant 1.000000e+00 : f32
    %318 = vector.broadcast %cst_62 : f32 to vector<8x128xf32>
    %319 = arith.addf %318, %317 : vector<8x128xf32>
    %320 = arith.divf %318, %319 : vector<8x128xf32>
    %321 = vector.extract_strided_slice %308 {offsets = [0, 256], sizes = [8, 128], strides = [1, 1]} : vector<8x512xf32> to vector<8x128xf32>
    %322 = math.tanh %321 : vector<8x128xf32>
    %323 = vector.extract_strided_slice %308 {offsets = [0, 384], sizes = [8, 128], strides = [1, 1]} : vector<8x512xf32> to vector<8x128xf32>
    %324 = arith.negf %323 : vector<8x128xf32>
    %325 = math.exp %324 : vector<8x128xf32>
    %cst_63 = arith.constant 1.000000e+00 : f32
    %326 = vector.broadcast %cst_63 : f32 to vector<8x128xf32>
    %327 = arith.addf %326, %325 : vector<8x128xf32>
    %328 = arith.divf %326, %327 : vector<8x128xf32>
    %329 = arith.mulf %320, %269 : vector<8x128xf32>
    %330 = arith.mulf %314, %322 : vector<8x128xf32>
    %331 = arith.addf %329, %330 : vector<8x128xf32>
    %332 = math.tanh %331 : vector<8x128xf32>
    %333 = arith.mulf %328, %332 : vector<8x128xf32>
    %334 = vector.extract_strided_slice %303 {offsets = [0, 0], sizes = [8, 128], strides = [1, 1]} : vector<8x512xf32> to vector<8x128xf32>
    %335 = arith.negf %334 : vector<8x128xf32>
    %336 = math.exp %335 : vector<8x128xf32>
    %cst_64 = arith.constant 1.000000e+00 : f32
    %337 = vector.broadcast %cst_64 : f32 to vector<8x128xf32>
    %338 = arith.addf %337, %336 : vector<8x128xf32>
    %339 = arith.divf %337, %338 : vector<8x128xf32>
    %340 = vector.extract_strided_slice %303 {offsets = [0, 128], sizes = [8, 128], strides = [1, 1]} : vector<8x512xf32> to vector<8x128xf32>
    %341 = arith.negf %340 : vector<8x128xf32>
    %342 = math.exp %341 : vector<8x128xf32>
    %cst_65 = arith.constant 1.000000e+00 : f32
    %343 = vector.broadcast %cst_65 : f32 to vector<8x128xf32>
    %344 = arith.addf %343, %342 : vector<8x128xf32>
    %345 = arith.divf %343, %344 : vector<8x128xf32>
    %346 = vector.extract_strided_slice %303 {offsets = [0, 256], sizes = [8, 128], strides = [1, 1]} : vector<8x512xf32> to vector<8x128xf32>
    %347 = math.tanh %346 : vector<8x128xf32>
    %348 = vector.extract_strided_slice %303 {offsets = [0, 384], sizes = [8, 128], strides = [1, 1]} : vector<8x512xf32> to vector<8x128xf32>
    %349 = arith.negf %348 : vector<8x128xf32>
    %350 = math.exp %349 : vector<8x128xf32>
    %cst_66 = arith.constant 1.000000e+00 : f32
    %351 = vector.broadcast %cst_66 : f32 to vector<8x128xf32>
    %352 = arith.addf %351, %350 : vector<8x128xf32>
    %353 = arith.divf %351, %352 : vector<8x128xf32>
    %354 = arith.mulf %345, %294 : vector<8x128xf32>
    %355 = arith.mulf %339, %347 : vector<8x128xf32>
    %356 = arith.addf %354, %355 : vector<8x128xf32>
    %357 = math.tanh %356 : vector<8x128xf32>
    %358 = arith.mulf %353, %357 : vector<8x128xf32>
    %359 = arith.truncf %333 : vector<8x128xf32> to vector<8x128xbf16>
    %cst_67 = arith.constant dense<0.000000e+00> : vector<8x512xf32>
    %360 = tpu.matmul %359, %11, %cst_67 {dimension_numbers = #tpu.dot_dimension_numbers<[1], [0], [0], [1], [0, 0, 1, 1], [], []>} : vector<8x128xbf16>, vector<128x512xbf16>, vector<8x512xf32> -> vector<8x512xf32>
    %361 = arith.truncf %358 : vector<8x128xf32> to vector<8x128xbf16>
    %cst_68 = arith.constant dense<0.000000e+00> : vector<8x512xf32>
    %362 = tpu.matmul %361, %12, %cst_68 {dimension_numbers = #tpu.dot_dimension_numbers<[1], [0], [0], [1], [0, 0, 1, 1], [], []>} : vector<8x128xbf16>, vector<128x512xbf16>, vector<8x512xf32> -> vector<8x512xf32>
    %363 = arith.addf %360, %362 : vector<8x512xf32>
    %364 = vector.broadcast %13 : vector<1x512xf32> to vector<8x512xf32>
    %365 = arith.addf %363, %364 : vector<8x512xf32>
    %366 = vector.extract_strided_slice %9 {offsets = [6, 0, 0], sizes = [1, 8, 512], strides = [1, 1, 1]} : vector<8x8x512xbf16> to vector<1x8x512xbf16>
    %367 = vector.shape_cast %366 : vector<1x8x512xbf16> to vector<8x512xbf16>
    %368 = arith.extf %367 : vector<8x512xbf16> to vector<8x512xf32>
    %cst_69 = arith.constant dense<0.000000e+00> : vector<8x512xf32>
    %369 = tpu.matmul %359, %10, %cst_69 {dimension_numbers = #tpu.dot_dimension_numbers<[1], [0], [0], [1], [0, 0, 1, 1], [], []>} : vector<8x128xbf16>, vector<128x512xbf16>, vector<8x512xf32> -> vector<8x512xf32>
    %370 = arith.addf %368, %369 : vector<8x512xf32>
    %371 = vector.extract_strided_slice %370 {offsets = [0, 0], sizes = [8, 128], strides = [1, 1]} : vector<8x512xf32> to vector<8x128xf32>
    %372 = arith.negf %371 : vector<8x128xf32>
    %373 = math.exp %372 : vector<8x128xf32>
    %cst_70 = arith.constant 1.000000e+00 : f32
    %374 = vector.broadcast %cst_70 : f32 to vector<8x128xf32>
    %375 = arith.addf %374, %373 : vector<8x128xf32>
    %376 = arith.divf %374, %375 : vector<8x128xf32>
    %377 = vector.extract_strided_slice %370 {offsets = [0, 128], sizes = [8, 128], strides = [1, 1]} : vector<8x512xf32> to vector<8x128xf32>
    %378 = arith.negf %377 : vector<8x128xf32>
    %379 = math.exp %378 : vector<8x128xf32>
    %cst_71 = arith.constant 1.000000e+00 : f32
    %380 = vector.broadcast %cst_71 : f32 to vector<8x128xf32>
    %381 = arith.addf %380, %379 : vector<8x128xf32>
    %382 = arith.divf %380, %381 : vector<8x128xf32>
    %383 = vector.extract_strided_slice %370 {offsets = [0, 256], sizes = [8, 128], strides = [1, 1]} : vector<8x512xf32> to vector<8x128xf32>
    %384 = math.tanh %383 : vector<8x128xf32>
    %385 = vector.extract_strided_slice %370 {offsets = [0, 384], sizes = [8, 128], strides = [1, 1]} : vector<8x512xf32> to vector<8x128xf32>
    %386 = arith.negf %385 : vector<8x128xf32>
    %387 = math.exp %386 : vector<8x128xf32>
    %cst_72 = arith.constant 1.000000e+00 : f32
    %388 = vector.broadcast %cst_72 : f32 to vector<8x128xf32>
    %389 = arith.addf %388, %387 : vector<8x128xf32>
    %390 = arith.divf %388, %389 : vector<8x128xf32>
    %391 = arith.mulf %382, %331 : vector<8x128xf32>
    %392 = arith.mulf %376, %384 : vector<8x128xf32>
    %393 = arith.addf %391, %392 : vector<8x128xf32>
    %394 = math.tanh %393 : vector<8x128xf32>
    %395 = arith.mulf %390, %394 : vector<8x128xf32>
    %396 = vector.extract_strided_slice %365 {offsets = [0, 0], sizes = [8, 128], strides = [1, 1]} : vector<8x512xf32> to vector<8x128xf32>
    %397 = arith.negf %396 : vector<8x128xf32>
    %398 = math.exp %397 : vector<8x128xf32>
    %cst_73 = arith.constant 1.000000e+00 : f32
    %399 = vector.broadcast %cst_73 : f32 to vector<8x128xf32>
    %400 = arith.addf %399, %398 : vector<8x128xf32>
    %401 = arith.divf %399, %400 : vector<8x128xf32>
    %402 = vector.extract_strided_slice %365 {offsets = [0, 128], sizes = [8, 128], strides = [1, 1]} : vector<8x512xf32> to vector<8x128xf32>
    %403 = arith.negf %402 : vector<8x128xf32>
    %404 = math.exp %403 : vector<8x128xf32>
    %cst_74 = arith.constant 1.000000e+00 : f32
    %405 = vector.broadcast %cst_74 : f32 to vector<8x128xf32>
    %406 = arith.addf %405, %404 : vector<8x128xf32>
    %407 = arith.divf %405, %406 : vector<8x128xf32>
    %408 = vector.extract_strided_slice %365 {offsets = [0, 256], sizes = [8, 128], strides = [1, 1]} : vector<8x512xf32> to vector<8x128xf32>
    %409 = math.tanh %408 : vector<8x128xf32>
    %410 = vector.extract_strided_slice %365 {offsets = [0, 384], sizes = [8, 128], strides = [1, 1]} : vector<8x512xf32> to vector<8x128xf32>
    %411 = arith.negf %410 : vector<8x128xf32>
    %412 = math.exp %411 : vector<8x128xf32>
    %cst_75 = arith.constant 1.000000e+00 : f32
    %413 = vector.broadcast %cst_75 : f32 to vector<8x128xf32>
    %414 = arith.addf %413, %412 : vector<8x128xf32>
    %415 = arith.divf %413, %414 : vector<8x128xf32>
    %416 = arith.mulf %407, %356 : vector<8x128xf32>
    %417 = arith.mulf %401, %409 : vector<8x128xf32>
    %418 = arith.addf %416, %417 : vector<8x128xf32>
    %419 = math.tanh %418 : vector<8x128xf32>
    %420 = arith.mulf %415, %419 : vector<8x128xf32>
    %421 = arith.truncf %395 : vector<8x128xf32> to vector<8x128xbf16>
    %cst_76 = arith.constant dense<0.000000e+00> : vector<8x512xf32>
    %422 = tpu.matmul %421, %11, %cst_76 {dimension_numbers = #tpu.dot_dimension_numbers<[1], [0], [0], [1], [0, 0, 1, 1], [], []>} : vector<8x128xbf16>, vector<128x512xbf16>, vector<8x512xf32> -> vector<8x512xf32>
    %423 = arith.truncf %420 : vector<8x128xf32> to vector<8x128xbf16>
    %cst_77 = arith.constant dense<0.000000e+00> : vector<8x512xf32>
    %424 = tpu.matmul %423, %12, %cst_77 {dimension_numbers = #tpu.dot_dimension_numbers<[1], [0], [0], [1], [0, 0, 1, 1], [], []>} : vector<8x128xbf16>, vector<128x512xbf16>, vector<8x512xf32> -> vector<8x512xf32>
    %425 = arith.addf %422, %424 : vector<8x512xf32>
    %426 = vector.broadcast %13 : vector<1x512xf32> to vector<8x512xf32>
    %427 = arith.addf %425, %426 : vector<8x512xf32>
    %428 = vector.extract_strided_slice %9 {offsets = [7, 0, 0], sizes = [1, 8, 512], strides = [1, 1, 1]} : vector<8x8x512xbf16> to vector<1x8x512xbf16>
    %429 = vector.shape_cast %428 : vector<1x8x512xbf16> to vector<8x512xbf16>
    %430 = arith.extf %429 : vector<8x512xbf16> to vector<8x512xf32>
    %cst_78 = arith.constant dense<0.000000e+00> : vector<8x512xf32>
    %431 = tpu.matmul %421, %10, %cst_78 {dimension_numbers = #tpu.dot_dimension_numbers<[1], [0], [0], [1], [0, 0, 1, 1], [], []>} : vector<8x128xbf16>, vector<128x512xbf16>, vector<8x512xf32> -> vector<8x512xf32>
    %432 = arith.addf %430, %431 : vector<8x512xf32>
    %433 = vector.extract_strided_slice %432 {offsets = [0, 0], sizes = [8, 128], strides = [1, 1]} : vector<8x512xf32> to vector<8x128xf32>
    %434 = arith.negf %433 : vector<8x128xf32>
    %435 = math.exp %434 : vector<8x128xf32>
    %cst_79 = arith.constant 1.000000e+00 : f32
    %436 = vector.broadcast %cst_79 : f32 to vector<8x128xf32>
    %437 = arith.addf %436, %435 : vector<8x128xf32>
    %438 = arith.divf %436, %437 : vector<8x128xf32>
    %439 = vector.extract_strided_slice %432 {offsets = [0, 128], sizes = [8, 128], strides = [1, 1]} : vector<8x512xf32> to vector<8x128xf32>
    %440 = arith.negf %439 : vector<8x128xf32>
    %441 = math.exp %440 : vector<8x128xf32>
    %cst_80 = arith.constant 1.000000e+00 : f32
    %442 = vector.broadcast %cst_80 : f32 to vector<8x128xf32>
    %443 = arith.addf %442, %441 : vector<8x128xf32>
    %444 = arith.divf %442, %443 : vector<8x128xf32>
    %445 = vector.extract_strided_slice %432 {offsets = [0, 256], sizes = [8, 128], strides = [1, 1]} : vector<8x512xf32> to vector<8x128xf32>
    %446 = math.tanh %445 : vector<8x128xf32>
    %447 = vector.extract_strided_slice %432 {offsets = [0, 384], sizes = [8, 128], strides = [1, 1]} : vector<8x512xf32> to vector<8x128xf32>
    %448 = arith.negf %447 : vector<8x128xf32>
    %449 = math.exp %448 : vector<8x128xf32>
    %cst_81 = arith.constant 1.000000e+00 : f32
    %450 = vector.broadcast %cst_81 : f32 to vector<8x128xf32>
    %451 = arith.addf %450, %449 : vector<8x128xf32>
    %452 = arith.divf %450, %451 : vector<8x128xf32>
    %453 = arith.mulf %444, %393 : vector<8x128xf32>
    %454 = arith.mulf %438, %446 : vector<8x128xf32>
    %455 = arith.addf %453, %454 : vector<8x128xf32>
    %456 = math.tanh %455 : vector<8x128xf32>
    %457 = arith.mulf %452, %456 : vector<8x128xf32>
    %458 = vector.extract_strided_slice %427 {offsets = [0, 0], sizes = [8, 128], strides = [1, 1]} : vector<8x512xf32> to vector<8x128xf32>
    %459 = arith.negf %458 : vector<8x128xf32>
    %460 = math.exp %459 : vector<8x128xf32>
    %cst_82 = arith.constant 1.000000e+00 : f32
    %461 = vector.broadcast %cst_82 : f32 to vector<8x128xf32>
    %462 = arith.addf %461, %460 : vector<8x128xf32>
    %463 = arith.divf %461, %462 : vector<8x128xf32>
    %464 = vector.extract_strided_slice %427 {offsets = [0, 128], sizes = [8, 128], strides = [1, 1]} : vector<8x512xf32> to vector<8x128xf32>
    %465 = arith.negf %464 : vector<8x128xf32>
    %466 = math.exp %465 : vector<8x128xf32>
    %cst_83 = arith.constant 1.000000e+00 : f32
    %467 = vector.broadcast %cst_83 : f32 to vector<8x128xf32>
    %468 = arith.addf %467, %466 : vector<8x128xf32>
    %469 = arith.divf %467, %468 : vector<8x128xf32>
    %470 = vector.extract_strided_slice %427 {offsets = [0, 256], sizes = [8, 128], strides = [1, 1]} : vector<8x512xf32> to vector<8x128xf32>
    %471 = math.tanh %470 : vector<8x128xf32>
    %472 = vector.extract_strided_slice %427 {offsets = [0, 384], sizes = [8, 128], strides = [1, 1]} : vector<8x512xf32> to vector<8x128xf32>
    %473 = arith.negf %472 : vector<8x128xf32>
    %474 = math.exp %473 : vector<8x128xf32>
    %cst_84 = arith.constant 1.000000e+00 : f32
    %475 = vector.broadcast %cst_84 : f32 to vector<8x128xf32>
    %476 = arith.addf %475, %474 : vector<8x128xf32>
    %477 = arith.divf %475, %476 : vector<8x128xf32>
    %478 = arith.mulf %469, %418 : vector<8x128xf32>
    %479 = arith.mulf %463, %471 : vector<8x128xf32>
    %480 = arith.addf %478, %479 : vector<8x128xf32>
    %481 = math.tanh %480 : vector<8x128xf32>
    %482 = arith.mulf %477, %481 : vector<8x128xf32>
    %483 = arith.truncf %457 : vector<8x128xf32> to vector<8x128xbf16>
    %cst_85 = arith.constant dense<0.000000e+00> : vector<8x512xf32>
    %484 = tpu.matmul %483, %11, %cst_85 {dimension_numbers = #tpu.dot_dimension_numbers<[1], [0], [0], [1], [0, 0, 1, 1], [], []>} : vector<8x128xbf16>, vector<128x512xbf16>, vector<8x512xf32> -> vector<8x512xf32>
    %485 = arith.truncf %482 : vector<8x128xf32> to vector<8x128xbf16>
    %cst_86 = arith.constant dense<0.000000e+00> : vector<8x512xf32>
    %486 = tpu.matmul %485, %12, %cst_86 {dimension_numbers = #tpu.dot_dimension_numbers<[1], [0], [0], [1], [0, 0, 1, 1], [], []>} : vector<8x128xbf16>, vector<128x512xbf16>, vector<8x512xf32> -> vector<8x512xf32>
    %487 = arith.addf %484, %486 : vector<8x512xf32>
    %488 = vector.broadcast %13 : vector<1x512xf32> to vector<8x512xf32>
    %489 = arith.addf %487, %488 : vector<8x512xf32>
    %490 = vector.extract_strided_slice %489 {offsets = [0, 0], sizes = [8, 128], strides = [1, 1]} : vector<8x512xf32> to vector<8x128xf32>
    %491 = arith.negf %490 : vector<8x128xf32>
    %492 = math.exp %491 : vector<8x128xf32>
    %cst_87 = arith.constant 1.000000e+00 : f32
    %493 = vector.broadcast %cst_87 : f32 to vector<8x128xf32>
    %494 = arith.addf %493, %492 : vector<8x128xf32>
    %495 = arith.divf %493, %494 : vector<8x128xf32>
    %496 = vector.extract_strided_slice %489 {offsets = [0, 128], sizes = [8, 128], strides = [1, 1]} : vector<8x512xf32> to vector<8x128xf32>
    %497 = arith.negf %496 : vector<8x128xf32>
    %498 = math.exp %497 : vector<8x128xf32>
    %cst_88 = arith.constant 1.000000e+00 : f32
    %499 = vector.broadcast %cst_88 : f32 to vector<8x128xf32>
    %500 = arith.addf %499, %498 : vector<8x128xf32>
    %501 = arith.divf %499, %500 : vector<8x128xf32>
    %502 = vector.extract_strided_slice %489 {offsets = [0, 256], sizes = [8, 128], strides = [1, 1]} : vector<8x512xf32> to vector<8x128xf32>
    %503 = math.tanh %502 : vector<8x128xf32>
    %504 = vector.extract_strided_slice %489 {offsets = [0, 384], sizes = [8, 128], strides = [1, 1]} : vector<8x512xf32> to vector<8x128xf32>
    %505 = arith.negf %504 : vector<8x128xf32>
    %506 = math.exp %505 : vector<8x128xf32>
    %cst_89 = arith.constant 1.000000e+00 : f32
    %507 = vector.broadcast %cst_89 : f32 to vector<8x128xf32>
    %508 = arith.addf %507, %506 : vector<8x128xf32>
    %509 = arith.divf %507, %508 : vector<8x128xf32>
    %510 = arith.mulf %501, %480 : vector<8x128xf32>
    %511 = arith.mulf %495, %503 : vector<8x128xf32>
    %512 = arith.addf %510, %511 : vector<8x128xf32>
    %513 = math.tanh %512 : vector<8x128xf32>
    %514 = arith.mulf %509, %513 : vector<8x128xf32>
    %515 = arith.truncf %514 : vector<8x128xf32> to vector<8x128xbf16>
    %c0_90 = arith.constant 0 : index
    %c0_91 = arith.constant 0 : index
    %516 = vector.load %arg8[%c0_90, %c0_91] : memref<128x1024xbf16, #tpu.memory_space<vmem>>, vector<128x1024xbf16>
    %cst_92 = arith.constant dense<0.000000e+00> : vector<8x1024xf32>
    %517 = tpu.matmul %515, %516, %cst_92 {dimension_numbers = #tpu.dot_dimension_numbers<[1], [0], [0], [1], [0, 0, 1, 1], [], []>} : vector<8x128xbf16>, vector<128x1024xbf16>, vector<8x1024xf32> -> vector<8x1024xf32>
    %c0_93 = arith.constant 0 : index
    %c0_94 = arith.constant 0 : index
    %518 = vector.load %arg9[%c0_93, %c0_94] : memref<1x1024xf32, #tpu.memory_space<vmem>>, vector<1x1024xf32>
    %519 = vector.broadcast %518 : vector<1x1024xf32> to vector<8x1024xf32>
    %520 = arith.addf %517, %519 : vector<8x1024xf32>
    %c0_95 = arith.constant 0 : index
    %c0_96 = arith.constant 0 : index
    %521 = vector.load %arg10[%c0_95, %c0_96] : memref<8x1024xf32, #tpu.memory_space<vmem>>, vector<8x1024xf32>
    tpu.vector_store %arg10[%c0_95, %c0_96], %520 {strides = array<i32>} : memref<8x1024xf32, #tpu.memory_space<vmem>>, vector<8x1024xf32>,
    return
  }
  func.func @transform_0(%arg0: i32) -> (i32, i32, i32) {
    %c0_i32 = arith.constant 0 : i32
    %c0_i32_0 = arith.constant 0 : i32
    %c0_i32_1 = arith.constant 0 : i32
    return %c0_i32, %arg0, %c0_i32_0 : i32, i32, i32
  }
  func.func @transform_1(%arg0: i32) -> (i32, i32) {
    %c0_i32 = arith.constant 0 : i32
    %c0_i32_0 = arith.constant 0 : i32
    %c0_i32_1 = arith.constant 0 : i32
    return %c0_i32, %c0_i32_0 : i32, i32
  }
  func.func @transform_2(%arg0: i32) -> (i32, i32) {
    %c0_i32 = arith.constant 0 : i32
    %c0_i32_0 = arith.constant 0 : i32
    %c0_i32_1 = arith.constant 0 : i32
    return %c0_i32, %c0_i32_0 : i32, i32
  }
  func.func @transform_3(%arg0: i32) -> (i32, i32) {
    %c0_i32 = arith.constant 0 : i32
    %c0_i32_0 = arith.constant 0 : i32
    %c0_i32_1 = arith.constant 0 : i32
    return %c0_i32, %c0_i32_0 : i32, i32
  }
  func.func @transform_4(%arg0: i32) -> (i32, i32) {
    %c0_i32 = arith.constant 0 : i32
    %c0_i32_0 = arith.constant 0 : i32
    %c0_i32_1 = arith.constant 0 : i32
    return %c0_i32, %c0_i32_0 : i32, i32
  }
  func.func @transform_5(%arg0: i32) -> (i32, i32) {
    %c0_i32 = arith.constant 0 : i32
    %c0_i32_0 = arith.constant 0 : i32
    %c0_i32_1 = arith.constant 0 : i32
    return %c0_i32, %c0_i32_0 : i32, i32
  }
  func.func @transform_6(%arg0: i32) -> (i32, i32) {
    %c0_i32 = arith.constant 0 : i32
    %c0_i32_0 = arith.constant 0 : i32
    %c0_i32_1 = arith.constant 0 : i32
    return %c0_i32, %c0_i32_0 : i32, i32
  }
  func.func @transform_7(%arg0: i32) -> (i32, i32) {
    %c0_i32 = arith.constant 0 : i32
    %c0_i32_0 = arith.constant 0 : i32
    %c0_i32_1 = arith.constant 0 : i32
    return %c0_i32, %c0_i32_0 : i32, i32
  }
  func.func @transform_8(%arg0: i32) -> (i32, i32) {
    %c0_i32 = arith.constant 0 : i32
    %c0_i32_0 = arith.constant 0 : i32
    %c0_i32_1 = arith.constant 0 : i32
    return %c0_i32, %c0_i32_0 : i32, i32
  }
  func.func @transform_9(%arg0: i32) -> (i32, i32) {
    %c0_i32 = arith.constant 0 : i32
    %c0_i32_0 = arith.constant 0 : i32
    return %arg0, %c0_i32 : i32, i32
  }
}

</mosaic_0001>

<llo_original>
// kernel: tpu_custom_call.1
$region0: #{tpu_custom_call.1}
  #allocation0 [shape = 'u32[]', space=smem, size = 0x4, offset = 0x4, fixed_abs, tag = 'smem constant byte address 0x4 - core index']
  #allocation1 [shape = 'u32[72,128]{1,0:T(1,128)}', space=vmem, size = 0x9000, scoped, tag = 'internal scratch']
  %s0 = inlined_call_operand.hbm [shape: f32[8,8,32], index: 0, kind: input, shape index: {}]
  %s1 = inlined_call_operand.hbm [shape: bf16[32,512], index: 1, kind: input, shape index: {}]
  %s2 = inlined_call_operand.hbm [shape: bf16[128,512], index: 2, kind: input, shape index: {}]
  %s3 = inlined_call_operand.hbm [shape: f32[1,512], index: 3, kind: input, shape index: {}]
  %s4 = inlined_call_operand.hbm [shape: bf16[128,512], index: 4, kind: input, shape index: {}]
  %s5 = inlined_call_operand.hbm [shape: bf16[128,512], index: 5, kind: input, shape index: {}]
  %s6 = inlined_call_operand.vmem [shape: f32[1,512], index: 6, kind: input, shape index: {}]
  %s7 = inlined_call_operand.hbm [shape: bf16[128,1024], index: 7, kind: input, shape index: {}]
  %s8 = inlined_call_operand.hbm [shape: f32[1,1024], index: 8, kind: input, shape index: {}]
  %s9 = inlined_call_operand.hbm [shape: f32[8,1024], index: 9, kind: output, shape index: {}]
  %s10 = sld [smem:[#allocation0]]
  $region78: #{tpu_custom_call.1} parent=0
    _
  %s12 = ssub.s32 1, %s10
  %s13 = scalar_select 0, %s12, %s10
  $region1: #{tpu_custom_call.1} parent=0
    #allocation2 [shape = 'u8[32768]{0}', space=vmem, size = 0x8000, scoped, tag = 'input window, operand 0, single buffered']
    #allocation3 [shape = 's32[1]{0}', space=sflag, size = 0x4, scoped, tag = 'scoped memory for tpu_custom_call.1']
    #allocation4 [shape = 's32[1]{0}', space=sflag, size = 0x4, scoped, tag = 'scoped memory for tpu_custom_call.1']
    #allocation5 [shape = 'u8[32768]{0}', space=vmem, size = 0x8000, scoped, tag = 'input window, operand 1, single buffered']
    #allocation6 [shape = 's32[1]{0}', space=sflag, size = 0x4, scoped, tag = 'scoped memory for tpu_custom_call.1']
    #allocation7 [shape = 'u8[131072]{0}', space=vmem, size = 0x20000, scoped, tag = 'input window, operand 2, single buffered']
    #allocation8 [shape = 'u8[2048]{0}', space=vmem, size = 0x800, scoped, tag = 'input window, operand 3, single buffered']
    #allocation9 [shape = 's32[1]{0}', space=sflag, size = 0x4, scoped, tag = 'scoped memory for tpu_custom_call.1']
    #allocation10 [shape = 'u8[131072]{0}', space=vmem, size = 0x20000, scoped, tag = 'input window, operand 4, single buffered']
    #allocation11 [shape = 'u8[131072]{0}', space=vmem, size = 0x20000, scoped, tag = 'input window, operand 5, single buffered']
    #allocation12 [shape = 's32[1]{0}', space=sflag, size = 0x4, scoped, tag = 'scoped memory for tpu_custom_call.1']
    #allocation13 [shape = 'u8[262144]{0}', space=vmem, size = 0x40000, scoped, tag = 'input window, operand 7, single buffered']
    #allocation14 [shape = 'u8[4096]{0}', space=vmem, size = 0x1000, scoped, tag = 'input window, operand 8, single buffered']
    #allocation15 [shape = 's32[1]{0}', space=sflag, size = 0x4, scoped, tag = 'scoped memory for tpu_custom_call.1']
    #allocation16 [shape = 'u8[32768]{0}', space=vmem, size = 0x8000, scoped, tag = 'output window, operand 0, single buffered']
    %14 = vsyncpa [#allocation3], 0
    %15 = vsyncpa [#allocation6], 0
    %16 = vsyncpa [#allocation9], 0
    %17 = vsyncpa [#allocation12], 0
    %18 = vsyncpa [#allocation15], 0
    %19 = vsyncpa [#allocation4], 0
    // Predicated region
    $region2: #{tpu_custom_call.1} parent=1 // pred_check
      _
    $region3: #{tpu_custom_call.1} parent=1 // pred_check_branch
      %21 = sbr.rel (0) target = $region5
    $region4: #{tpu_custom_call.1} parent=1 // pred_region
      %23 = vsyncadd [#allocation3], 0
      %s24 = sshll.u32 %s0, 4
      %s25 = int_to_ptr.hbm [resolvable:$true] %s24
      %s26 = sshll.u32 [#allocation2], 4
      %s27 = int_to_ptr.vmem [resolvable:$true] %s26
      %32 = dma.hbm_to_vmem [thread:$0]  %s25, 1024, %s27, [#allocation3], 128, 128, 8
    $region5: #{tpu_custom_call.1} parent=1 // pred_fallthru
      _
    // Predicated region
    $region6: #{tpu_custom_call.1} parent=1 // pred_check
      _
    $region7: #{tpu_custom_call.1} parent=1 // pred_check_branch
      %34 = sbr.rel (0) target = $region9
    $region8: #{tpu_custom_call.1} parent=1 // pred_region
      %36 = vsyncadd [#allocation6], 0
      %s37 = sshll.u32 %s1, 4
      %s38 = int_to_ptr.hbm [resolvable:$true] %s37
      %s39 = sshll.u32 [#allocation5], 4
      %s40 = int_to_ptr.vmem [resolvable:$true] %s39
      %45 = dma.hbm_to_vmem [thread:$0]  %s38, 1024, %s40, [#allocation6], 256, 256, 16
    $region9: #{tpu_custom_call.1} parent=1 // pred_fallthru
      _
    // Predicated region
    $region10: #{tpu_custom_call.1} parent=1 // pred_check
      _
    $region11: #{tpu_custom_call.1} parent=1 // pred_check_branch
      %47 = sbr.rel (0) target = $region13
    $region12: #{tpu_custom_call.1} parent=1 // pred_region
      %49 = vsyncadd [#allocation6], 0
      %s50 = sshll.u32 %s2, 4
      %s51 = int_to_ptr.hbm [resolvable:$true] %s50
      %s52 = sshll.u32 [#allocation7], 4
      %s53 = int_to_ptr.vmem [resolvable:$true] %s52
      %58 = dma.hbm_to_vmem [thread:$0]  %s51, 4096, %s53, [#allocation6], 256, 256, 16
    $region13: #{tpu_custom_call.1} parent=1 // pred_fallthru
      _
    // Predicated region
    $region14: #{tpu_custom_call.1} parent=1 // pred_check
      _
    $region15: #{tpu_custom_call.1} parent=1 // pred_check_branch
      %60 = sbr.rel (0) target = $region17
    $region16: #{tpu_custom_call.1} parent=1 // pred_region
      %62 = vsyncadd [#allocation9], 0
      %s64 = sshll.u32 %s3, 4
      %s65 = int_to_ptr.hbm [resolvable:$true] %s64
      %s66 = sshll.u32 [#allocation8], 4
      %s67 = int_to_ptr.vmem [resolvable:$true] %s66
      %69 = dma.hbm_to_vmem [thread:$0]  %s65, 64, %s67, [#allocation9]
    $region17: #{tpu_custom_call.1} parent=1 // pred_fallthru
      _
    // Predicated region
    $region18: #{tpu_custom_call.1} parent=1 // pred_check
      _
    $region19: #{tpu_custom_call.1} parent=1 // pred_check_branch
      %71 = sbr.rel (0) target = $region21
    $region20: #{tpu_custom_call.1} parent=1 // pred_region
      %73 = vsyncadd [#allocation9], 0
      %s74 = sshll.u32 %s4, 4
      %s75 = int_to_ptr.hbm [resolvable:$true] %s74
      %s76 = sshll.u32 [#allocation10], 4
      %s77 = int_to_ptr.vmem [resolvable:$true] %s76
      %82 = dma.hbm_to_vmem [thread:$0]  %s75, 4096, %s77, [#allocation9], 256, 256, 16
    $region21: #{tpu_custom_call.1} parent=1 // pred_fallthru
      _
    // Predicated region
    $region22: #{tpu_custom_call.1} parent=1 // pred_check
      _
    $region23: #{tpu_custom_call.1} parent=1 // pred_check_branch
      %84 = sbr.rel (0) target = $region25
    $region24: #{tpu_custom_call.1} parent=1 // pred_region
      %86 = vsyncadd [#allocation12], 0
      %s87 = sshll.u32 %s5, 4
      %s88 = int_to_ptr.hbm [resolvable:$true] %s87
      %s89 = sshll.u32 [#allocation11], 4
      %s90 = int_to_ptr.vmem [resolvable:$true] %s89
      %95 = dma.hbm_to_vmem [thread:$0]  %s88, 4096, %s90, [#allocation12], 256, 256, 16
    $region25: #{tpu_custom_call.1} parent=1 // pred_fallthru
      _
    // Predicated region
    $region26: #{tpu_custom_call.1} parent=1 // pred_check
      _
    $region27: #{tpu_custom_call.1} parent=1 // pred_check_branch
      %97 = sbr.rel (0) target = $region29
    $region28: #{tpu_custom_call.1} parent=1 // pred_region
      _
    $region29: #{tpu_custom_call.1} parent=1 // pred_fallthru
      _
    // Predicated region
    $region30: #{tpu_custom_call.1} parent=1 // pred_check
      _
    $region31: #{tpu_custom_call.1} parent=1 // pred_check_branch
      %99 = sbr.rel (0) target = $region33
    $region32: #{tpu_custom_call.1} parent=1 // pred_region
      %101 = vsyncadd [#allocation12], 0
      %s102 = sshll.u32 %s7, 4
      %s103 = int_to_ptr.hbm [resolvable:$true] %s102
      %s104 = sshll.u32 [#allocation13], 4
      %s105 = int_to_ptr.vmem [resolvable:$true] %s104
      %110 = dma.hbm_to_vmem [thread:$0]  %s103, 8192, %s105, [#allocation12], 512, 512, 32
    $region33: #{tpu_custom_call.1} parent=1 // pred_fallthru
      _
    // Predicated region
    $region34: #{tpu_custom_call.1} parent=1 // pred_check
      _
    $region35: #{tpu_custom_call.1} parent=1 // pred_check_branch
      %112 = sbr.rel (0) target = $region37
    $region36: #{tpu_custom_call.1} parent=1 // pred_region
      %114 = vsyncadd [#allocation15], 0
      %s116 = sshll.u32 %s8, 4
      %s117 = int_to_ptr.hbm [resolvable:$true] %s116
      %s118 = sshll.u32 [#allocation14], 4
      %s119 = int_to_ptr.vmem [resolvable:$true] %s118
      %121 = dma.hbm_to_vmem [thread:$0]  %s117, 128, %s119, [#allocation15]
    $region37: #{tpu_custom_call.1} parent=1 // pred_fallthru
      _
    // Predicated region
    $region38: #{tpu_custom_call.1} parent=1 // pred_check
      _
    $region39: #{tpu_custom_call.1} parent=1 // pred_check_branch
      %123 = sbr.rel (0) target = $region41
    $region40: #{tpu_custom_call.1} parent=1 // pred_region
      %125 = dma.done [#allocation3], 1024
    $region41: #{tpu_custom_call.1} parent=1 // pred_fallthru
      _
    // Predicated region
    $region42: #{tpu_custom_call.1} parent=1 // pred_check
      _
    $region43: #{tpu_custom_call.1} parent=1 // pred_check_branch
      %127 = sbr.rel (0) target = $region45
    $region44: #{tpu_custom_call.1} parent=1 // pred_region
      %129 = dma.done [#allocation6], 1024
    $region45: #{tpu_custom_call.1} parent=1 // pred_fallthru
      _
    // Predicated region
    $region46: #{tpu_custom_call.1} parent=1 // pred_check
      _
    $region47: #{tpu_custom_call.1} parent=1 // pred_check_branch
      %131 = sbr.rel (0) target = $region49
    $region48: #{tpu_custom_call.1} parent=1 // pred_region
      %133 = dma.done [#allocation6], 4096
    $region49: #{tpu_custom_call.1} parent=1 // pred_fallthru
      _
    // Predicated region
    $region50: #{tpu_custom_call.1} parent=1 // pred_check
      _
    $region51: #{tpu_custom_call.1} parent=1 // pred_check_branch
      %135 = sbr.rel (0) target = $region53
    $region52: #{tpu_custom_call.1} parent=1 // pred_region
      %137 = dma.done [#allocation9], 64
    $region53: #{tpu_custom_call.1} parent=1 // pred_fallthru
      _
    // Predicated region
    $region54: #{tpu_custom_call.1} parent=1 // pred_check
      _
    $region55: #{tpu_custom_call.1} parent=1 // pred_check_branch
      %139 = sbr.rel (0) target = $region57
    $region56: #{tpu_custom_call.1} parent=1 // pred_region
      %141 = dma.done [#allocation9], 4096
    $region57: #{tpu_custom_call.1} parent=1 // pred_fallthru
      _
    // Predicated region
    $region58: #{tpu_custom_call.1} parent=1 // pred_check
      _
    $region59: #{tpu_custom_call.1} parent=1 // pred_check_branch
      %143 = sbr.rel (0) target = $region61
    $region60: #{tpu_custom_call.1} parent=1 // pred_region
      %145 = dma.done [#allocation12], 4096
    $region61: #{tpu_custom_call.1} parent=1 // pred_fallthru
      _
    // Predicated region
    $region62: #{tpu_custom_call.1} parent=1 // pred_check
      _
    $region63: #{tpu_custom_call.1} parent=1 // pred_check_branch
      %147 = sbr.rel (0) target = $region65
    $region64: #{tpu_custom_call.1} parent=1 // pred_region
      %149 = dma.done [#allocation12], 8192
    $region65: #{tpu_custom_call.1} parent=1 // pred_fallthru
      _
    // Predicated region
    $region66: #{tpu_custom_call.1} parent=1 // pred_check
      _
    $region67: #{tpu_custom_call.1} parent=1 // pred_check_branch
      %151 = sbr.rel (0) target = $region69
    $region68: #{tpu_custom_call.1} parent=1 // pred_region
      %153 = dma.done [#allocation15], 128
    $region69: #{tpu_custom_call.1} parent=1 // pred_fallthru
      _
    %v155 = vld [vmem:[#allocation2] sm:$0xff]
    %v156 = vld [vmem:[#allocation2 + $0x8] sm:$0xff]
    %v157 = vld [vmem:[#allocation2 + $0x10] sm:$0xff]
    %v158 = vld [vmem:[#allocation2 + $0x18] sm:$0xff]
    %v159 = vld [vmem:[#allocation2 + $0x20] sm:$0xff]
    %v160 = vld [vmem:[#allocation2 + $0x28] sm:$0xff]
    %v161 = vld [vmem:[#allocation2 + $0x30] sm:$0xff]
    %v162 = vld [vmem:[#allocation2 + $0x38] sm:$0xff]
    %v163 = vpack.c.bf16 %v155, %v155
    %v164 = vpack.c.bf16 %v156, %v156
    %v165 = vpack.c.bf16 %v157, %v157
    %v166 = vpack.c.bf16 %v158, %v158
    %v167 = vpack.c.bf16 %v159, %v159
    %v168 = vpack.c.bf16 %v160, %v160
    %v169 = vpack.c.bf16 %v161, %v161
    %v170 = vpack.c.bf16 %v162, %v162
    %v171 = vld [vmem:[#allocation5] sm:$0xff]
    %v172 = vld [vmem:[#allocation5 + $0x8] sm:$0xff]
    %v173 = vld [vmem:[#allocation5 + $0x10] sm:$0xff]
    %v174 = vld [vmem:[#allocation5 + $0x18] sm:$0xff]
    %v175 = vld [vmem:[#allocation5 + $0x20] sm:$0xff]
    %v176 = vld [vmem:[#allocation5 + $0x28] sm:$0xff]
    %v177 = vld [vmem:[#allocation5 + $0x30] sm:$0xff]
    %v178 = vld [vmem:[#allocation5 + $0x38] sm:$0xff]
    %v179 = vld [vmem:[#allocation8] sm:$0xf]
    %v181 = vperm.slane %v179, 0
    %v182 = vperm.slane %v179, 1
    %v183 = vperm.slane %v179, 2
    %v184 = vperm.slane %v179, 3
    %v197 = vunpack.c.l.b16 %v163
    %v198 = vunpack.c.l.b16 %v164
    %v199 = vunpack.c.l.b16 %v165
    %v200 = vunpack.c.l.b16 %v166
    %v201 = vunpack.c.l.b16 %v167
    %v202 = vunpack.c.l.b16 %v168
    %v203 = vunpack.c.l.b16 %v169
    %v204 = vunpack.c.l.b16 %v170
    %v205 = vpack.c.b16 %v198, %v197
    %v206 = vpack.c.b16 %v200, %v199
    %v207 = vpack.c.b16 %v202, %v201
    %v208 = vpack.c.b16 %v204, %v203
    %v217 = vunpack.c.l.b16 %v171
    %v218 = vunpack.c.h.b16 %v171
    %v219 = vunpack.c.l.b16 %v172
    %v220 = vunpack.c.h.b16 %v172
    %v221 = vunpack.c.l.b16 %v173
    %v222 = vunpack.c.h.b16 %v173
    %v223 = vunpack.c.l.b16 %v174
    %v224 = vunpack.c.h.b16 %v174
    %v225 = vunpack.c.l.b16 %v175
    %v226 = vunpack.c.h.b16 %v175
    %v227 = vunpack.c.l.b16 %v176
    %v228 = vunpack.c.h.b16 %v176
    %v229 = vunpack.c.l.b16 %v177
    %v230 = vunpack.c.h.b16 %v177
    %v231 = vunpack.c.l.b16 %v178
    %v232 = vunpack.c.h.b16 %v178
    %v233 = vpack.c.b16 %v221, %v217
    %v234 = vpack.c.b16 %v222, %v218
    %v235 = vpack.c.b16 %v223, %v219
    %v236 = vpack.c.b16 %v224, %v220
    %v237 = vpack.c.b16 %v229, %v225
    %v238 = vpack.c.b16 %v230, %v226
    %v239 = vpack.c.b16 %v231, %v227
    %v240 = vpack.c.b16 %v232, %v228
    %vm249 = vcmask 261120
    %v251 = vsel %vm249, %v205, 0
    %v254 = vsel %vm249, %v206, 0
    %v257 = vsel %vm249, %v207, 0
    %v260 = vsel %vm249, %v208, 0
    %262 = vmatpush.bf16.msra.mxu0 0
    %263 = vmatpush.bf16.msra.mxu0 0
    %264 = vmatpush.bf16.msra.mxu0 0
    %265 = vmatpush.bf16.msra.mxu0 0
    %266 = vmatpush.bf16.msra.mxu0 0
    %267 = vmatpush.bf16.msra.mxu0 0
    %268 = vmatpush.bf16.msra.mxu0 %v237
    %269 = vmatpush.bf16.msra.mxu0 %v233
    %270 = vmatmul.bf16.gmra.mxu0 %v251
    %v271 = vpop.f32.mrf.mxu0
    %v272 = vadd.f32 %v181, %v271
    %v273 = vpop.f32.mrf.mxu0
    %v274 = vadd.f32 %v181, %v273
    %275 = vmatmul.bf16.gmra.mxu0 %v254
    %v276 = vpop.f32.mrf.mxu0
    %v277 = vadd.f32 %v181, %v276
    %v278 = vpop.f32.mrf.mxu0
    %v279 = vadd.f32 %v181, %v278
    %280 = vmatmul.bf16.gmra.mxu0 %v257
    %v281 = vpop.f32.mrf.mxu0
    %v282 = vadd.f32 %v181, %v281
    %v283 = vpop.f32.mrf.mxu0
    %v284 = vadd.f32 %v181, %v283
    %285 = vmatmul.bf16.gmra.mxu0 %v260
    %v286 = vpop.f32.mrf.mxu0
    %v287 = vadd.f32 %v181, %v286
    %v288 = vpop.f32.mrf.mxu0
    %v289 = vadd.f32 %v181, %v288
    %290 = vdwg.mxu0
    %291 = vmatpush.bf16.msra.mxu0 0
    %292 = vmatpush.bf16.msra.mxu0 0
    %293 = vmatpush.bf16.msra.mxu0 0
    %294 = vmatpush.bf16.msra.mxu0 0
    %295 = vmatpush.bf16.msra.mxu0 0
    %296 = vmatpush.bf16.msra.mxu0 0
    %297 = vmatpush.bf16.msra.mxu0 %v238
    %298 = vmatpush.bf16.msra.mxu0 %v234
    %299 = vmatmul.bf16.gmra.mxu0 %v251
    %v300 = vpop.f32.mrf.mxu0
    %v301 = vadd.f32 %v182, %v300
    %v302 = vpop.f32.mrf.mxu0
    %v303 = vadd.f32 %v182, %v302
    %304 = vmatmul.bf16.gmra.mxu0 %v254
    %v305 = vpop.f32.mrf.mxu0
    %v306 = vadd.f32 %v182, %v305
    %v307 = vpop.f32.mrf.mxu0
    %v308 = vadd.f32 %v182, %v307
    %309 = vmatmul.bf16.gmra.mxu0 %v257
    %v310 = vpop.f32.mrf.mxu0
    %v311 = vadd.f32 %v182, %v310
    %v312 = vpop.f32.mrf.mxu0
    %v313 = vadd.f32 %v182, %v312
    %314 = vmatmul.bf16.gmra.mxu0 %v260
    %v315 = vpop.f32.mrf.mxu0
    %v316 = vadd.f32 %v182, %v315
    %v317 = vpop.f32.mrf.mxu0
    %v318 = vadd.f32 %v182, %v317
    %319 = vdwg.mxu0
    %320 = vmatpush.bf16.msra.mxu0 0
    %321 = vmatpush.bf16.msra.mxu0 0
    %322 = vmatpush.bf16.msra.mxu0 0
    %323 = vmatpush.bf16.msra.mxu0 0
    %324 = vmatpush.bf16.msra.mxu0 0
    %325 = vmatpush.bf16.msra.mxu0 0
    %326 = vmatpush.bf16.msra.mxu0 %v239
    %327 = vmatpush.bf16.msra.mxu0 %v235
    %328 = vmatmul.bf16.gmra.mxu0 %v251
    %v329 = vpop.f32.mrf.mxu0
    %v330 = vadd.f32 %v183, %v329
    %v331 = vpop.f32.mrf.mxu0
    %v332 = vadd.f32 %v183, %v331
    %333 = vmatmul.bf16.gmra.mxu0 %v254
    %v334 = vpop.f32.mrf.mxu0
    %v335 = vadd.f32 %v183, %v334
    %v336 = vpop.f32.mrf.mxu0
    %v337 = vadd.f32 %v183, %v336
    %338 = vmatmul.bf16.gmra.mxu0 %v257
    %v339 = vpop.f32.mrf.mxu0
    %v340 = vadd.f32 %v183, %v339
    %v341 = vpop.f32.mrf.mxu0
    %v342 = vadd.f32 %v183, %v341
    %343 = vmatmul.bf16.gmra.mxu0 %v260
    %v344 = vpop.f32.mrf.mxu0
    %v345 = vadd.f32 %v183, %v344
    %v346 = vpop.f32.mrf.mxu0
    %v347 = vadd.f32 %v183, %v346
    %348 = vdwg.mxu0
    %349 = vmatpush.bf16.msra.mxu0 0
    %350 = vmatpush.bf16.msra.mxu0 0
    %351 = vmatpush.bf16.msra.mxu0 0
    %352 = vmatpush.bf16.msra.mxu0 0
    %353 = vmatpush.bf16.msra.mxu0 0
    %354 = vmatpush.bf16.msra.mxu0 0
    %355 = vmatpush.bf16.msra.mxu0 %v240
    %356 = vmatpush.bf16.msra.mxu0 %v236
    %357 = vmatmul.bf16.gmra.mxu0 %v251
    %v358 = vpop.f32.mrf.mxu0
    %v359 = vadd.f32 %v184, %v358
    %v360 = vpop.f32.mrf.mxu0
    %v361 = vadd.f32 %v184, %v360
    %362 = vmatmul.bf16.gmra.mxu0 %v254
    %v363 = vpop.f32.mrf.mxu0
    %v364 = vadd.f32 %v184, %v363
    %v365 = vpop.f32.mrf.mxu0
    %v366 = vadd.f32 %v184, %v365
    %367 = vmatmul.bf16.gmra.mxu0 %v257
    %v368 = vpop.f32.mrf.mxu0
    %v369 = vadd.f32 %v184, %v368
    %v370 = vpop.f32.mrf.mxu0
    %v371 = vadd.f32 %v184, %v370
    %372 = vmatmul.bf16.gmra.mxu0 %v260
    %v373 = vpop.f32.mrf.mxu0
    %v374 = vadd.f32 %v184, %v373
    %v375 = vpop.f32.mrf.mxu0
    %v376 = vadd.f32 %v184, %v375
    %377 = vdwg.mxu0
    %v378 = vpack.c.bf16 %v301, %v272
    %v379 = vpack.c.bf16 %v359, %v330
    %v380 = vpack.c.bf16 %v303, %v274
    %v381 = vpack.c.bf16 %v361, %v332
    %v382 = vpack.c.bf16 %v306, %v277
    %v383 = vpack.c.bf16 %v364, %v335
    %v384 = vpack.c.bf16 %v308, %v279
    %v385 = vpack.c.bf16 %v366, %v337
    %v386 = vpack.c.bf16 %v311, %v282
    %v387 = vpack.c.bf16 %v369, %v340
    %v388 = vpack.c.bf16 %v313, %v284
    %v389 = vpack.c.bf16 %v371, %v342
    %v390 = vpack.c.bf16 %v316, %v287
    %v391 = vpack.c.bf16 %v374, %v345
    %v392 = vpack.c.bf16 %v318, %v289
    %v393 = vpack.c.bf16 %v376, %v347
    %v394 = vld [vmem:[#allocation7] sm:$0xff]
    %v395 = vld [vmem:[#allocation7 + $0x8] sm:$0xff]
    %v396 = vld [vmem:[#allocation7 + $0x10] sm:$0xff]
    %v397 = vld [vmem:[#allocation7 + $0x18] sm:$0xff]
    %v398 = vld [vmem:[#allocation7 + $0x20] sm:$0xff]
    %v399 = vld [vmem:[#allocation7 + $0x28] sm:$0xff]
    %v400 = vld [vmem:[#allocation7 + $0x30] sm:$0xff]
    %v401 = vld [vmem:[#allocation7 + $0x38] sm:$0xff]
    %v402 = vld [vmem:[#allocation7 + $0x40] sm:$0xff]
    %v403 = vld [vmem:[#allocation7 + $0x48] sm:$0xff]
    %v404 = vld [vmem:[#allocation7 + $0x50] sm:$0xff]
    %v405 = vld [vmem:[#allocation7 + $0x58] sm:$0xff]
    %v406 = vld [vmem:[#allocation7 + $0x60] sm:$0xff]
    %v407 = vld [vmem:[#allocation7 + $0x68] sm:$0xff]
    %v408 = vld [vmem:[#allocation7 + $0x70] sm:$0xff]
    %v409 = vld [vmem:[#allocation7 + $0x78] sm:$0xff]
    %v410 = vld [vmem:[#allocation7 + $0x80] sm:$0xff]
    %v411 = vld [vmem:[#allocation7 + $0x88] sm:$0xff]
    %v412 = vld [vmem:[#allocation7 + $0x90] sm:$0xff]
    %v413 = vld [vmem:[#allocation7 + $0x98] sm:$0xff]
    %v414 = vld [vmem:[#allocation7 + $0xa0] sm:$0xff]
    %v415 = vld [vmem:[#allocation7 + $0xa8] sm:$0xff]
    %v416 = vld [vmem:[#allocation7 + $0xb0] sm:$0xff]
    %v417 = vld [vmem:[#allocation7 + $0xb8] sm:$0xff]
    %v418 = vld [vmem:[#allocation7 + $0xc0] sm:$0xff]
    %v419 = vld [vmem:[#allocation7 + $0xc8] sm:$0xff]
    %v420 = vld [vmem:[#allocation7 + $0xd0] sm:$0xff]
    %v421 = vld [vmem:[#allocation7 + $0xd8] sm:$0xff]
    %v422 = vld [vmem:[#allocation7 + $0xe0] sm:$0xff]
    %v423 = vld [vmem:[#allocation7 + $0xe8] sm:$0xff]
    %v424 = vld [vmem:[#allocation7 + $0xf0] sm:$0xff]
    %v425 = vld [vmem:[#allocation7 + $0xf8] sm:$0xff]
    %v426 = vld [vmem:[#allocation10] sm:$0xff]
    %v427 = vld [vmem:[#allocation10 + $0x8] sm:$0xff]
    %v428 = vld [vmem:[#allocation10 + $0x10] sm:$0xff]
    %v429 = vld [vmem:[#allocation10 + $0x18] sm:$0xff]
    %v430 = vld [vmem:[#allocation10 + $0x20] sm:$0xff]
    %v431 = vld [vmem:[#allocation10 + $0x28] sm:$0xff]
    %v432 = vld [vmem:[#allocation10 + $0x30] sm:$0xff]
    %v433 = vld [vmem:[#allocation10 + $0x38] sm:$0xff]
    %v434 = vld [vmem:[#allocation10 + $0x40] sm:$0xff]
    %v435 = vld [vmem:[#allocation10 + $0x48] sm:$0xff]
    %v436 = vld [vmem:[#allocation10 + $0x50] sm:$0xff]
    %v437 = vld [vmem:[#allocation10 + $0x58] sm:$0xff]
    %v438 = vld [vmem:[#allocation10 + $0x60] sm:$0xff]
    %v439 = vld [vmem:[#allocation10 + $0x68] sm:$0xff]
    %v440 = vld [vmem:[#allocation10 + $0x70] sm:$0xff]
    %v441 = vld [vmem:[#allocation10 + $0x78] sm:$0xff]
    %v442 = vld [vmem:[#allocation10 + $0x80] sm:$0xff]
    %v443 = vld [vmem:[#allocation10 + $0x88] sm:$0xff]
    %v444 = vld [vmem:[#allocation10 + $0x90] sm:$0xff]
    %v445 = vld [vmem:[#allocation10 + $0x98] sm:$0xff]
    %v446 = vld [vmem:[#allocation10 + $0xa0] sm:$0xff]
    %v447 = vld [vmem:[#allocation10 + $0xa8] sm:$0xff]
    %v448 = vld [vmem:[#allocation10 + $0xb0] sm:$0xff]
    %v449 = vld [vmem:[#allocation10 + $0xb8] sm:$0xff]
    %v450 = vld [vmem:[#allocation10 + $0xc0] sm:$0xff]
    %v451 = vld [vmem:[#allocation10 + $0xc8] sm:$0xff]
    %v452 = vld [vmem:[#allocation10 + $0xd0] sm:$0xff]
    %v453 = vld [vmem:[#allocation10 + $0xd8] sm:$0xff]
    %v454 = vld [vmem:[#allocation10 + $0xe0] sm:$0xff]
    %v455 = vld [vmem:[#allocation10 + $0xe8] sm:$0xff]
    %v456 = vld [vmem:[#allocation10 + $0xf0] sm:$0xff]
    %v457 = vld [vmem:[#allocation10 + $0xf8] sm:$0xff]
    %v458 = vld [vmem:[#allocation11] sm:$0xff]
    %v459 = vld [vmem:[#allocation11 + $0x8] sm:$0xff]
    %v460 = vld [vmem:[#allocation11 + $0x10] sm:$0xff]
    %v461 = vld [vmem:[#allocation11 + $0x18] sm:$0xff]
    %v462 = vld [vmem:[#allocation11 + $0x20] sm:$0xff]
    %v463 = vld [vmem:[#allocation11 + $0x28] sm:$0xff]
    %v464 = vld [vmem:[#allocation11 + $0x30] sm:$0xff]
    %v465 = vld [vmem:[#allocation11 + $0x38] sm:$0xff]
    %v466 = vld [vmem:[#allocation11 + $0x40] sm:$0xff]
    %v467 = vld [vmem:[#allocation11 + $0x48] sm:$0xff]
    %v468 = vld [vmem:[#allocation11 + $0x50] sm:$0xff]
    %v469 = vld [vmem:[#allocation11 + $0x58] sm:$0xff]
    %v470 = vld [vmem:[#allocation11 + $0x60] sm:$0xff]
    %v471 = vld [vmem:[#allocation11 + $0x68] sm:$0xff]
    %v472 = vld [vmem:[#allocation11 + $0x70] sm:$0xff]
    %v473 = vld [vmem:[#allocation11 + $0x78] sm:$0xff]
    %v474 = vld [vmem:[#allocation11 + $0x80] sm:$0xff]
    %v475 = vld [vmem:[#allocation11 + $0x88] sm:$0xff]
    %v476 = vld [vmem:[#allocation11 + $0x90] sm:$0xff]
    %v477 = vld [vmem:[#allocation11 + $0x98] sm:$0xff]
    %v478 = vld [vmem:[#allocation11 + $0xa0] sm:$0xff]
    %v479 = vld [vmem:[#allocation11 + $0xa8] sm:$0xff]
    %v480 = vld [vmem:[#allocation11 + $0xb0] sm:$0xff]
    %v481 = vld [vmem:[#allocation11 + $0xb8] sm:$0xff]
    %v482 = vld [vmem:[#allocation11 + $0xc0] sm:$0xff]
    %v483 = vld [vmem:[#allocation11 + $0xc8] sm:$0xff]
    %v484 = vld [vmem:[#allocation11 + $0xd0] sm:$0xff]
    %v485 = vld [vmem:[#allocation11 + $0xd8] sm:$0xff]
    %v486 = vld [vmem:[#allocation11 + $0xe0] sm:$0xff]
    %v487 = vld [vmem:[#allocation11 + $0xe8] sm:$0xff]
    %v488 = vld [vmem:[#allocation11 + $0xf0] sm:$0xff]
    %v489 = vld [vmem:[#allocation11 + $0xf8] sm:$0xff]
    %v490 = vld [vmem:[%s6] sm:$0xf]
    %v491 = vunpack.c.l.bf16 %v378
    %v492 = vunpack.c.h.bf16 %v378
    %v493 = vunpack.c.l.bf16 %v379
    %v494 = vunpack.c.h.bf16 %v379
    %v527 = vunpack.c.l.b16 %v394
    %v528 = vunpack.c.h.b16 %v394
    %v529 = vunpack.c.l.b16 %v395
    %v530 = vunpack.c.h.b16 %v395
    %v531 = vunpack.c.l.b16 %v396
    %v532 = vunpack.c.h.b16 %v396
    %v533 = vunpack.c.l.b16 %v397
    %v534 = vunpack.c.h.b16 %v397
    %v535 = vunpack.c.l.b16 %v398
    %v536 = vunpack.c.h.b16 %v398
    %v537 = vunpack.c.l.b16 %v399
    %v538 = vunpack.c.h.b16 %v399
    %v539 = vunpack.c.l.b16 %v400
    %v540 = vunpack.c.h.b16 %v400
    %v541 = vunpack.c.l.b16 %v401
    %v542 = vunpack.c.h.b16 %v401
    %v543 = vunpack.c.l.b16 %v402
    %v544 = vunpack.c.h.b16 %v402
    %v545 = vunpack.c.l.b16 %v403
    %v546 = vunpack.c.h.b16 %v403
    %v547 = vunpack.c.l.b16 %v404
    %v548 = vunpack.c.h.b16 %v404
    %v549 = vunpack.c.l.b16 %v405
    %v550 = vunpack.c.h.b16 %v405
    %v551 = vunpack.c.l.b16 %v406
    %v552 = vunpack.c.h.b16 %v406
    %v553 = vunpack.c.l.b16 %v407
    %v554 = vunpack.c.h.b16 %v407
    %v555 = vunpack.c.l.b16 %v408
    %v556 = vunpack.c.h.b16 %v408
    %v557 = vunpack.c.l.b16 %v409
    %v558 = vunpack.c.h.b16 %v409
    %v559 = vunpack.c.l.b16 %v410
    %v560 = vunpack.c.h.b16 %v410
    %v561 = vunpack.c.l.b16 %v411
    %v562 = vunpack.c.h.b16 %v411
    %v563 = vunpack.c.l.b16 %v412
    %v564 = vunpack.c.h.b16 %v412
    %v565 = vunpack.c.l.b16 %v413
    %v566 = vunpack.c.h.b16 %v413
    %v567 = vunpack.c.l.b16 %v414
    %v568 = vunpack.c.h.b16 %v414
    %v569 = vunpack.c.l.b16 %v415
    %v570 = vunpack.c.h.b16 %v415
    %v571 = vunpack.c.l.b16 %v416
    %v572 = vunpack.c.h.b16 %v416
    %v573 = vunpack.c.l.b16 %v417
    %v574 = vunpack.c.h.b16 %v417
    %v575 = vunpack.c.l.b16 %v418
    %v576 = vunpack.c.h.b16 %v418
    %v577 = vunpack.c.l.b16 %v419
    %v578 = vunpack.c.h.b16 %v419
    %v579 = vunpack.c.l.b16 %v420
    %v580 = vunpack.c.h.b16 %v420
    %v581 = vunpack.c.l.b16 %v421
    %v582 = vunpack.c.h.b16 %v421
    %v583 = vunpack.c.l.b16 %v422
    %v584 = vunpack.c.h.b16 %v422
    %v585 = vunpack.c.l.b16 %v423
    %v586 = vunpack.c.h.b16 %v423
    %v587 = vunpack.c.l.b16 %v424
    %v588 = vunpack.c.h.b16 %v424
    %v589 = vunpack.c.l.b16 %v425
    %v590 = vunpack.c.h.b16 %v425
    %v591 = vpack.c.b16 %v531, %v527
    %v592 = vpack.c.b16 %v532, %v528
    %v593 = vpack.c.b16 %v533, %v529
    %v594 = vpack.c.b16 %v534, %v530
    %v595 = vpack.c.b16 %v539, %v535
    %v596 = vpack.c.b16 %v540, %v536
    %v597 = vpack.c.b16 %v541, %v537
    %v598 = vpack.c.b16 %v542, %v538
    %v599 = vpack.c.b16 %v547, %v543
    %v600 = vpack.c.b16 %v548, %v544
    %v601 = vpack.c.b16 %v549, %v545
    %v602 = vpack.c.b16 %v550, %v546
    %v603 = vpack.c.b16 %v555, %v551
    %v604 = vpack.c.b16 %v556, %v552
    %v605 = vpack.c.b16 %v557, %v553
    %v606 = vpack.c.b16 %v558, %v554
    %v607 = vpack.c.b16 %v563, %v559
    %v608 = vpack.c.b16 %v564, %v560
    %v609 = vpack.c.b16 %v565, %v561
    %v610 = vpack.c.b16 %v566, %v562
    %v611 = vpack.c.b16 %v571, %v567
    %v612 = vpack.c.b16 %v572, %v568
    %v613 = vpack.c.b16 %v573, %v569
    %v614 = vpack.c.b16 %v574, %v570
    %v615 = vpack.c.b16 %v579, %v575
    %v616 = vpack.c.b16 %v580, %v576
    %v617 = vpack.c.b16 %v581, %v577
    %v618 = vpack.c.b16 %v582, %v578
    %v619 = vpack.c.b16 %v587, %v583
    %v620 = vpack.c.b16 %v588, %v584
    %v621 = vpack.c.b16 %v589, %v585
    %v622 = vpack.c.b16 %v590, %v586
    %655 = vmatpush.bf16.msra.mxu0 %v619
    %656 = vmatpush.bf16.msra.mxu0 %v615
    %657 = vmatpush.bf16.msra.mxu0 %v611
    %658 = vmatpush.bf16.msra.mxu0 %v607
    %659 = vmatpush.bf16.msra.mxu0 %v603
    %660 = vmatpush.bf16.msra.mxu0 %v599
    %661 = vmatpush.bf16.msra.mxu0 %v595
    %662 = vmatpush.bf16.msra.mxu0 %v591
    %663 = vmatmul.bf16.gmra.mxu0 0
    %v664 = vpop.f32.mrf.mxu0
    %v665 = vadd.f32 0.0, %v664
    %v666 = vpop.f32.mrf.mxu0
    %667 = vdwg.mxu0
    %668 = vmatpush.bf16.msra.mxu0 %v620
    %669 = vmatpush.bf16.msra.mxu0 %v616
    %670 = vmatpush.bf16.msra.mxu0 %v612
    %671 = vmatpush.bf16.msra.mxu0 %v608
    %672 = vmatpush.bf16.msra.mxu0 %v604
    %673 = vmatpush.bf16.msra.mxu0 %v600
    %674 = vmatpush.bf16.msra.mxu0 %v596
    %675 = vmatpush.bf16.msra.mxu0 %v592
    %676 = vmatmul.bf16.gmra.mxu0 0
    %v677 = vpop.f32.mrf.mxu0
    %v678 = vadd.f32 0.0, %v677
    %v679 = vpop.f32.mrf.mxu0
    %680 = vdwg.mxu0
    %681 = vmatpush.bf16.msra.mxu0 %v621
    %682 = vmatpush.bf16.msra.mxu0 %v617
    %683 = vmatpush.bf16.msra.mxu0 %v613
    %684 = vmatpush.bf16.msra.mxu0 %v609
    %685 = vmatpush.bf16.msra.mxu0 %v605
    %686 = vmatpush.bf16.msra.mxu0 %v601
    %687 = vmatpush.bf16.msra.mxu0 %v597
    %688 = vmatpush.bf16.msra.mxu0 %v593
    %689 = vmatmul.bf16.gmra.mxu0 0
    %v690 = vpop.f32.mrf.mxu0
    %v691 = vadd.f32 0.0, %v690
    %v692 = vpop.f32.mrf.mxu0
    %693 = vdwg.mxu0
    %694 = vmatpush.bf16.msra.mxu0 %v622
    %695 = vmatpush.bf16.msra.mxu0 %v618
    %696 = vmatpush.bf16.msra.mxu0 %v614
    %697 = vmatpush.bf16.msra.mxu0 %v610
    %698 = vmatpush.bf16.msra.mxu0 %v606
    %699 = vmatpush.bf16.msra.mxu0 %v602
    %700 = vmatpush.bf16.msra.mxu0 %v598
    %701 = vmatpush.bf16.msra.mxu0 %v594
    %702 = vmatmul.bf16.gmra.mxu0 0
    %v703 = vpop.f32.mrf.mxu0
    %v704 = vadd.f32 0.0, %v703
    %v705 = vpop.f32.mrf.mxu0
    %706 = vdwg.mxu0
    %v707 = vadd.f32 %v491, %v665
    %v708 = vadd.f32 %v492, %v678
    %v709 = vadd.f32 %v493, %v691
    %v710 = vadd.f32 %v494, %v704
    %v711 = vxor.u32 %v707, 2147483648
    %v712 = vmul.f32 %v711, 1.442695
    %v713 = vpow.pop %v712
    %v714 = vadd.f32 %v713, 1.0
    %v715 = vrcp.pop %v714
    %v716 = vmul.f32 %v714, %v715
    %v717 = vsub.f32 1.0, %v716
    %v718 = vmul.f32 %v715, %v717
    %v719 = vadd.f32 %v715, %v718
    %vm720 = vweird.f32 %v714
    %vm721 = vweird.f32 %v715
    %vm722 = vmor %vm720, %vm721
    %v723 = vsel %vm722, %v715, %v719
    %v724 = vand.u32 2147483647, %v714
    %vm725 = vcmp.eq.f32.partialorder %v724, 8.507059e+37
    %v726 = vand.u32 %v714, 2147483648
    %v727 = vor.u32 1.1754944e-38, %v726
    %v728 = vsel %vm725, %v727, %v723
    %v729 = vmul.f32 1.0, %v728
    %v730 = vxor.u32 %v708, 2147483648
    %v731 = vmul.f32 %v730, 1.442695
    %v732 = vpow.pop %v731
    %v733 = vadd.f32 %v732, 1.0
    %v734 = vrcp.pop %v733
    %v735 = vmul.f32 %v733, %v734
    %v736 = vsub.f32 1.0, %v735
    %v737 = vmul.f32 %v734, %v736
    %v738 = vadd.f32 %v734, %v737
    %vm739 = vweird.f32 %v733
    %vm740 = vweird.f32 %v734
    %vm741 = vmor %vm739, %vm740
    %v742 = vsel %vm741, %v734, %v738
    %v743 = vand.u32 2147483647, %v733
    %vm744 = vcmp.eq.f32.partialorder %v743, 8.507059e+37
    %v745 = vand.u32 %v733, 2147483648
    %v746 = vor.u32 1.1754944e-38, %v745
    %v747 = vsel %vm744, %v746, %v742
    %v748 = vmul.f32 1.0, %v747
    %v749 = vtanh.pop %v709
    %v750 = vxor.u32 %v710, 2147483648
    %v751 = vmul.f32 %v750, 1.442695
    %v752 = vpow.pop %v751
    %v753 = vadd.f32 %v752, 1.0
    %v754 = vrcp.pop %v753
    %v755 = vmul.f32 %v753, %v754
    %v756 = vsub.f32 1.0, %v755
    %v757 = vmul.f32 %v754, %v756
    %v758 = vadd.f32 %v754, %v757
    %vm759 = vweird.f32 %v753
    %vm760 = vweird.f32 %v754
    %vm761 = vmor %vm759, %vm760
    %v762 = vsel %vm761, %v754, %v758
    %v763 = vand.u32 2147483647, %v753
    %vm764 = vcmp.eq.f32.partialorder %v763, 8.507059e+37
    %v765 = vand.u32 %v753, 2147483648
    %v766 = vor.u32 1.1754944e-38, %v765
    %v767 = vsel %vm764, %v766, %v762
    %v768 = vmul.f32 1.0, %v767
    %v769 = vmul.f32 %v748, 0.0
    %v770 = vmul.f32 %v729, %v749
    %v771 = vadd.f32 %v769, %v770
    %v772 = vtanh.pop %v771
    %v773 = vmul.f32 %v768, %v772
    %v774 = vpack.c.bf16 %v773, %v773
    %v807 = vunpack.c.l.b16 %v458
    %v808 = vunpack.c.h.b16 %v458
    %v809 = vunpack.c.l.b16 %v459
    %v810 = vunpack.c.h.b16 %v459
    %v811 = vunpack.c.l.b16 %v460
    %v812 = vunpack.c.h.b16 %v460
    %v813 = vunpack.c.l.b16 %v461
    %v814 = vunpack.c.h.b16 %v461
    %v815 = vunpack.c.l.b16 %v462
    %v816 = vunpack.c.h.b16 %v462
    %v817 = vunpack.c.l.b16 %v463
    %v818 = vunpack.c.h.b16 %v463
    %v819 = vunpack.c.l.b16 %v464
    %v820 = vunpack.c.h.b16 %v464
    %v821 = vunpack.c.l.b16 %v465
    %v822 = vunpack.c.h.b16 %v465
    %v823 = vunpack.c.l.b16 %v466
    %v824 = vunpack.c.h.b16 %v466
    %v825 = vunpack.c.l.b16 %v467
    %v826 = vunpack.c.h.b16 %v467
    %v827 = vunpack.c.l.b16 %v468
    %v828 = vunpack.c.h.b16 %v468
    %v829 = vunpack.c.l.b16 %v469
    %v830 = vunpack.c.h.b16 %v469
    %v831 = vunpack.c.l.b16 %v470
    %v832 = vunpack.c.h.b16 %v470
    %v833 = vunpack.c.l.b16 %v471
    %v834 = vunpack.c.h.b16 %v471
    %v835 = vunpack.c.l.b16 %v472
    %v836 = vunpack.c.h.b16 %v472
    %v837 = vunpack.c.l.b16 %v473
    %v838 = vunpack.c.h.b16 %v473
    %v839 = vunpack.c.l.b16 %v474
    %v840 = vunpack.c.h.b16 %v474
    %v841 = vunpack.c.l.b16 %v475
    %v842 = vunpack.c.h.b16 %v475
    %v843 = vunpack.c.l.b16 %v476
    %v844 = vunpack.c.h.b16 %v476
    %v845 = vunpack.c.l.b16 %v477
    %v846 = vunpack.c.h.b16 %v477
    %v847 = vunpack.c.l.b16 %v478
    %v848 = vunpack.c.h.b16 %v478
    %v849 = vunpack.c.l.b16 %v479
    %v850 = vunpack.c.h.b16 %v479
    %v851 = vunpack.c.l.b16 %v480
    %v852 = vunpack.c.h.b16 %v480
    %v853 = vunpack.c.l.b16 %v481
    %v854 = vunpack.c.h.b16 %v481
    %v855 = vunpack.c.l.b16 %v482
    %v856 = vunpack.c.h.b16 %v482
    %v857 = vunpack.c.l.b16 %v483
    %v858 = vunpack.c.h.b16 %v483
    %v859 = vunpack.c.l.b16 %v484
    %v860 = vunpack.c.h.b16 %v484
    %v861 = vunpack.c.l.b16 %v485
    %v862 = vunpack.c.h.b16 %v485
    %v863 = vunpack.c.l.b16 %v486
    %v864 = vunpack.c.h.b16 %v486
    %v865 = vunpack.c.l.b16 %v487
    %v866 = vunpack.c.h.b16 %v487
    %v867 = vunpack.c.l.b16 %v488
    %v868 = vunpack.c.h.b16 %v488
    %v869 = vunpack.c.l.b16 %v489
    %v870 = vunpack.c.h.b16 %v489
    %v871 = vpack.c.b16 %v811, %v807
    %v872 = vpack.c.b16 %v812, %v808
    %v873 = vpack.c.b16 %v813, %v809
    %v874 = vpack.c.b16 %v814, %v810
    %v875 = vpack.c.b16 %v819, %v815
    %v876 = vpack.c.b16 %v820, %v816
    %v877 = vpack.c.b16 %v821, %v817
    %v878 = vpack.c.b16 %v822, %v818
    %v879 = vpack.c.b16 %v827, %v823
    %v880 = vpack.c.b16 %v828, %v824
    %v881 = vpack.c.b16 %v829, %v825
    %v882 = vpack.c.b16 %v830, %v826
    %v883 = vpack.c.b16 %v835, %v831
    %v884 = vpack.c.b16 %v836, %v832
    %v885 = vpack.c.b16 %v837, %v833
    %v886 = vpack.c.b16 %v838, %v834
    %v887 = vpack.c.b16 %v843, %v839
    %v888 = vpack.c.b16 %v844, %v840
    %v889 = vpack.c.b16 %v845, %v841
    %v890 = vpack.c.b16 %v846, %v842
    %v891 = vpack.c.b16 %v851, %v847
    %v892 = vpack.c.b16 %v852, %v848
    %v893 = vpack.c.b16 %v853, %v849
    %v894 = vpack.c.b16 %v854, %v850
    %v895 = vpack.c.b16 %v859, %v855
    %v896 = vpack.c.b16 %v860, %v856
    %v897 = vpack.c.b16 %v861, %v857
    %v898 = vpack.c.b16 %v862, %v858
    %v899 = vpack.c.b16 %v867, %v863
    %v900 = vpack.c.b16 %v868, %v864
    %v901 = vpack.c.b16 %v869, %v865
    %v902 = vpack.c.b16 %v870, %v866
    %935 = vmatpush.bf16.msra.mxu0 %v899
    %936 = vmatpush.bf16.msra.mxu0 %v895
    %937 = vmatpush.bf16.msra.mxu0 %v891
    %938 = vmatpush.bf16.msra.mxu0 %v887
    %939 = vmatpush.bf16.msra.mxu0 %v883
    %940 = vmatpush.bf16.msra.mxu0 %v879
    %941 = vmatpush.bf16.msra.mxu0 %v875
    %942 = vmatpush.bf16.msra.mxu0 %v871
    %943 = vmatmul.bf16.gmra.mxu0 0
    %v944 = vpop.f32.mrf.mxu0
    %v945 = vadd.f32 0.0, %v944
    %v946 = vpop.f32.mrf.mxu0
    %947 = vdwg.mxu0
    %948 = vmatpush.bf16.msra.mxu0 %v900
    %949 = vmatpush.bf16.msra.mxu0 %v896
    %950 = vmatpush.bf16.msra.mxu0 %v892
    %951 = vmatpush.bf16.msra.mxu0 %v888
    %952 = vmatpush.bf16.msra.mxu0 %v884
    %953 = vmatpush.bf16.msra.mxu0 %v880
    %954 = vmatpush.bf16.msra.mxu0 %v876
    %955 = vmatpush.bf16.msra.mxu0 %v872
    %956 = vmatmul.bf16.gmra.mxu0 0
    %v957 = vpop.f32.mrf.mxu0
    %v958 = vadd.f32 0.0, %v957
    %v959 = vpop.f32.mrf.mxu0
    %960 = vdwg.mxu0
    %961 = vmatpush.bf16.msra.mxu0 %v901
    %962 = vmatpush.bf16.msra.mxu0 %v897
    %963 = vmatpush.bf16.msra.mxu0 %v893
    %964 = vmatpush.bf16.msra.mxu0 %v889
    %965 = vmatpush.bf16.msra.mxu0 %v885
    %966 = vmatpush.bf16.msra.mxu0 %v881
    %967 = vmatpush.bf16.msra.mxu0 %v877
    %968 = vmatpush.bf16.msra.mxu0 %v873
    %969 = vmatmul.bf16.gmra.mxu0 0
    %v970 = vpop.f32.mrf.mxu0
    %v971 = vadd.f32 0.0, %v970
    %v972 = vpop.f32.mrf.mxu0
    %973 = vdwg.mxu0
    %974 = vmatpush.bf16.msra.mxu0 %v902
    %975 = vmatpush.bf16.msra.mxu0 %v898
    %976 = vmatpush.bf16.msra.mxu0 %v894
    %977 = vmatpush.bf16.msra.mxu0 %v890
    %978 = vmatpush.bf16.msra.mxu0 %v886
    %979 = vmatpush.bf16.msra.mxu0 %v882
    %980 = vmatpush.bf16.msra.mxu0 %v878
    %981 = vmatpush.bf16.msra.mxu0 %v874
    %982 = vmatmul.bf16.gmra.mxu0 0
    %v983 = vpop.f32.mrf.mxu0
    %v984 = vadd.f32 0.0, %v983
    %v985 = vpop.f32.mrf.mxu0
    %986 = vdwg.mxu0
    %v1019 = vunpack.c.l.b16 %v426
    %v1020 = vunpack.c.h.b16 %v426
    %v1021 = vunpack.c.l.b16 %v427
    %v1022 = vunpack.c.h.b16 %v427
    %v1023 = vunpack.c.l.b16 %v428
    %v1024 = vunpack.c.h.b16 %v428
    %v1025 = vunpack.c.l.b16 %v429
    %v1026 = vunpack.c.h.b16 %v429
    %v1027 = vunpack.c.l.b16 %v430
    %v1028 = vunpack.c.h.b16 %v430
    %v1029 = vunpack.c.l.b16 %v431
    %v1030 = vunpack.c.h.b16 %v431
    %v1031 = vunpack.c.l.b16 %v432
    %v1032 = vunpack.c.h.b16 %v432
    %v1033 = vunpack.c.l.b16 %v433
    %v1034 = vunpack.c.h.b16 %v433
    %v1035 = vunpack.c.l.b16 %v434
    %v1036 = vunpack.c.h.b16 %v434
    %v1037 = vunpack.c.l.b16 %v435
    %v1038 = vunpack.c.h.b16 %v435
    %v1039 = vunpack.c.l.b16 %v436
    %v1040 = vunpack.c.h.b16 %v436
    %v1041 = vunpack.c.l.b16 %v437
    %v1042 = vunpack.c.h.b16 %v437
    %v1043 = vunpack.c.l.b16 %v438
    %v1044 = vunpack.c.h.b16 %v438
    %v1045 = vunpack.c.l.b16 %v439
    %v1046 = vunpack.c.h.b16 %v439
    %v1047 = vunpack.c.l.b16 %v440
    %v1048 = vunpack.c.h.b16 %v440
    %v1049 = vunpack.c.l.b16 %v441
    %v1050 = vunpack.c.h.b16 %v441
    %v1051 = vunpack.c.l.b16 %v442
    %v1052 = vunpack.c.h.b16 %v442
    %v1053 = vunpack.c.l.b16 %v443
    %v1054 = vunpack.c.h.b16 %v443
    %v1055 = vunpack.c.l.b16 %v444
    %v1056 = vunpack.c.h.b16 %v444
    %v1057 = vunpack.c.l.b16 %v445
    %v1058 = vunpack.c.h.b16 %v445
    %v1059 = vunpack.c.l.b16 %v446
    %v1060 = vunpack.c.h.b16 %v446
    %v1061 = vunpack.c.l.b16 %v447
    %v1062 = vunpack.c.h.b16 %v447
    %v1063 = vunpack.c.l.b16 %v448
    %v1064 = vunpack.c.h.b16 %v448
    %v1065 = vunpack.c.l.b16 %v449
    %v1066 = vunpack.c.h.b16 %v449
    %v1067 = vunpack.c.l.b16 %v450
    %v1068 = vunpack.c.h.b16 %v450
    %v1069 = vunpack.c.l.b16 %v451
    %v1070 = vunpack.c.h.b16 %v451
    %v1071 = vunpack.c.l.b16 %v452
    %v1072 = vunpack.c.h.b16 %v452
    %v1073 = vunpack.c.l.b16 %v453
    %v1074 = vunpack.c.h.b16 %v453
    %v1075 = vunpack.c.l.b16 %v454
    %v1076 = vunpack.c.h.b16 %v454
    %v1077 = vunpack.c.l.b16 %v455
    %v1078 = vunpack.c.h.b16 %v455
    %v1079 = vunpack.c.l.b16 %v456
    %v1080 = vunpack.c.h.b16 %v456
    %v1081 = vunpack.c.l.b16 %v457
    %v1082 = vunpack.c.h.b16 %v457
    %v1083 = vpack.c.b16 %v1023, %v1019
    %v1084 = vpack.c.b16 %v1024, %v1020
    %v1085 = vpack.c.b16 %v1025, %v1021
    %v1086 = vpack.c.b16 %v1026, %v1022
    %v1087 = vpack.c.b16 %v1031, %v1027
    %v1088 = vpack.c.b16 %v1032, %v1028
    %v1089 = vpack.c.b16 %v1033, %v1029
    %v1090 = vpack.c.b16 %v1034, %v1030
    %v1091 = vpack.c.b16 %v1039, %v1035
    %v1092 = vpack.c.b16 %v1040, %v1036
    %v1093 = vpack.c.b16 %v1041, %v1037
    %v1094 = vpack.c.b16 %v1042, %v1038
    %v1095 = vpack.c.b16 %v1047, %v1043
    %v1096 = vpack.c.b16 %v1048, %v1044
    %v1097 = vpack.c.b16 %v1049, %v1045
    %v1098 = vpack.c.b16 %v1050, %v1046
    %v1099 = vpack.c.b16 %v1055, %v1051
    %v1100 = vpack.c.b16 %v1056, %v1052
    %v1101 = vpack.c.b16 %v1057, %v1053
    %v1102 = vpack.c.b16 %v1058, %v1054
    %v1103 = vpack.c.b16 %v1063, %v1059
    %v1104 = vpack.c.b16 %v1064, %v1060
    %v1105 = vpack.c.b16 %v1065, %v1061
    %v1106 = vpack.c.b16 %v1066, %v1062
    %v1107 = vpack.c.b16 %v1071, %v1067
    %v1108 = vpack.c.b16 %v1072, %v1068
    %v1109 = vpack.c.b16 %v1073, %v1069
    %v1110 = vpack.c.b16 %v1074, %v1070
    %v1111 = vpack.c.b16 %v1079, %v1075
    %v1112 = vpack.c.b16 %v1080, %v1076
    %v1113 = vpack.c.b16 %v1081, %v1077
    %v1114 = vpack.c.b16 %v1082, %v1078
    %1147 = vmatpush.bf16.msra.mxu0 %v1111
    %1148 = vmatpush.bf16.msra.mxu0 %v1107
    %1149 = vmatpush.bf16.msra.mxu0 %v1103
    %1150 = vmatpush.bf16.msra.mxu0 %v1099
    %1151 = vmatpush.bf16.msra.mxu0 %v1095
    %1152 = vmatpush.bf16.msra.mxu0 %v1091
    %1153 = vmatpush.bf16.msra.mxu0 %v1087
    %1154 = vmatpush.bf16.msra.mxu0 %v1083
    %1155 = vmatmul.bf16.gmra.mxu0 %v774
    %v1156 = vpop.f32.mrf.mxu0
    %v1157 = vadd.f32 %v945, %v1156
    %v1158 = vpop.f32.mrf.mxu0
    %1159 = vdwg.mxu0
    %1160 = vmatpush.bf16.msra.mxu0 %v1112
    %1161 = vmatpush.bf16.msra.mxu0 %v1108
    %1162 = vmatpush.bf16.msra.mxu0 %v1104
    %1163 = vmatpush.bf16.msra.mxu0 %v1100
    %1164 = vmatpush.bf16.msra.mxu0 %v1096
    %1165 = vmatpush.bf16.msra.mxu0 %v1092
    %1166 = vmatpush.bf16.msra.mxu0 %v1088
    %1167 = vmatpush.bf16.msra.mxu0 %v1084
    %1168 = vmatmul.bf16.gmra.mxu0 %v774
    %v1169 = vpop.f32.mrf.mxu0
    %v1170 = vadd.f32 %v958, %v1169
    %v1171 = vpop.f32.mrf.mxu0
    %1172 = vdwg.mxu0
    %1173 = vmatpush.bf16.msra.mxu0 %v1113
    %1174 = vmatpush.bf16.msra.mxu0 %v1109
    %1175 = vmatpush.bf16.msra.mxu0 %v1105
    %1176 = vmatpush.bf16.msra.mxu0 %v1101
    %1177 = vmatpush.bf16.msra.mxu0 %v1097
    %1178 = vmatpush.bf16.msra.mxu0 %v1093
    %1179 = vmatpush.bf16.msra.mxu0 %v1089
    %1180 = vmatpush.bf16.msra.mxu0 %v1085
    %1181 = vmatmul.bf16.gmra.mxu0 %v774
    %v1182 = vpop.f32.mrf.mxu0
    %v1183 = vadd.f32 %v971, %v1182
    %v1184 = vpop.f32.mrf.mxu0
    %1185 = vdwg.mxu0
    %1186 = vmatpush.bf16.msra.mxu0 %v1114
    %1187 = vmatpush.bf16.msra.mxu0 %v1110
    %1188 = vmatpush.bf16.msra.mxu0 %v1106
    %1189 = vmatpush.bf16.msra.mxu0 %v1102
    %1190 = vmatpush.bf16.msra.mxu0 %v1098
    %1191 = vmatpush.bf16.msra.mxu0 %v1094
    %1192 = vmatpush.bf16.msra.mxu0 %v1090
    %1193 = vmatpush.bf16.msra.mxu0 %v1086
    %1194 = vmatmul.bf16.gmra.mxu0 %v774
    %v1195 = vpop.f32.mrf.mxu0
    %v1196 = vadd.f32 %v984, %v1195
    %v1197 = vpop.f32.mrf.mxu0
    %1198 = vdwg.mxu0
    %v1200 = vperm.slane %v490, 0
    %v1201 = vperm.slane %v490, 1
    %v1202 = vperm.slane %v490, 2
    %v1203 = vperm.slane %v490, 3
    %v1208 = vadd.f32 %v1157, %v1200
    %v1209 = vadd.f32 %v1170, %v1201
    %v1210 = vadd.f32 %v1183, %v1202
    %v1211 = vadd.f32 %v1196, %v1203
    %v1212 = vunpack.c.l.bf16 %v380
    %v1213 = vunpack.c.h.bf16 %v380
    %v1214 = vunpack.c.l.bf16 %v381
    %v1215 = vunpack.c.h.bf16 %v381
    %1216 = vmatpush.bf16.msra.mxu0 %v619
    %1217 = vmatpush.bf16.msra.mxu0 %v615
    %1218 = vmatpush.bf16.msra.mxu0 %v611
    %1219 = vmatpush.bf16.msra.mxu0 %v607
    %1220 = vmatpush.bf16.msra.mxu0 %v603
    %1221 = vmatpush.bf16.msra.mxu0 %v599
    %1222 = vmatpush.bf16.msra.mxu0 %v595
    %1223 = vmatpush.bf16.msra.mxu0 %v591
    %1224 = vmatmul.bf16.gmra.mxu0 %v774
    %v1225 = vpop.f32.mrf.mxu0
    %v1226 = vadd.f32 0.0, %v1225
    %v1227 = vpop.f32.mrf.mxu0
    %1228 = vdwg.mxu0
    %1229 = vmatpush.bf16.msra.mxu0 %v620
    %1230 = vmatpush.bf16.msra.mxu0 %v616
    %1231 = vmatpush.bf16.msra.mxu0 %v612
    %1232 = vmatpush.bf16.msra.mxu0 %v608
    %1233 = vmatpush.bf16.msra.mxu0 %v604
    %1234 = vmatpush.bf16.msra.mxu0 %v600
    %1235 = vmatpush.bf16.msra.mxu0 %v596
    %1236 = vmatpush.bf16.msra.mxu0 %v592
    %1237 = vmatmul.bf16.gmra.mxu0 %v774
    %v1238 = vpop.f32.mrf.mxu0
    %v1239 = vadd.f32 0.0, %v1238
    %v1240 = vpop.f32.mrf.mxu0
    %1241 = vdwg.mxu0
    %1242 = vmatpush.bf16.msra.mxu0 %v621
    %1243 = vmatpush.bf16.msra.mxu0 %v617
    %1244 = vmatpush.bf16.msra.mxu0 %v613
    %1245 = vmatpush.bf16.msra.mxu0 %v609
    %1246 = vmatpush.bf16.msra.mxu0 %v605
    %1247 = vmatpush.bf16.msra.mxu0 %v601
    %1248 = vmatpush.bf16.msra.mxu0 %v597
    %1249 = vmatpush.bf16.msra.mxu0 %v593
    %1250 = vmatmul.bf16.gmra.mxu0 %v774
    %v1251 = vpop.f32.mrf.mxu0
    %v1252 = vadd.f32 0.0, %v1251
    %v1253 = vpop.f32.mrf.mxu0
    %1254 = vdwg.mxu0
    %1255 = vmatpush.bf16.msra.mxu0 %v622
    %1256 = vmatpush.bf16.msra.mxu0 %v618
    %1257 = vmatpush.bf16.msra.mxu0 %v614
    %1258 = vmatpush.bf16.msra.mxu0 %v610
    %1259 = vmatpush.bf16.msra.mxu0 %v606
    %1260 = vmatpush.bf16.msra.mxu0 %v602
    %1261 = vmatpush.bf16.msra.mxu0 %v598
    %1262 = vmatpush.bf16.msra.mxu0 %v594
    %1263 = vmatmul.bf16.gmra.mxu0 %v774
    %v1264 = vpop.f32.mrf.mxu0
    %v1265 = vadd.f32 0.0, %v1264
    %v1266 = vpop.f32.mrf.mxu0
    %1267 = vdwg.mxu0
    %v1268 = vadd.f32 %v1212, %v1226
    %v1269 = vadd.f32 %v1213, %v1239
    %v1270 = vadd.f32 %v1214, %v1252
    %v1271 = vadd.f32 %v1215, %v1265
    %v1272 = vxor.u32 %v1268, 2147483648
    %v1273 = vmul.f32 %v1272, 1.442695
    %v1274 = vpow.pop %v1273
    %v1275 = vadd.f32 %v1274, 1.0
    %v1276 = vrcp.pop %v1275
    %v1277 = vmul.f32 %v1275, %v1276
    %v1278 = vsub.f32 1.0, %v1277
    %v1279 = vmul.f32 %v1276, %v1278
    %v1280 = vadd.f32 %v1276, %v1279
    %vm1281 = vweird.f32 %v1275
    %vm1282 = vweird.f32 %v1276
    %vm1283 = vmor %vm1281, %vm1282
    %v1284 = vsel %vm1283, %v1276, %v1280
    %v1285 = vand.u32 2147483647, %v1275
    %vm1286 = vcmp.eq.f32.partialorder %v1285, 8.507059e+37
    %v1287 = vand.u32 %v1275, 2147483648
    %v1288 = vor.u32 1.1754944e-38, %v1287
    %v1289 = vsel %vm1286, %v1288, %v1284
    %v1290 = vmul.f32 1.0, %v1289
    %v1291 = vxor.u32 %v1269, 2147483648
    %v1292 = vmul.f32 %v1291, 1.442695
    %v1293 = vpow.pop %v1292
    %v1294 = vadd.f32 %v1293, 1.0
    %v1295 = vrcp.pop %v1294
    %v1296 = vmul.f32 %v1294, %v1295
    %v1297 = vsub.f32 1.0, %v1296
    %v1298 = vmul.f32 %v1295, %v1297
    %v1299 = vadd.f32 %v1295, %v1298
    %vm1300 = vweird.f32 %v1294
    %vm1301 = vweird.f32 %v1295
    %vm1302 = vmor %vm1300, %vm1301
    %v1303 = vsel %vm1302, %v1295, %v1299
    %v1304 = vand.u32 2147483647, %v1294
    %vm1305 = vcmp.eq.f32.partialorder %v1304, 8.507059e+37
    %v1306 = vand.u32 %v1294, 2147483648
    %v1307 = vor.u32 1.1754944e-38, %v1306
    %v1308 = vsel %vm1305, %v1307, %v1303
    %v1309 = vmul.f32 1.0, %v1308
    %v1310 = vtanh.pop %v1270
    %v1311 = vxor.u32 %v1271, 2147483648
    %v1312 = vmul.f32 %v1311, 1.442695
    %v1313 = vpow.pop %v1312
    %v1314 = vadd.f32 %v1313, 1.0
    %v1315 = vrcp.pop %v1314
    %v1316 = vmul.f32 %v1314, %v1315
    %v1317 = vsub.f32 1.0, %v1316
    %v1318 = vmul.f32 %v1315, %v1317
    %v1319 = vadd.f32 %v1315, %v1318
    %vm1320 = vweird.f32 %v1314
    %vm1321 = vweird.f32 %v1315
    %vm1322 = vmor %vm1320, %vm1321
    %v1323 = vsel %vm1322, %v1315, %v1319
    %v1324 = vand.u32 2147483647, %v1314
    %vm1325 = vcmp.eq.f32.partialorder %v1324, 8.507059e+37
    %v1326 = vand.u32 %v1314, 2147483648
    %v1327 = vor.u32 1.1754944e-38, %v1326
    %v1328 = vsel %vm1325, %v1327, %v1323
    %v1329 = vmul.f32 1.0, %v1328
    %v1330 = vmul.f32 %v1309, %v771
    %v1331 = vmul.f32 %v1290, %v1310
    %v1332 = vadd.f32 %v1330, %v1331
    %v1333 = vtanh.pop %v1332
    %v1334 = vmul.f32 %v1329, %v1333
    %v1335 = vxor.u32 %v1208, 2147483648
    %v1336 = vmul.f32 %v1335, 1.442695
    %v1337 = vpow.pop %v1336
    %v1338 = vadd.f32 %v1337, 1.0
    %v1339 = vrcp.pop %v1338
    %v1340 = vmul.f32 %v1338, %v1339
    %v1341 = vsub.f32 1.0, %v1340
    %v1342 = vmul.f32 %v1339, %v1341
    %v1343 = vadd.f32 %v1339, %v1342
    %vm1344 = vweird.f32 %v1338
    %vm1345 = vweird.f32 %v1339
    %vm1346 = vmor %vm1344, %vm1345
    %v1347 = vsel %vm1346, %v1339, %v1343
    %v1348 = vand.u32 2147483647, %v1338
    %vm1349 = vcmp.eq.f32.partialorder %v1348, 8.507059e+37
    %v1350 = vand.u32 %v1338, 2147483648
    %v1351 = vor.u32 1.1754944e-38, %v1350
    %v1352 = vsel %vm1349, %v1351, %v1347
    %v1353 = vmul.f32 1.0, %v1352
    %v1354 = vxor.u32 %v1209, 2147483648
    %v1355 = vmul.f32 %v1354, 1.442695
    %v1356 = vpow.pop %v1355
    %v1357 = vadd.f32 %v1356, 1.0
    %v1358 = vrcp.pop %v1357
    %v1359 = vmul.f32 %v1357, %v1358
    %v1360 = vsub.f32 1.0, %v1359
    %v1361 = vmul.f32 %v1358, %v1360
    %v1362 = vadd.f32 %v1358, %v1361
    %vm1363 = vweird.f32 %v1357
    %vm1364 = vweird.f32 %v1358
    %vm1365 = vmor %vm1363, %vm1364
    %v1366 = vsel %vm1365, %v1358, %v1362
    %v1367 = vand.u32 2147483647, %v1357
    %vm1368 = vcmp.eq.f32.partialorder %v1367, 8.507059e+37
    %v1369 = vand.u32 %v1357, 2147483648
    %v1370 = vor.u32 1.1754944e-38, %v1369
    %v1371 = vsel %vm1368, %v1370, %v1366
    %v1372 = vmul.f32 1.0, %v1371
    %v1373 = vtanh.pop %v1210
    %v1374 = vxor.u32 %v1211, 2147483648
    %v1375 = vmul.f32 %v1374, 1.442695
    %v1376 = vpow.pop %v1375
    %v1377 = vadd.f32 %v1376, 1.0
    %v1378 = vrcp.pop %v1377
    %v1379 = vmul.f32 %v1377, %v1378
    %v1380 = vsub.f32 1.0, %v1379
    %v1381 = vmul.f32 %v1378, %v1380
    %v1382 = vadd.f32 %v1378, %v1381
    %vm1383 = vweird.f32 %v1377
    %vm1384 = vweird.f32 %v1378
    %vm1385 = vmor %vm1383, %vm1384
    %v1386 = vsel %vm1385, %v1378, %v1382
    %v1387 = vand.u32 2147483647, %v1377
    %vm1388 = vcmp.eq.f32.partialorder %v1387, 8.507059e+37
    %v1389 = vand.u32 %v1377, 2147483648
    %v1390 = vor.u32 1.1754944e-38, %v1389
    %v1391 = vsel %vm1388, %v1390, %v1386
    %v1392 = vmul.f32 1.0, %v1391
    %v1393 = vmul.f32 %v1372, 0.0
    %v1394 = vmul.f32 %v1353, %v1373
    %v1395 = vadd.f32 %v1393, %v1394
    %v1396 = vtanh.pop %v1395
    %v1397 = vmul.f32 %v1392, %v1396
    %v1398 = vpack.c.bf16 %v1334, %v1334
    %v1399 = vpack.c.bf16 %v1397, %v1397
    %1400 = vmatpush.bf16.msra.mxu0 %v899
    %1401 = vmatpush.bf16.msra.mxu0 %v895
    %1402 = vmatpush.bf16.msra.mxu0 %v891
    %1403 = vmatpush.bf16.msra.mxu0 %v887
    %1404 = vmatpush.bf16.msra.mxu0 %v883
    %1405 = vmatpush.bf16.msra.mxu0 %v879
    %1406 = vmatpush.bf16.msra.mxu0 %v875
    %1407 = vmatpush.bf16.msra.mxu0 %v871
    %1408 = vmatmul.bf16.gmra.mxu0 %v1399
    %v1409 = vpop.f32.mrf.mxu0
    %v1410 = vadd.f32 0.0, %v1409
    %v1411 = vpop.f32.mrf.mxu0
    %1412 = vdwg.mxu0
    %1413 = vmatpush.bf16.msra.mxu0 %v900
    %1414 = vmatpush.bf16.msra.mxu0 %v896
    %1415 = vmatpush.bf16.msra.mxu0 %v892
    %1416 = vmatpush.bf16.msra.mxu0 %v888
    %1417 = vmatpush.bf16.msra.mxu0 %v884
    %1418 = vmatpush.bf16.msra.mxu0 %v880
    %1419 = vmatpush.bf16.msra.mxu0 %v876
    %1420 = vmatpush.bf16.msra.mxu0 %v872
    %1421 = vmatmul.bf16.gmra.mxu0 %v1399
    %v1422 = vpop.f32.mrf.mxu0
    %v1423 = vadd.f32 0.0, %v1422
    %v1424 = vpop.f32.mrf.mxu0
    %1425 = vdwg.mxu0
    %1426 = vmatpush.bf16.msra.mxu0 %v901
    %1427 = vmatpush.bf16.msra.mxu0 %v897
    %1428 = vmatpush.bf16.msra.mxu0 %v893
    %1429 = vmatpush.bf16.msra.mxu0 %v889
    %1430 = vmatpush.bf16.msra.mxu0 %v885
    %1431 = vmatpush.bf16.msra.mxu0 %v881
    %1432 = vmatpush.bf16.msra.mxu0 %v877
    %1433 = vmatpush.bf16.msra.mxu0 %v873
    %1434 = vmatmul.bf16.gmra.mxu0 %v1399
    %v1435 = vpop.f32.mrf.mxu0
    %v1436 = vadd.f32 0.0, %v1435
    %v1437 = vpop.f32.mrf.mxu0
    %1438 = vdwg.mxu0
    %1439 = vmatpush.bf16.msra.mxu0 %v902
    %1440 = vmatpush.bf16.msra.mxu0 %v898
    %1441 = vmatpush.bf16.msra.mxu0 %v894
    %1442 = vmatpush.bf16.msra.mxu0 %v890
    %1443 = vmatpush.bf16.msra.mxu0 %v886
    %1444 = vmatpush.bf16.msra.mxu0 %v882
    %1445 = vmatpush.bf16.msra.mxu0 %v878
    %1446 = vmatpush.bf16.msra.mxu0 %v874
    %1447 = vmatmul.bf16.gmra.mxu0 %v1399
    %v1448 = vpop.f32.mrf.mxu0
    %v1449 = vadd.f32 0.0, %v1448
    %v1450 = vpop.f32.mrf.mxu0
    %1451 = vdwg.mxu0
    %1452 = vmatpush.bf16.msra.mxu0 %v1111
    %1453 = vmatpush.bf16.msra.mxu0 %v1107
    %1454 = vmatpush.bf16.msra.mxu0 %v1103
    %1455 = vmatpush.bf16.msra.mxu0 %v1099
    %1456 = vmatpush.bf16.msra.mxu0 %v1095
    %1457 = vmatpush.bf16.msra.mxu0 %v1091
    %1458 = vmatpush.bf16.msra.mxu0 %v1087
    %1459 = vmatpush.bf16.msra.mxu0 %v1083
    %1460 = vmatmul.bf16.gmra.mxu0 %v1398
    %v1461 = vpop.f32.mrf.mxu0
    %v1462 = vadd.f32 %v1410, %v1461
    %v1463 = vpop.f32.mrf.mxu0
    %1464 = vdwg.mxu0
    %1465 = vmatpush.bf16.msra.mxu0 %v1112
    %1466 = vmatpush.bf16.msra.mxu0 %v1108
    %1467 = vmatpush.bf16.msra.mxu0 %v1104
    %1468 = vmatpush.bf16.msra.mxu0 %v1100
    %1469 = vmatpush.bf16.msra.mxu0 %v1096
    %1470 = vmatpush.bf16.msra.mxu0 %v1092
    %1471 = vmatpush.bf16.msra.mxu0 %v1088
    %1472 = vmatpush.bf16.msra.mxu0 %v1084
    %1473 = vmatmul.bf16.gmra.mxu0 %v1398
    %v1474 = vpop.f32.mrf.mxu0
    %v1475 = vadd.f32 %v1423, %v1474
    %v1476 = vpop.f32.mrf.mxu0
    %1477 = vdwg.mxu0
    %1478 = vmatpush.bf16.msra.mxu0 %v1113
    %1479 = vmatpush.bf16.msra.mxu0 %v1109
    %1480 = vmatpush.bf16.msra.mxu0 %v1105
    %1481 = vmatpush.bf16.msra.mxu0 %v1101
    %1482 = vmatpush.bf16.msra.mxu0 %v1097
    %1483 = vmatpush.bf16.msra.mxu0 %v1093
    %1484 = vmatpush.bf16.msra.mxu0 %v1089
    %1485 = vmatpush.bf16.msra.mxu0 %v1085
    %1486 = vmatmul.bf16.gmra.mxu0 %v1398
    %v1487 = vpop.f32.mrf.mxu0
    %v1488 = vadd.f32 %v1436, %v1487
    %v1489 = vpop.f32.mrf.mxu0
    %1490 = vdwg.mxu0
    %1491 = vmatpush.bf16.msra.mxu0 %v1114
    %1492 = vmatpush.bf16.msra.mxu0 %v1110
    %1493 = vmatpush.bf16.msra.mxu0 %v1106
    %1494 = vmatpush.bf16.msra.mxu0 %v1102
    %1495 = vmatpush.bf16.msra.mxu0 %v1098
    %1496 = vmatpush.bf16.msra.mxu0 %v1094
    %1497 = vmatpush.bf16.msra.mxu0 %v1090
    %1498 = vmatpush.bf16.msra.mxu0 %v1086
    %1499 = vmatmul.bf16.gmra.mxu0 %v1398
    %v1500 = vpop.f32.mrf.mxu0
    %v1501 = vadd.f32 %v1449, %v1500
    %v1502 = vpop.f32.mrf.mxu0
    %1503 = vdwg.mxu0
    %v1504 = vadd.f32 %v1462, %v1200
    %v1505 = vadd.f32 %v1475, %v1201
    %v1506 = vadd.f32 %v1488, %v1202
    %v1507 = vadd.f32 %v1501, %v1203
    %v1508 = vunpack.c.l.bf16 %v382
    %v1509 = vunpack.c.h.bf16 %v382
    %v1510 = vunpack.c.l.bf16 %v383
    %v1511 = vunpack.c.h.bf16 %v383
    %1512 = vmatpush.bf16.msra.mxu0 %v619
    %1513 = vmatpush.bf16.msra.mxu0 %v615
    %1514 = vmatpush.bf16.msra.mxu0 %v611
    %1515 = vmatpush.bf16.msra.mxu0 %v607
    %1516 = vmatpush.bf16.msra.mxu0 %v603
    %1517 = vmatpush.bf16.msra.mxu0 %v599
    %1518 = vmatpush.bf16.msra.mxu0 %v595
    %1519 = vmatpush.bf16.msra.mxu0 %v591
    %1520 = vmatmul.bf16.gmra.mxu0 %v1398
    %v1521 = vpop.f32.mrf.mxu0
    %v1522 = vadd.f32 0.0, %v1521
    %v1523 = vpop.f32.mrf.mxu0
    %1524 = vdwg.mxu0
    %1525 = vmatpush.bf16.msra.mxu0 %v620
    %1526 = vmatpush.bf16.msra.mxu0 %v616
    %1527 = vmatpush.bf16.msra.mxu0 %v612
    %1528 = vmatpush.bf16.msra.mxu0 %v608
    %1529 = vmatpush.bf16.msra.mxu0 %v604
    %1530 = vmatpush.bf16.msra.mxu0 %v600
    %1531 = vmatpush.bf16.msra.mxu0 %v596
    %1532 = vmatpush.bf16.msra.mxu0 %v592
    %1533 = vmatmul.bf16.gmra.mxu0 %v1398
    %v1534 = vpop.f32.mrf.mxu0
    %v1535 = vadd.f32 0.0, %v1534
    %v1536 = vpop.f32.mrf.mxu0
    %1537 = vdwg.mxu0
    %1538 = vmatpush.bf16.msra.mxu0 %v621
    %1539 = vmatpush.bf16.msra.mxu0 %v617
    %1540 = vmatpush.bf16.msra.mxu0 %v613
    %1541 = vmatpush.bf16.msra.mxu0 %v609
    %1542 = vmatpush.bf16.msra.mxu0 %v605
    %1543 = vmatpush.bf16.msra.mxu0 %v601
    %1544 = vmatpush.bf16.msra.mxu0 %v597
    %1545 = vmatpush.bf16.msra.mxu0 %v593
    %1546 = vmatmul.bf16.gmra.mxu0 %v1398
    %v1547 = vpop.f32.mrf.mxu0
    %v1548 = vadd.f32 0.0, %v1547
    %v1549 = vpop.f32.mrf.mxu0
    %1550 = vdwg.mxu0
    %1551 = vmatpush.bf16.msra.mxu0 %v622
    %1552 = vmatpush.bf16.msra.mxu0 %v618
    %1553 = vmatpush.bf16.msra.mxu0 %v614
    %1554 = vmatpush.bf16.msra.mxu0 %v610
    %1555 = vmatpush.bf16.msra.mxu0 %v606
    %1556 = vmatpush.bf16.msra.mxu0 %v602
    %1557 = vmatpush.bf16.msra.mxu0 %v598
    %1558 = vmatpush.bf16.msra.mxu0 %v594
    %1559 = vmatmul.bf16.gmra.mxu0 %v1398
    %v1560 = vpop.f32.mrf.mxu0
    %v1561 = vadd.f32 0.0, %v1560
    %v1562 = vpop.f32.mrf.mxu0
    %1563 = vdwg.mxu0
    %v1564 = vadd.f32 %v1508, %v1522
    %v1565 = vadd.f32 %v1509, %v1535
    %v1566 = vadd.f32 %v1510, %v1548
    %v1567 = vadd.f32 %v1511, %v1561
    %v1568 = vxor.u32 %v1564, 2147483648
    %v1569 = vmul.f32 %v1568, 1.442695
    %v1570 = vpow.pop %v1569
    %v1571 = vadd.f32 %v1570, 1.0
    %v1572 = vrcp.pop %v1571
    %v1573 = vmul.f32 %v1571, %v1572
    %v1574 = vsub.f32 1.0, %v1573
    %v1575 = vmul.f32 %v1572, %v1574
    %v1576 = vadd.f32 %v1572, %v1575
    %vm1577 = vweird.f32 %v1571
    %vm1578 = vweird.f32 %v1572
    %vm1579 = vmor %vm1577, %vm1578
    %v1580 = vsel %vm1579, %v1572, %v1576
    %v1581 = vand.u32 2147483647, %v1571
    %vm1582 = vcmp.eq.f32.partialorder %v1581, 8.507059e+37
    %v1583 = vand.u32 %v1571, 2147483648
    %v1584 = vor.u32 1.1754944e-38, %v1583
    %v1585 = vsel %vm1582, %v1584, %v1580
    %v1586 = vmul.f32 1.0, %v1585
    %v1587 = vxor.u32 %v1565, 2147483648
    %v1588 = vmul.f32 %v1587, 1.442695
    %v1589 = vpow.pop %v1588
    %v1590 = vadd.f32 %v1589, 1.0
    %v1591 = vrcp.pop %v1590
    %v1592 = vmul.f32 %v1590, %v1591
    %v1593 = vsub.f32 1.0, %v1592
    %v1594 = vmul.f32 %v1591, %v1593
    %v1595 = vadd.f32 %v1591, %v1594
    %vm1596 = vweird.f32 %v1590
    %vm1597 = vweird.f32 %v1591
    %vm1598 = vmor %vm1596, %vm1597
    %v1599 = vsel %vm1598, %v1591, %v1595
    %v1600 = vand.u32 2147483647, %v1590
    %vm1601 = vcmp.eq.f32.partialorder %v1600, 8.507059e+37
    %v1602 = vand.u32 %v1590, 2147483648
    %v1603 = vor.u32 1.1754944e-38, %v1602
    %v1604 = vsel %vm1601, %v1603, %v1599
    %v1605 = vmul.f32 1.0, %v1604
    %v1606 = vtanh.pop %v1566
    %v1607 = vxor.u32 %v1567, 2147483648
    %v1608 = vmul.f32 %v1607, 1.442695
    %v1609 = vpow.pop %v1608
    %v1610 = vadd.f32 %v1609, 1.0
    %v1611 = vrcp.pop %v1610
    %v1612 = vmul.f32 %v1610, %v1611
    %v1613 = vsub.f32 1.0, %v1612
    %v1614 = vmul.f32 %v1611, %v1613
    %v1615 = vadd.f32 %v1611, %v1614
    %vm1616 = vweird.f32 %v1610
    %vm1617 = vweird.f32 %v1611
    %vm1618 = vmor %vm1616, %vm1617
    %v1619 = vsel %vm1618, %v1611, %v1615
    %v1620 = vand.u32 2147483647, %v1610
    %vm1621 = vcmp.eq.f32.partialorder %v1620, 8.507059e+37
    %v1622 = vand.u32 %v1610, 2147483648
    %v1623 = vor.u32 1.1754944e-38, %v1622
    %v1624 = vsel %vm1621, %v1623, %v1619
    %v1625 = vmul.f32 1.0, %v1624
    %v1626 = vmul.f32 %v1605, %v1332
    %v1627 = vmul.f32 %v1586, %v1606
    %v1628 = vadd.f32 %v1626, %v1627
    %v1629 = vtanh.pop %v1628
    %v1630 = vmul.f32 %v1625, %v1629
    %v1631 = vxor.u32 %v1504, 2147483648
    %v1632 = vmul.f32 %v1631, 1.442695
    %v1633 = vpow.pop %v1632
    %v1634 = vadd.f32 %v1633, 1.0
    %v1635 = vrcp.pop %v1634
    %v1636 = vmul.f32 %v1634, %v1635
    %v1637 = vsub.f32 1.0, %v1636
    %v1638 = vmul.f32 %v1635, %v1637
    %v1639 = vadd.f32 %v1635, %v1638
    %vm1640 = vweird.f32 %v1634
    %vm1641 = vweird.f32 %v1635
    %vm1642 = vmor %vm1640, %vm1641
    %v1643 = vsel %vm1642, %v1635, %v1639
    %v1644 = vand.u32 2147483647, %v1634
    %vm1645 = vcmp.eq.f32.partialorder %v1644, 8.507059e+37
    %v1646 = vand.u32 %v1634, 2147483648
    %v1647 = vor.u32 1.1754944e-38, %v1646
    %v1648 = vsel %vm1645, %v1647, %v1643
    %v1649 = vmul.f32 1.0, %v1648
    %v1650 = vxor.u32 %v1505, 2147483648
    %v1651 = vmul.f32 %v1650, 1.442695
    %v1652 = vpow.pop %v1651
    %v1653 = vadd.f32 %v1652, 1.0
    %v1654 = vrcp.pop %v1653
    %v1655 = vmul.f32 %v1653, %v1654
    %v1656 = vsub.f32 1.0, %v1655
    %v1657 = vmul.f32 %v1654, %v1656
    %v1658 = vadd.f32 %v1654, %v1657
    %vm1659 = vweird.f32 %v1653
    %vm1660 = vweird.f32 %v1654
    %vm1661 = vmor %vm1659, %vm1660
    %v1662 = vsel %vm1661, %v1654, %v1658
    %v1663 = vand.u32 2147483647, %v1653
    %vm1664 = vcmp.eq.f32.partialorder %v1663, 8.507059e+37
    %v1665 = vand.u32 %v1653, 2147483648
    %v1666 = vor.u32 1.1754944e-38, %v1665
    %v1667 = vsel %vm1664, %v1666, %v1662
    %v1668 = vmul.f32 1.0, %v1667
    %v1669 = vtanh.pop %v1506
    %v1670 = vxor.u32 %v1507, 2147483648
    %v1671 = vmul.f32 %v1670, 1.442695
    %v1672 = vpow.pop %v1671
    %v1673 = vadd.f32 %v1672, 1.0
    %v1674 = vrcp.pop %v1673
    %v1675 = vmul.f32 %v1673, %v1674
    %v1676 = vsub.f32 1.0, %v1675
    %v1677 = vmul.f32 %v1674, %v1676
    %v1678 = vadd.f32 %v1674, %v1677
    %vm1679 = vweird.f32 %v1673
    %vm1680 = vweird.f32 %v1674
    %vm1681 = vmor %vm1679, %vm1680
    %v1682 = vsel %vm1681, %v1674, %v1678
    %v1683 = vand.u32 2147483647, %v1673
    %vm1684 = vcmp.eq.f32.partialorder %v1683, 8.507059e+37
    %v1685 = vand.u32 %v1673, 2147483648
    %v1686 = vor.u32 1.1754944e-38, %v1685
    %v1687 = vsel %vm1684, %v1686, %v1682
    %v1688 = vmul.f32 1.0, %v1687
    %v1689 = vmul.f32 %v1668, %v1395
    %v1690 = vmul.f32 %v1649, %v1669
    %v1691 = vadd.f32 %v1689, %v1690
    %v1692 = vtanh.pop %v1691
    %v1693 = vmul.f32 %v1688, %v1692
    %v1694 = vpack.c.bf16 %v1630, %v1630
    %v1695 = vpack.c.bf16 %v1693, %v1693
    %1696 = vmatpush.bf16.msra.mxu0 %v899
    %1697 = vmatpush.bf16.msra.mxu0 %v895
    %1698 = vmatpush.bf16.msra.mxu0 %v891
    %1699 = vmatpush.bf16.msra.mxu0 %v887
    %1700 = vmatpush.bf16.msra.mxu0 %v883
    %1701 = vmatpush.bf16.msra.mxu0 %v879
    %1702 = vmatpush.bf16.msra.mxu0 %v875
    %1703 = vmatpush.bf16.msra.mxu0 %v871
    %1704 = vmatmul.bf16.gmra.mxu0 %v1695
    %v1705 = vpop.f32.mrf.mxu0
    %v1706 = vadd.f32 0.0, %v1705
    %v1707 = vpop.f32.mrf.mxu0
    %1708 = vdwg.mxu0
    %1709 = vmatpush.bf16.msra.mxu0 %v900
    %1710 = vmatpush.bf16.msra.mxu0 %v896
    %1711 = vmatpush.bf16.msra.mxu0 %v892
    %1712 = vmatpush.bf16.msra.mxu0 %v888
    %1713 = vmatpush.bf16.msra.mxu0 %v884
    %1714 = vmatpush.bf16.msra.mxu0 %v880
    %1715 = vmatpush.bf16.msra.mxu0 %v876
    %1716 = vmatpush.bf16.msra.mxu0 %v872
    %1717 = vmatmul.bf16.gmra.mxu0 %v1695
    %v1718 = vpop.f32.mrf.mxu0
    %v1719 = vadd.f32 0.0, %v1718
    %v1720 = vpop.f32.mrf.mxu0
    %1721 = vdwg.mxu0
    %1722 = vmatpush.bf16.msra.mxu0 %v901
    %1723 = vmatpush.bf16.msra.mxu0 %v897
    %1724 = vmatpush.bf16.msra.mxu0 %v893
    %1725 = vmatpush.bf16.msra.mxu0 %v889
    %1726 = vmatpush.bf16.msra.mxu0 %v885
    %1727 = vmatpush.bf16.msra.mxu0 %v881
    %1728 = vmatpush.bf16.msra.mxu0 %v877
    %1729 = vmatpush.bf16.msra.mxu0 %v873
    %1730 = vmatmul.bf16.gmra.mxu0 %v1695
    %v1731 = vpop.f32.mrf.mxu0
    %v1732 = vadd.f32 0.0, %v1731
    %v1733 = vpop.f32.mrf.mxu0
    %1734 = vdwg.mxu0
    %1735 = vmatpush.bf16.msra.mxu0 %v902
    %1736 = vmatpush.bf16.msra.mxu0 %v898
    %1737 = vmatpush.bf16.msra.mxu0 %v894
    %1738 = vmatpush.bf16.msra.mxu0 %v890
    %1739 = vmatpush.bf16.msra.mxu0 %v886
    %1740 = vmatpush.bf16.msra.mxu0 %v882
    %1741 = vmatpush.bf16.msra.mxu0 %v878
    %1742 = vmatpush.bf16.msra.mxu0 %v874
    %1743 = vmatmul.bf16.gmra.mxu0 %v1695
    %v1744 = vpop.f32.mrf.mxu0
    %v1745 = vadd.f32 0.0, %v1744
    %v1746 = vpop.f32.mrf.mxu0
    %1747 = vdwg.mxu0
    %1748 = vmatpush.bf16.msra.mxu0 %v1111
    %1749 = vmatpush.bf16.msra.mxu0 %v1107
    %1750 = vmatpush.bf16.msra.mxu0 %v1103
    %1751 = vmatpush.bf16.msra.mxu0 %v1099
    %1752 = vmatpush.bf16.msra.mxu0 %v1095
    %1753 = vmatpush.bf16.msra.mxu0 %v1091
    %1754 = vmatpush.bf16.msra.mxu0 %v1087
    %1755 = vmatpush.bf16.msra.mxu0 %v1083
    %1756 = vmatmul.bf16.gmra.mxu0 %v1694
    %v1757 = vpop.f32.mrf.mxu0
    %v1758 = vadd.f32 %v1706, %v1757
    %v1759 = vpop.f32.mrf.mxu0
    %1760 = vdwg.mxu0
    %1761 = vmatpush.bf16.msra.mxu0 %v1112
    %1762 = vmatpush.bf16.msra.mxu0 %v1108
    %1763 = vmatpush.bf16.msra.mxu0 %v1104
    %1764 = vmatpush.bf16.msra.mxu0 %v1100
    %1765 = vmatpush.bf16.msra.mxu0 %v1096
    %1766 = vmatpush.bf16.msra.mxu0 %v1092
    %1767 = vmatpush.bf16.msra.mxu0 %v1088
    %1768 = vmatpush.bf16.msra.mxu0 %v1084
    %1769 = vmatmul.bf16.gmra.mxu0 %v1694
    %v1770 = vpop.f32.mrf.mxu0
    %v1771 = vadd.f32 %v1719, %v1770
    %v1772 = vpop.f32.mrf.mxu0
    %1773 = vdwg.mxu0
    %1774 = vmatpush.bf16.msra.mxu0 %v1113
    %1775 = vmatpush.bf16.msra.mxu0 %v1109
    %1776 = vmatpush.bf16.msra.mxu0 %v1105
    %1777 = vmatpush.bf16.msra.mxu0 %v1101
    %1778 = vmatpush.bf16.msra.mxu0 %v1097
    %1779 = vmatpush.bf16.msra.mxu0 %v1093
    %1780 = vmatpush.bf16.msra.mxu0 %v1089
    %1781 = vmatpush.bf16.msra.mxu0 %v1085
    %1782 = vmatmul.bf16.gmra.mxu0 %v1694
    %v1783 = vpop.f32.mrf.mxu0
    %v1784 = vadd.f32 %v1732, %v1783
    %v1785 = vpop.f32.mrf.mxu0
    %1786 = vdwg.mxu0
    %1787 = vmatpush.bf16.msra.mxu0 %v1114
    %1788 = vmatpush.bf16.msra.mxu0 %v1110
    %1789 = vmatpush.bf16.msra.mxu0 %v1106
    %1790 = vmatpush.bf16.msra.mxu0 %v1102
    %1791 = vmatpush.bf16.msra.mxu0 %v1098
    %1792 = vmatpush.bf16.msra.mxu0 %v1094
    %1793 = vmatpush.bf16.msra.mxu0 %v1090
    %1794 = vmatpush.bf16.msra.mxu0 %v1086
    %1795 = vmatmul.bf16.gmra.mxu0 %v1694
    %v1796 = vpop.f32.mrf.mxu0
    %v1797 = vadd.f32 %v1745, %v1796
    %v1798 = vpop.f32.mrf.mxu0
    %1799 = vdwg.mxu0
    %v1800 = vadd.f32 %v1758, %v1200
    %v1801 = vadd.f32 %v1771, %v1201
    %v1802 = vadd.f32 %v1784, %v1202
    %v1803 = vadd.f32 %v1797, %v1203
    %v1804 = vunpack.c.l.bf16 %v384
    %v1805 = vunpack.c.h.bf16 %v384
    %v1806 = vunpack.c.l.bf16 %v385
    %v1807 = vunpack.c.h.bf16 %v385
    %1808 = vmatpush.bf16.msra.mxu0 %v619
    %1809 = vmatpush.bf16.msra.mxu0 %v615
    %1810 = vmatpush.bf16.msra.mxu0 %v611
    %1811 = vmatpush.bf16.msra.mxu0 %v607
    %1812 = vmatpush.bf16.msra.mxu0 %v603
    %1813 = vmatpush.bf16.msra.mxu0 %v599
    %1814 = vmatpush.bf16.msra.mxu0 %v595
    %1815 = vmatpush.bf16.msra.mxu0 %v591
    %1816 = vmatmul.bf16.gmra.mxu0 %v1694
    %v1817 = vpop.f32.mrf.mxu0
    %v1818 = vadd.f32 0.0, %v1817
    %v1819 = vpop.f32.mrf.mxu0
    %1820 = vdwg.mxu0
    %1821 = vmatpush.bf16.msra.mxu0 %v620
    %1822 = vmatpush.bf16.msra.mxu0 %v616
    %1823 = vmatpush.bf16.msra.mxu0 %v612
    %1824 = vmatpush.bf16.msra.mxu0 %v608
    %1825 = vmatpush.bf16.msra.mxu0 %v604
    %1826 = vmatpush.bf16.msra.mxu0 %v600
    %1827 = vmatpush.bf16.msra.mxu0 %v596
    %1828 = vmatpush.bf16.msra.mxu0 %v592
    %1829 = vmatmul.bf16.gmra.mxu0 %v1694
    %v1830 = vpop.f32.mrf.mxu0
    %v1831 = vadd.f32 0.0, %v1830
    %v1832 = vpop.f32.mrf.mxu0
    %1833 = vdwg.mxu0
    %1834 = vmatpush.bf16.msra.mxu0 %v621
    %1835 = vmatpush.bf16.msra.mxu0 %v617
    %1836 = vmatpush.bf16.msra.mxu0 %v613
    %1837 = vmatpush.bf16.msra.mxu0 %v609
    %1838 = vmatpush.bf16.msra.mxu0 %v605
    %1839 = vmatpush.bf16.msra.mxu0 %v601
    %1840 = vmatpush.bf16.msra.mxu0 %v597
    %1841 = vmatpush.bf16.msra.mxu0 %v593
    %1842 = vmatmul.bf16.gmra.mxu0 %v1694
    %v1843 = vpop.f32.mrf.mxu0
    %v1844 = vadd.f32 0.0, %v1843
    %v1845 = vpop.f32.mrf.mxu0
    %1846 = vdwg.mxu0
    %1847 = vmatpush.bf16.msra.mxu0 %v622
    %1848 = vmatpush.bf16.msra.mxu0 %v618
    %1849 = vmatpush.bf16.msra.mxu0 %v614
    %1850 = vmatpush.bf16.msra.mxu0 %v610
    %1851 = vmatpush.bf16.msra.mxu0 %v606
    %1852 = vmatpush.bf16.msra.mxu0 %v602
    %1853 = vmatpush.bf16.msra.mxu0 %v598
    %1854 = vmatpush.bf16.msra.mxu0 %v594
    %1855 = vmatmul.bf16.gmra.mxu0 %v1694
    %v1856 = vpop.f32.mrf.mxu0
    %v1857 = vadd.f32 0.0, %v1856
    %v1858 = vpop.f32.mrf.mxu0
    %1859 = vdwg.mxu0
    %v1860 = vadd.f32 %v1804, %v1818
    %v1861 = vadd.f32 %v1805, %v1831
    %v1862 = vadd.f32 %v1806, %v1844
    %v1863 = vadd.f32 %v1807, %v1857
    %v1864 = vxor.u32 %v1860, 2147483648
    %v1865 = vmul.f32 %v1864, 1.442695
    %v1866 = vpow.pop %v1865
    %v1867 = vadd.f32 %v1866, 1.0
    %v1868 = vrcp.pop %v1867
    %v1869 = vmul.f32 %v1867, %v1868
    %v1870 = vsub.f32 1.0, %v1869
    %v1871 = vmul.f32 %v1868, %v1870
    %v1872 = vadd.f32 %v1868, %v1871
    %vm1873 = vweird.f32 %v1867
    %vm1874 = vweird.f32 %v1868
    %vm1875 = vmor %vm1873, %vm1874
    %v1876 = vsel %vm1875, %v1868, %v1872
    %v1877 = vand.u32 2147483647, %v1867
    %vm1878 = vcmp.eq.f32.partialorder %v1877, 8.507059e+37
    %v1879 = vand.u32 %v1867, 2147483648
    %v1880 = vor.u32 1.1754944e-38, %v1879
    %v1881 = vsel %vm1878, %v1880, %v1876
    %v1882 = vmul.f32 1.0, %v1881
    %v1883 = vxor.u32 %v1861, 2147483648
    %v1884 = vmul.f32 %v1883, 1.442695
    %v1885 = vpow.pop %v1884
    %v1886 = vadd.f32 %v1885, 1.0
    %v1887 = vrcp.pop %v1886
    %v1888 = vmul.f32 %v1886, %v1887
    %v1889 = vsub.f32 1.0, %v1888
    %v1890 = vmul.f32 %v1887, %v1889
    %v1891 = vadd.f32 %v1887, %v1890
    %vm1892 = vweird.f32 %v1886
    %vm1893 = vweird.f32 %v1887
    %vm1894 = vmor %vm1892, %vm1893
    %v1895 = vsel %vm1894, %v1887, %v1891
    %v1896 = vand.u32 2147483647, %v1886
    %vm1897 = vcmp.eq.f32.partialorder %v1896, 8.507059e+37
    %v1898 = vand.u32 %v1886, 2147483648
    %v1899 = vor.u32 1.1754944e-38, %v1898
    %v1900 = vsel %vm1897, %v1899, %v1895
    %v1901 = vmul.f32 1.0, %v1900
    %v1902 = vtanh.pop %v1862
    %v1903 = vxor.u32 %v1863, 2147483648
    %v1904 = vmul.f32 %v1903, 1.442695
    %v1905 = vpow.pop %v1904
    %v1906 = vadd.f32 %v1905, 1.0
    %v1907 = vrcp.pop %v1906
    %v1908 = vmul.f32 %v1906, %v1907
    %v1909 = vsub.f32 1.0, %v1908
    %v1910 = vmul.f32 %v1907, %v1909
    %v1911 = vadd.f32 %v1907, %v1910
    %vm1912 = vweird.f32 %v1906
    %vm1913 = vweird.f32 %v1907
    %vm1914 = vmor %vm1912, %vm1913
    %v1915 = vsel %vm1914, %v1907, %v1911
    %v1916 = vand.u32 2147483647, %v1906
    %vm1917 = vcmp.eq.f32.partialorder %v1916, 8.507059e+37
    %v1918 = vand.u32 %v1906, 2147483648
    %v1919 = vor.u32 1.1754944e-38, %v1918
    %v1920 = vsel %vm1917, %v1919, %v1915
    %v1921 = vmul.f32 1.0, %v1920
    %v1922 = vmul.f32 %v1901, %v1628
    %v1923 = vmul.f32 %v1882, %v1902
    %v1924 = vadd.f32 %v1922, %v1923
    %v1925 = vtanh.pop %v1924
    %v1926 = vmul.f32 %v1921, %v1925
    %v1927 = vxor.u32 %v1800, 2147483648
    %v1928 = vmul.f32 %v1927, 1.442695
    %v1929 = vpow.pop %v1928
    %v1930 = vadd.f32 %v1929, 1.0
    %v1931 = vrcp.pop %v1930
    %v1932 = vmul.f32 %v1930, %v1931
    %v1933 = vsub.f32 1.0, %v1932
    %v1934 = vmul.f32 %v1931, %v1933
    %v1935 = vadd.f32 %v1931, %v1934
    %vm1936 = vweird.f32 %v1930
    %vm1937 = vweird.f32 %v1931
    %vm1938 = vmor %vm1936, %vm1937
    %v1939 = vsel %vm1938, %v1931, %v1935
    %v1940 = vand.u32 2147483647, %v1930
    %vm1941 = vcmp.eq.f32.partialorder %v1940, 8.507059e+37
    %v1942 = vand.u32 %v1930, 2147483648
    %v1943 = vor.u32 1.1754944e-38, %v1942
    %v1944 = vsel %vm1941, %v1943, %v1939
    %v1945 = vmul.f32 1.0, %v1944
    %v1946 = vxor.u32 %v1801, 2147483648
    %v1947 = vmul.f32 %v1946, 1.442695
    %v1948 = vpow.pop %v1947
    %v1949 = vadd.f32 %v1948, 1.0
    %v1950 = vrcp.pop %v1949
    %v1951 = vmul.f32 %v1949, %v1950
    %v1952 = vsub.f32 1.0, %v1951
    %v1953 = vmul.f32 %v1950, %v1952
    %v1954 = vadd.f32 %v1950, %v1953
    %vm1955 = vweird.f32 %v1949
    %vm1956 = vweird.f32 %v1950
    %vm1957 = vmor %vm1955, %vm1956
    %v1958 = vsel %vm1957, %v1950, %v1954
    %v1959 = vand.u32 2147483647, %v1949
    %vm1960 = vcmp.eq.f32.partialorder %v1959, 8.507059e+37
    %v1961 = vand.u32 %v1949, 2147483648
    %v1962 = vor.u32 1.1754944e-38, %v1961
    %v1963 = vsel %vm1960, %v1962, %v1958
    %v1964 = vmul.f32 1.0, %v1963
    %v1965 = vtanh.pop %v1802
    %v1966 = vxor.u32 %v1803, 2147483648
    %v1967 = vmul.f32 %v1966, 1.442695
    %v1968 = vpow.pop %v1967
    %v1969 = vadd.f32 %v1968, 1.0
    %v1970 = vrcp.pop %v1969
    %v1971 = vmul.f32 %v1969, %v1970
    %v1972 = vsub.f32 1.0, %v1971
    %v1973 = vmul.f32 %v1970, %v1972
    %v1974 = vadd.f32 %v1970, %v1973
    %vm1975 = vweird.f32 %v1969
    %vm1976 = vweird.f32 %v1970
    %vm1977 = vmor %vm1975, %vm1976
    %v1978 = vsel %vm1977, %v1970, %v1974
    %v1979 = vand.u32 2147483647, %v1969
    %vm1980 = vcmp.eq.f32.partialorder %v1979, 8.507059e+37
    %v1981 = vand.u32 %v1969, 2147483648
    %v1982 = vor.u32 1.1754944e-38, %v1981
    %v1983 = vsel %vm1980, %v1982, %v1978
    %v1984 = vmul.f32 1.0, %v1983
    %v1985 = vmul.f32 %v1964, %v1691
    %v1986 = vmul.f32 %v1945, %v1965
    %v1987 = vadd.f32 %v1985, %v1986
    %v1988 = vtanh.pop %v1987
    %v1989 = vmul.f32 %v1984, %v1988
    %v1990 = vpack.c.bf16 %v1926, %v1926
    %v1991 = vpack.c.bf16 %v1989, %v1989
    %1992 = vmatpush.bf16.msra.mxu0 %v899
    %1993 = vmatpush.bf16.msra.mxu0 %v895
    %1994 = vmatpush.bf16.msra.mxu0 %v891
    %1995 = vmatpush.bf16.msra.mxu0 %v887
    %1996 = vmatpush.bf16.msra.mxu0 %v883
    %1997 = vmatpush.bf16.msra.mxu0 %v879
    %1998 = vmatpush.bf16.msra.mxu0 %v875
    %1999 = vmatpush.bf16.msra.mxu0 %v871
    %2000 = vmatmul.bf16.gmra.mxu0 %v1991
    %v2001 = vpop.f32.mrf.mxu0
    %v2002 = vadd.f32 0.0, %v2001
    %v2003 = vpop.f32.mrf.mxu0
    %2004 = vdwg.mxu0
    %2005 = vmatpush.bf16.msra.mxu0 %v900
    %2006 = vmatpush.bf16.msra.mxu0 %v896
    %2007 = vmatpush.bf16.msra.mxu0 %v892
    %2008 = vmatpush.bf16.msra.mxu0 %v888
    %2009 = vmatpush.bf16.msra.mxu0 %v884
    %2010 = vmatpush.bf16.msra.mxu0 %v880
    %2011 = vmatpush.bf16.msra.mxu0 %v876
    %2012 = vmatpush.bf16.msra.mxu0 %v872
    %2013 = vmatmul.bf16.gmra.mxu0 %v1991
    %v2014 = vpop.f32.mrf.mxu0
    %v2015 = vadd.f32 0.0, %v2014
    %v2016 = vpop.f32.mrf.mxu0
    %2017 = vdwg.mxu0
    %2018 = vmatpush.bf16.msra.mxu0 %v901
    %2019 = vmatpush.bf16.msra.mxu0 %v897
    %2020 = vmatpush.bf16.msra.mxu0 %v893
    %2021 = vmatpush.bf16.msra.mxu0 %v889
    %2022 = vmatpush.bf16.msra.mxu0 %v885
    %2023 = vmatpush.bf16.msra.mxu0 %v881
    %2024 = vmatpush.bf16.msra.mxu0 %v877
    %2025 = vmatpush.bf16.msra.mxu0 %v873
    %2026 = vmatmul.bf16.gmra.mxu0 %v1991
    %v2027 = vpop.f32.mrf.mxu0
    %v2028 = vadd.f32 0.0, %v2027
    %v2029 = vpop.f32.mrf.mxu0
    %2030 = vdwg.mxu0
    %2031 = vmatpush.bf16.msra.mxu0 %v902
    %2032 = vmatpush.bf16.msra.mxu0 %v898
    %2033 = vmatpush.bf16.msra.mxu0 %v894
    %2034 = vmatpush.bf16.msra.mxu0 %v890
    %2035 = vmatpush.bf16.msra.mxu0 %v886
    %2036 = vmatpush.bf16.msra.mxu0 %v882
    %2037 = vmatpush.bf16.msra.mxu0 %v878
    %2038 = vmatpush.bf16.msra.mxu0 %v874
    %2039 = vmatmul.bf16.gmra.mxu0 %v1991
    %v2040 = vpop.f32.mrf.mxu0
    %v2041 = vadd.f32 0.0, %v2040
    %v2042 = vpop.f32.mrf.mxu0
    %2043 = vdwg.mxu0
    %2044 = vmatpush.bf16.msra.mxu0 %v1111
    %2045 = vmatpush.bf16.msra.mxu0 %v1107
    %2046 = vmatpush.bf16.msra.mxu0 %v1103
    %2047 = vmatpush.bf16.msra.mxu0 %v1099
    %2048 = vmatpush.bf16.msra.mxu0 %v1095
    %2049 = vmatpush.bf16.msra.mxu0 %v1091
    %2050 = vmatpush.bf16.msra.mxu0 %v1087
    %2051 = vmatpush.bf16.msra.mxu0 %v1083
    %2052 = vmatmul.bf16.gmra.mxu0 %v1990
    %v2053 = vpop.f32.mrf.mxu0
    %v2054 = vadd.f32 %v2002, %v2053
    %v2055 = vpop.f32.mrf.mxu0
    %2056 = vdwg.mxu0
    %2057 = vmatpush.bf16.msra.mxu0 %v1112
    %2058 = vmatpush.bf16.msra.mxu0 %v1108
    %2059 = vmatpush.bf16.msra.mxu0 %v1104
    %2060 = vmatpush.bf16.msra.mxu0 %v1100
    %2061 = vmatpush.bf16.msra.mxu0 %v1096
    %2062 = vmatpush.bf16.msra.mxu0 %v1092
    %2063 = vmatpush.bf16.msra.mxu0 %v1088
    %2064 = vmatpush.bf16.msra.mxu0 %v1084
    %2065 = vmatmul.bf16.gmra.mxu0 %v1990
    %v2066 = vpop.f32.mrf.mxu0
    %v2067 = vadd.f32 %v2015, %v2066
    %v2068 = vpop.f32.mrf.mxu0
    %2069 = vdwg.mxu0
    %2070 = vmatpush.bf16.msra.mxu0 %v1113
    %2071 = vmatpush.bf16.msra.mxu0 %v1109
    %2072 = vmatpush.bf16.msra.mxu0 %v1105
    %2073 = vmatpush.bf16.msra.mxu0 %v1101
    %2074 = vmatpush.bf16.msra.mxu0 %v1097
    %2075 = vmatpush.bf16.msra.mxu0 %v1093
    %2076 = vmatpush.bf16.msra.mxu0 %v1089
    %2077 = vmatpush.bf16.msra.mxu0 %v1085
    %2078 = vmatmul.bf16.gmra.mxu0 %v1990
    %v2079 = vpop.f32.mrf.mxu0
    %v2080 = vadd.f32 %v2028, %v2079
    %v2081 = vpop.f32.mrf.mxu0
    %2082 = vdwg.mxu0
    %2083 = vmatpush.bf16.msra.mxu0 %v1114
    %2084 = vmatpush.bf16.msra.mxu0 %v1110
    %2085 = vmatpush.bf16.msra.mxu0 %v1106
    %2086 = vmatpush.bf16.msra.mxu0 %v1102
    %2087 = vmatpush.bf16.msra.mxu0 %v1098
    %2088 = vmatpush.bf16.msra.mxu0 %v1094
    %2089 = vmatpush.bf16.msra.mxu0 %v1090
    %2090 = vmatpush.bf16.msra.mxu0 %v1086
    %2091 = vmatmul.bf16.gmra.mxu0 %v1990
    %v2092 = vpop.f32.mrf.mxu0
    %v2093 = vadd.f32 %v2041, %v2092
    %v2094 = vpop.f32.mrf.mxu0
    %2095 = vdwg.mxu0
    %v2096 = vadd.f32 %v2054, %v1200
    %v2097 = vadd.f32 %v2067, %v1201
    %v2098 = vadd.f32 %v2080, %v1202
    %v2099 = vadd.f32 %v2093, %v1203
    %v2100 = vunpack.c.l.bf16 %v386
    %v2101 = vunpack.c.h.bf16 %v386
    %v2102 = vunpack.c.l.bf16 %v387
    %v2103 = vunpack.c.h.bf16 %v387
    %2104 = vmatpush.bf16.msra.mxu0 %v619
    %2105 = vmatpush.bf16.msra.mxu0 %v615
    %2106 = vmatpush.bf16.msra.mxu0 %v611
    %2107 = vmatpush.bf16.msra.mxu0 %v607
    %2108 = vmatpush.bf16.msra.mxu0 %v603
    %2109 = vmatpush.bf16.msra.mxu0 %v599
    %2110 = vmatpush.bf16.msra.mxu0 %v595
    %2111 = vmatpush.bf16.msra.mxu0 %v591
    %2112 = vmatmul.bf16.gmra.mxu0 %v1990
    %v2113 = vpop.f32.mrf.mxu0
    %v2114 = vadd.f32 0.0, %v2113
    %v2115 = vpop.f32.mrf.mxu0
    %2116 = vdwg.mxu0
    %2117 = vmatpush.bf16.msra.mxu0 %v620
    %2118 = vmatpush.bf16.msra.mxu0 %v616
    %2119 = vmatpush.bf16.msra.mxu0 %v612
    %2120 = vmatpush.bf16.msra.mxu0 %v608
    %2121 = vmatpush.bf16.msra.mxu0 %v604
    %2122 = vmatpush.bf16.msra.mxu0 %v600
    %2123 = vmatpush.bf16.msra.mxu0 %v596
    %2124 = vmatpush.bf16.msra.mxu0 %v592
    %2125 = vmatmul.bf16.gmra.mxu0 %v1990
    %v2126 = vpop.f32.mrf.mxu0
    %v2127 = vadd.f32 0.0, %v2126
    %v2128 = vpop.f32.mrf.mxu0
    %2129 = vdwg.mxu0
    %2130 = vmatpush.bf16.msra.mxu0 %v621
    %2131 = vmatpush.bf16.msra.mxu0 %v617
    %2132 = vmatpush.bf16.msra.mxu0 %v613
    %2133 = vmatpush.bf16.msra.mxu0 %v609
    %2134 = vmatpush.bf16.msra.mxu0 %v605
    %2135 = vmatpush.bf16.msra.mxu0 %v601
    %2136 = vmatpush.bf16.msra.mxu0 %v597
    %2137 = vmatpush.bf16.msra.mxu0 %v593
    %2138 = vmatmul.bf16.gmra.mxu0 %v1990
    %v2139 = vpop.f32.mrf.mxu0
    %v2140 = vadd.f32 0.0, %v2139
    %v2141 = vpop.f32.mrf.mxu0
    %2142 = vdwg.mxu0
    %2143 = vmatpush.bf16.msra.mxu0 %v622
    %2144 = vmatpush.bf16.msra.mxu0 %v618
    %2145 = vmatpush.bf16.msra.mxu0 %v614
    %2146 = vmatpush.bf16.msra.mxu0 %v610
    %2147 = vmatpush.bf16.msra.mxu0 %v606
    %2148 = vmatpush.bf16.msra.mxu0 %v602
    %2149 = vmatpush.bf16.msra.mxu0 %v598
    %2150 = vmatpush.bf16.msra.mxu0 %v594
    %2151 = vmatmul.bf16.gmra.mxu0 %v1990
    %v2152 = vpop.f32.mrf.mxu0
    %v2153 = vadd.f32 0.0, %v2152
    %v2154 = vpop.f32.mrf.mxu0
    %2155 = vdwg.mxu0
    %v2156 = vadd.f32 %v2100, %v2114
    %v2157 = vadd.f32 %v2101, %v2127
    %v2158 = vadd.f32 %v2102, %v2140
    %v2159 = vadd.f32 %v2103, %v2153
    %v2160 = vxor.u32 %v2156, 2147483648
    %v2161 = vmul.f32 %v2160, 1.442695
    %v2162 = vpow.pop %v2161
    %v2163 = vadd.f32 %v2162, 1.0
    %v2164 = vrcp.pop %v2163
    %v2165 = vmul.f32 %v2163, %v2164
    %v2166 = vsub.f32 1.0, %v2165
    %v2167 = vmul.f32 %v2164, %v2166
    %v2168 = vadd.f32 %v2164, %v2167
    %vm2169 = vweird.f32 %v2163
    %vm2170 = vweird.f32 %v2164
    %vm2171 = vmor %vm2169, %vm2170
    %v2172 = vsel %vm2171, %v2164, %v2168
    %v2173 = vand.u32 2147483647, %v2163
    %vm2174 = vcmp.eq.f32.partialorder %v2173, 8.507059e+37
    %v2175 = vand.u32 %v2163, 2147483648
    %v2176 = vor.u32 1.1754944e-38, %v2175
    %v2177 = vsel %vm2174, %v2176, %v2172
    %v2178 = vmul.f32 1.0, %v2177
    %v2179 = vxor.u32 %v2157, 2147483648
    %v2180 = vmul.f32 %v2179, 1.442695
    %v2181 = vpow.pop %v2180
    %v2182 = vadd.f32 %v2181, 1.0
    %v2183 = vrcp.pop %v2182
    %v2184 = vmul.f32 %v2182, %v2183
    %v2185 = vsub.f32 1.0, %v2184
    %v2186 = vmul.f32 %v2183, %v2185
    %v2187 = vadd.f32 %v2183, %v2186
    %vm2188 = vweird.f32 %v2182
    %vm2189 = vweird.f32 %v2183
    %vm2190 = vmor %vm2188, %vm2189
    %v2191 = vsel %vm2190, %v2183, %v2187
    %v2192 = vand.u32 2147483647, %v2182
    %vm2193 = vcmp.eq.f32.partialorder %v2192, 8.507059e+37
    %v2194 = vand.u32 %v2182, 2147483648
    %v2195 = vor.u32 1.1754944e-38, %v2194
    %v2196 = vsel %vm2193, %v2195, %v2191
    %v2197 = vmul.f32 1.0, %v2196
    %v2198 = vtanh.pop %v2158
    %v2199 = vxor.u32 %v2159, 2147483648
    %v2200 = vmul.f32 %v2199, 1.442695
    %v2201 = vpow.pop %v2200
    %v2202 = vadd.f32 %v2201, 1.0
    %v2203 = vrcp.pop %v2202
    %v2204 = vmul.f32 %v2202, %v2203
    %v2205 = vsub.f32 1.0, %v2204
    %v2206 = vmul.f32 %v2203, %v2205
    %v2207 = vadd.f32 %v2203, %v2206
    %vm2208 = vweird.f32 %v2202
    %vm2209 = vweird.f32 %v2203
    %vm2210 = vmor %vm2208, %vm2209
    %v2211 = vsel %vm2210, %v2203, %v2207
    %v2212 = vand.u32 2147483647, %v2202
    %vm2213 = vcmp.eq.f32.partialorder %v2212, 8.507059e+37
    %v2214 = vand.u32 %v2202, 2147483648
    %v2215 = vor.u32 1.1754944e-38, %v2214
    %v2216 = vsel %vm2213, %v2215, %v2211
    %v2217 = vmul.f32 1.0, %v2216
    %v2218 = vmul.f32 %v2197, %v1924
    %v2219 = vmul.f32 %v2178, %v2198
    %v2220 = vadd.f32 %v2218, %v2219
    %v2221 = vtanh.pop %v2220
    %v2222 = vmul.f32 %v2217, %v2221
    %v2223 = vxor.u32 %v2096, 2147483648
    %v2224 = vmul.f32 %v2223, 1.442695
    %v2225 = vpow.pop %v2224
    %v2226 = vadd.f32 %v2225, 1.0
    %v2227 = vrcp.pop %v2226
    %v2228 = vmul.f32 %v2226, %v2227
    %v2229 = vsub.f32 1.0, %v2228
    %v2230 = vmul.f32 %v2227, %v2229
    %v2231 = vadd.f32 %v2227, %v2230
    %vm2232 = vweird.f32 %v2226
    %vm2233 = vweird.f32 %v2227
    %vm2234 = vmor %vm2232, %vm2233
    %v2235 = vsel %vm2234, %v2227, %v2231
    %v2236 = vand.u32 2147483647, %v2226
    %vm2237 = vcmp.eq.f32.partialorder %v2236, 8.507059e+37
    %v2238 = vand.u32 %v2226, 2147483648
    %v2239 = vor.u32 1.1754944e-38, %v2238
    %v2240 = vsel %vm2237, %v2239, %v2235
    %v2241 = vmul.f32 1.0, %v2240
    %v2242 = vxor.u32 %v2097, 2147483648
    %v2243 = vmul.f32 %v2242, 1.442695
    %v2244 = vpow.pop %v2243
    %v2245 = vadd.f32 %v2244, 1.0
    %v2246 = vrcp.pop %v2245
    %v2247 = vmul.f32 %v2245, %v2246
    %v2248 = vsub.f32 1.0, %v2247
    %v2249 = vmul.f32 %v2246, %v2248
    %v2250 = vadd.f32 %v2246, %v2249
    %vm2251 = vweird.f32 %v2245
    %vm2252 = vweird.f32 %v2246
    %vm2253 = vmor %vm2251, %vm2252
    %v2254 = vsel %vm2253, %v2246, %v2250
    %v2255 = vand.u32 2147483647, %v2245
    %vm2256 = vcmp.eq.f32.partialorder %v2255, 8.507059e+37
    %v2257 = vand.u32 %v2245, 2147483648
    %v2258 = vor.u32 1.1754944e-38, %v2257
    %v2259 = vsel %vm2256, %v2258, %v2254
    %v2260 = vmul.f32 1.0, %v2259
    %v2261 = vtanh.pop %v2098
    %v2262 = vxor.u32 %v2099, 2147483648
    %v2263 = vmul.f32 %v2262, 1.442695
    %v2264 = vpow.pop %v2263
    %v2265 = vadd.f32 %v2264, 1.0
    %v2266 = vrcp.pop %v2265
    %v2267 = vmul.f32 %v2265, %v2266
    %v2268 = vsub.f32 1.0, %v2267
    %v2269 = vmul.f32 %v2266, %v2268
    %v2270 = vadd.f32 %v2266, %v2269
    %vm2271 = vweird.f32 %v2265
    %vm2272 = vweird.f32 %v2266
    %vm2273 = vmor %vm2271, %vm2272
    %v2274 = vsel %vm2273, %v2266, %v2270
    %v2275 = vand.u32 2147483647, %v2265
    %vm2276 = vcmp.eq.f32.partialorder %v2275, 8.507059e+37
    %v2277 = vand.u32 %v2265, 2147483648
    %v2278 = vor.u32 1.1754944e-38, %v2277
    %v2279 = vsel %vm2276, %v2278, %v2274
    %v2280 = vmul.f32 1.0, %v2279
    %v2281 = vmul.f32 %v2260, %v1987
    %v2282 = vmul.f32 %v2241, %v2261
    %v2283 = vadd.f32 %v2281, %v2282
    %v2284 = vtanh.pop %v2283
    %v2285 = vmul.f32 %v2280, %v2284
    %v2286 = vpack.c.bf16 %v2222, %v2222
    %v2287 = vpack.c.bf16 %v2285, %v2285
    %2288 = vmatpush.bf16.msra.mxu0 %v899
    %2289 = vmatpush.bf16.msra.mxu0 %v895
    %2290 = vmatpush.bf16.msra.mxu0 %v891
    %2291 = vmatpush.bf16.msra.mxu0 %v887
    %2292 = vmatpush.bf16.msra.mxu0 %v883
    %2293 = vmatpush.bf16.msra.mxu0 %v879
    %2294 = vmatpush.bf16.msra.mxu0 %v875
    %2295 = vmatpush.bf16.msra.mxu0 %v871
    %2296 = vmatmul.bf16.gmra.mxu0 %v2287
    %v2297 = vpop.f32.mrf.mxu0
    %v2298 = vadd.f32 0.0, %v2297
    %v2299 = vpop.f32.mrf.mxu0
    %2300 = vdwg.mxu0
    %2301 = vmatpush.bf16.msra.mxu0 %v900
    %2302 = vmatpush.bf16.msra.mxu0 %v896
    %2303 = vmatpush.bf16.msra.mxu0 %v892
    %2304 = vmatpush.bf16.msra.mxu0 %v888
    %2305 = vmatpush.bf16.msra.mxu0 %v884
    %2306 = vmatpush.bf16.msra.mxu0 %v880
    %2307 = vmatpush.bf16.msra.mxu0 %v876
    %2308 = vmatpush.bf16.msra.mxu0 %v872
    %2309 = vmatmul.bf16.gmra.mxu0 %v2287
    %v2310 = vpop.f32.mrf.mxu0
    %v2311 = vadd.f32 0.0, %v2310
    %v2312 = vpop.f32.mrf.mxu0
    %2313 = vdwg.mxu0
    %2314 = vmatpush.bf16.msra.mxu0 %v901
    %2315 = vmatpush.bf16.msra.mxu0 %v897
    %2316 = vmatpush.bf16.msra.mxu0 %v893
    %2317 = vmatpush.bf16.msra.mxu0 %v889
    %2318 = vmatpush.bf16.msra.mxu0 %v885
    %2319 = vmatpush.bf16.msra.mxu0 %v881
    %2320 = vmatpush.bf16.msra.mxu0 %v877
    %2321 = vmatpush.bf16.msra.mxu0 %v873
    %2322 = vmatmul.bf16.gmra.mxu0 %v2287
    %v2323 = vpop.f32.mrf.mxu0
    %v2324 = vadd.f32 0.0, %v2323
    %v2325 = vpop.f32.mrf.mxu0
    %2326 = vdwg.mxu0
    %2327 = vmatpush.bf16.msra.mxu0 %v902
    %2328 = vmatpush.bf16.msra.mxu0 %v898
    %2329 = vmatpush.bf16.msra.mxu0 %v894
    %2330 = vmatpush.bf16.msra.mxu0 %v890
    %2331 = vmatpush.bf16.msra.mxu0 %v886
    %2332 = vmatpush.bf16.msra.mxu0 %v882
    %2333 = vmatpush.bf16.msra.mxu0 %v878
    %2334 = vmatpush.bf16.msra.mxu0 %v874
    %2335 = vmatmul.bf16.gmra.mxu0 %v2287
    %v2336 = vpop.f32.mrf.mxu0
    %v2337 = vadd.f32 0.0, %v2336
    %v2338 = vpop.f32.mrf.mxu0
    %2339 = vdwg.mxu0
    %2340 = vmatpush.bf16.msra.mxu0 %v1111
    %2341 = vmatpush.bf16.msra.mxu0 %v1107
    %2342 = vmatpush.bf16.msra.mxu0 %v1103
    %2343 = vmatpush.bf16.msra.mxu0 %v1099
    %2344 = vmatpush.bf16.msra.mxu0 %v1095
    %2345 = vmatpush.bf16.msra.mxu0 %v1091
    %2346 = vmatpush.bf16.msra.mxu0 %v1087
    %2347 = vmatpush.bf16.msra.mxu0 %v1083
    %2348 = vmatmul.bf16.gmra.mxu0 %v2286
    %v2349 = vpop.f32.mrf.mxu0
    %v2350 = vadd.f32 %v2298, %v2349
    %v2351 = vpop.f32.mrf.mxu0
    %2352 = vdwg.mxu0
    %2353 = vmatpush.bf16.msra.mxu0 %v1112
    %2354 = vmatpush.bf16.msra.mxu0 %v1108
    %2355 = vmatpush.bf16.msra.mxu0 %v1104
    %2356 = vmatpush.bf16.msra.mxu0 %v1100
    %2357 = vmatpush.bf16.msra.mxu0 %v1096
    %2358 = vmatpush.bf16.msra.mxu0 %v1092
    %2359 = vmatpush.bf16.msra.mxu0 %v1088
    %2360 = vmatpush.bf16.msra.mxu0 %v1084
    %2361 = vmatmul.bf16.gmra.mxu0 %v2286
    %v2362 = vpop.f32.mrf.mxu0
    %v2363 = vadd.f32 %v2311, %v2362
    %v2364 = vpop.f32.mrf.mxu0
    %2365 = vdwg.mxu0
    %2366 = vmatpush.bf16.msra.mxu0 %v1113
    %2367 = vmatpush.bf16.msra.mxu0 %v1109
    %2368 = vmatpush.bf16.msra.mxu0 %v1105
    %2369 = vmatpush.bf16.msra.mxu0 %v1101
    %2370 = vmatpush.bf16.msra.mxu0 %v1097
    %2371 = vmatpush.bf16.msra.mxu0 %v1093
    %2372 = vmatpush.bf16.msra.mxu0 %v1089
    %2373 = vmatpush.bf16.msra.mxu0 %v1085
    %2374 = vmatmul.bf16.gmra.mxu0 %v2286
    %v2375 = vpop.f32.mrf.mxu0
    %v2376 = vadd.f32 %v2324, %v2375
    %v2377 = vpop.f32.mrf.mxu0
    %2378 = vdwg.mxu0
    %2379 = vmatpush.bf16.msra.mxu0 %v1114
    %2380 = vmatpush.bf16.msra.mxu0 %v1110
    %2381 = vmatpush.bf16.msra.mxu0 %v1106
    %2382 = vmatpush.bf16.msra.mxu0 %v1102
    %2383 = vmatpush.bf16.msra.mxu0 %v1098
    %2384 = vmatpush.bf16.msra.mxu0 %v1094
    %2385 = vmatpush.bf16.msra.mxu0 %v1090
    %2386 = vmatpush.bf16.msra.mxu0 %v1086
    %2387 = vmatmul.bf16.gmra.mxu0 %v2286
    %v2388 = vpop.f32.mrf.mxu0
    %v2389 = vadd.f32 %v2337, %v2388
    %v2390 = vpop.f32.mrf.mxu0
    %2391 = vdwg.mxu0
    %v2392 = vadd.f32 %v2350, %v1200
    %v2393 = vadd.f32 %v2363, %v1201
    %v2394 = vadd.f32 %v2376, %v1202
    %v2395 = vadd.f32 %v2389, %v1203
    %v2396 = vunpack.c.l.bf16 %v388
    %v2397 = vunpack.c.h.bf16 %v388
    %v2398 = vunpack.c.l.bf16 %v389
    %v2399 = vunpack.c.h.bf16 %v389
    %2400 = vmatpush.bf16.msra.mxu0 %v619
    %2401 = vmatpush.bf16.msra.mxu0 %v615
    %2402 = vmatpush.bf16.msra.mxu0 %v611
    %2403 = vmatpush.bf16.msra.mxu0 %v607
    %2404 = vmatpush.bf16.msra.mxu0 %v603
    %2405 = vmatpush.bf16.msra.mxu0 %v599
    %2406 = vmatpush.bf16.msra.mxu0 %v595
    %2407 = vmatpush.bf16.msra.mxu0 %v591
    %2408 = vmatmul.bf16.gmra.mxu0 %v2286
    %v2409 = vpop.f32.mrf.mxu0
    %v2410 = vadd.f32 0.0, %v2409
    %v2411 = vpop.f32.mrf.mxu0
    %2412 = vdwg.mxu0
    %2413 = vmatpush.bf16.msra.mxu0 %v620
    %2414 = vmatpush.bf16.msra.mxu0 %v616
    %2415 = vmatpush.bf16.msra.mxu0 %v612
    %2416 = vmatpush.bf16.msra.mxu0 %v608
    %2417 = vmatpush.bf16.msra.mxu0 %v604
    %2418 = vmatpush.bf16.msra.mxu0 %v600
    %2419 = vmatpush.bf16.msra.mxu0 %v596
    %2420 = vmatpush.bf16.msra.mxu0 %v592
    %2421 = vmatmul.bf16.gmra.mxu0 %v2286
    %v2422 = vpop.f32.mrf.mxu0
    %v2423 = vadd.f32 0.0, %v2422
    %v2424 = vpop.f32.mrf.mxu0
    %2425 = vdwg.mxu0
    %2426 = vmatpush.bf16.msra.mxu0 %v621
    %2427 = vmatpush.bf16.msra.mxu0 %v617
    %2428 = vmatpush.bf16.msra.mxu0 %v613
    %2429 = vmatpush.bf16.msra.mxu0 %v609
    %2430 = vmatpush.bf16.msra.mxu0 %v605
    %2431 = vmatpush.bf16.msra.mxu0 %v601
    %2432 = vmatpush.bf16.msra.mxu0 %v597
    %2433 = vmatpush.bf16.msra.mxu0 %v593
    %2434 = vmatmul.bf16.gmra.mxu0 %v2286
    %v2435 = vpop.f32.mrf.mxu0
    %v2436 = vadd.f32 0.0, %v2435
    %v2437 = vpop.f32.mrf.mxu0
    %2438 = vdwg.mxu0
    %2439 = vmatpush.bf16.msra.mxu0 %v622
    %2440 = vmatpush.bf16.msra.mxu0 %v618
    %2441 = vmatpush.bf16.msra.mxu0 %v614
    %2442 = vmatpush.bf16.msra.mxu0 %v610
    %2443 = vmatpush.bf16.msra.mxu0 %v606
    %2444 = vmatpush.bf16.msra.mxu0 %v602
    %2445 = vmatpush.bf16.msra.mxu0 %v598
    %2446 = vmatpush.bf16.msra.mxu0 %v594
    %2447 = vmatmul.bf16.gmra.mxu0 %v2286
    %v2448 = vpop.f32.mrf.mxu0
    %v2449 = vadd.f32 0.0, %v2448
    %v2450 = vpop.f32.mrf.mxu0
    %2451 = vdwg.mxu0
    %v2452 = vadd.f32 %v2396, %v2410
    %v2453 = vadd.f32 %v2397, %v2423
    %v2454 = vadd.f32 %v2398, %v2436
    %v2455 = vadd.f32 %v2399, %v2449
    %v2456 = vxor.u32 %v2452, 2147483648
    %v2457 = vmul.f32 %v2456, 1.442695
    %v2458 = vpow.pop %v2457
    %v2459 = vadd.f32 %v2458, 1.0
    %v2460 = vrcp.pop %v2459
    %v2461 = vmul.f32 %v2459, %v2460
    %v2462 = vsub.f32 1.0, %v2461
    %v2463 = vmul.f32 %v2460, %v2462
    %v2464 = vadd.f32 %v2460, %v2463
    %vm2465 = vweird.f32 %v2459
    %vm2466 = vweird.f32 %v2460
    %vm2467 = vmor %vm2465, %vm2466
    %v2468 = vsel %vm2467, %v2460, %v2464
    %v2469 = vand.u32 2147483647, %v2459
    %vm2470 = vcmp.eq.f32.partialorder %v2469, 8.507059e+37
    %v2471 = vand.u32 %v2459, 2147483648
    %v2472 = vor.u32 1.1754944e-38, %v2471
    %v2473 = vsel %vm2470, %v2472, %v2468
    %v2474 = vmul.f32 1.0, %v2473
    %v2475 = vxor.u32 %v2453, 2147483648
    %v2476 = vmul.f32 %v2475, 1.442695
    %v2477 = vpow.pop %v2476
    %v2478 = vadd.f32 %v2477, 1.0
    %v2479 = vrcp.pop %v2478
    %v2480 = vmul.f32 %v2478, %v2479
    %v2481 = vsub.f32 1.0, %v2480
    %v2482 = vmul.f32 %v2479, %v2481
    %v2483 = vadd.f32 %v2479, %v2482
    %vm2484 = vweird.f32 %v2478
    %vm2485 = vweird.f32 %v2479
    %vm2486 = vmor %vm2484, %vm2485
    %v2487 = vsel %vm2486, %v2479, %v2483
    %v2488 = vand.u32 2147483647, %v2478
    %vm2489 = vcmp.eq.f32.partialorder %v2488, 8.507059e+37
    %v2490 = vand.u32 %v2478, 2147483648
    %v2491 = vor.u32 1.1754944e-38, %v2490
    %v2492 = vsel %vm2489, %v2491, %v2487
    %v2493 = vmul.f32 1.0, %v2492
    %v2494 = vtanh.pop %v2454
    %v2495 = vxor.u32 %v2455, 2147483648
    %v2496 = vmul.f32 %v2495, 1.442695
    %v2497 = vpow.pop %v2496
    %v2498 = vadd.f32 %v2497, 1.0
    %v2499 = vrcp.pop %v2498
    %v2500 = vmul.f32 %v2498, %v2499
    %v2501 = vsub.f32 1.0, %v2500
    %v2502 = vmul.f32 %v2499, %v2501
    %v2503 = vadd.f32 %v2499, %v2502
    %vm2504 = vweird.f32 %v2498
    %vm2505 = vweird.f32 %v2499
    %vm2506 = vmor %vm2504, %vm2505
    %v2507 = vsel %vm2506, %v2499, %v2503
    %v2508 = vand.u32 2147483647, %v2498
    %vm2509 = vcmp.eq.f32.partialorder %v2508, 8.507059e+37
    %v2510 = vand.u32 %v2498, 2147483648
    %v2511 = vor.u32 1.1754944e-38, %v2510
    %v2512 = vsel %vm2509, %v2511, %v2507
    %v2513 = vmul.f32 1.0, %v2512
    %v2514 = vmul.f32 %v2493, %v2220
    %v2515 = vmul.f32 %v2474, %v2494
    %v2516 = vadd.f32 %v2514, %v2515
    %v2517 = vtanh.pop %v2516
    %v2518 = vmul.f32 %v2513, %v2517
    %v2519 = vxor.u32 %v2392, 2147483648
    %v2520 = vmul.f32 %v2519, 1.442695
    %v2521 = vpow.pop %v2520
    %v2522 = vadd.f32 %v2521, 1.0
    %v2523 = vrcp.pop %v2522
    %v2524 = vmul.f32 %v2522, %v2523
    %v2525 = vsub.f32 1.0, %v2524
    %v2526 = vmul.f32 %v2523, %v2525
    %v2527 = vadd.f32 %v2523, %v2526
    %vm2528 = vweird.f32 %v2522
    %vm2529 = vweird.f32 %v2523
    %vm2530 = vmor %vm2528, %vm2529
    %v2531 = vsel %vm2530, %v2523, %v2527
    %v2532 = vand.u32 2147483647, %v2522
    %vm2533 = vcmp.eq.f32.partialorder %v2532, 8.507059e+37
    %v2534 = vand.u32 %v2522, 2147483648
    %v2535 = vor.u32 1.1754944e-38, %v2534
    %v2536 = vsel %vm2533, %v2535, %v2531
    %v2537 = vmul.f32 1.0, %v2536
    %v2538 = vxor.u32 %v2393, 2147483648
    %v2539 = vmul.f32 %v2538, 1.442695
    %v2540 = vpow.pop %v2539
    %v2541 = vadd.f32 %v2540, 1.0
    %v2542 = vrcp.pop %v2541
    %v2543 = vmul.f32 %v2541, %v2542
    %v2544 = vsub.f32 1.0, %v2543
    %v2545 = vmul.f32 %v2542, %v2544
    %v2546 = vadd.f32 %v2542, %v2545
    %vm2547 = vweird.f32 %v2541
    %vm2548 = vweird.f32 %v2542
    %vm2549 = vmor %vm2547, %vm2548
    %v2550 = vsel %vm2549, %v2542, %v2546
    %v2551 = vand.u32 2147483647, %v2541
    %vm2552 = vcmp.eq.f32.partialorder %v2551, 8.507059e+37
    %v2553 = vand.u32 %v2541, 2147483648
    %v2554 = vor.u32 1.1754944e-38, %v2553
    %v2555 = vsel %vm2552, %v2554, %v2550
    %v2556 = vmul.f32 1.0, %v2555
    %v2557 = vtanh.pop %v2394
    %v2558 = vxor.u32 %v2395, 2147483648
    %v2559 = vmul.f32 %v2558, 1.442695
    %v2560 = vpow.pop %v2559
    %v2561 = vadd.f32 %v2560, 1.0
    %v2562 = vrcp.pop %v2561
    %v2563 = vmul.f32 %v2561, %v2562
    %v2564 = vsub.f32 1.0, %v2563
    %v2565 = vmul.f32 %v2562, %v2564
    %v2566 = vadd.f32 %v2562, %v2565
    %vm2567 = vweird.f32 %v2561
    %vm2568 = vweird.f32 %v2562
    %vm2569 = vmor %vm2567, %vm2568
    %v2570 = vsel %vm2569, %v2562, %v2566
    %v2571 = vand.u32 2147483647, %v2561
    %vm2572 = vcmp.eq.f32.partialorder %v2571, 8.507059e+37
    %v2573 = vand.u32 %v2561, 2147483648
    %v2574 = vor.u32 1.1754944e-38, %v2573
    %v2575 = vsel %vm2572, %v2574, %v2570
    %v2576 = vmul.f32 1.0, %v2575
    %v2577 = vmul.f32 %v2556, %v2283
    %v2578 = vmul.f32 %v2537, %v2557
    %v2579 = vadd.f32 %v2577, %v2578
    %v2580 = vtanh.pop %v2579
    %v2581 = vmul.f32 %v2576, %v2580
    %v2582 = vpack.c.bf16 %v2518, %v2518
    %v2583 = vpack.c.bf16 %v2581, %v2581
    %2584 = vmatpush.bf16.msra.mxu0 %v899
    %2585 = vmatpush.bf16.msra.mxu0 %v895
    %2586 = vmatpush.bf16.msra.mxu0 %v891
    %2587 = vmatpush.bf16.msra.mxu0 %v887
    %2588 = vmatpush.bf16.msra.mxu0 %v883
    %2589 = vmatpush.bf16.msra.mxu0 %v879
    %2590 = vmatpush.bf16.msra.mxu0 %v875
    %2591 = vmatpush.bf16.msra.mxu0 %v871
    %2592 = vmatmul.bf16.gmra.mxu0 %v2583
    %v2593 = vpop.f32.mrf.mxu0
    %v2594 = vadd.f32 0.0, %v2593
    %v2595 = vpop.f32.mrf.mxu0
    %2596 = vdwg.mxu0
    %2597 = vmatpush.bf16.msra.mxu0 %v900
    %2598 = vmatpush.bf16.msra.mxu0 %v896
    %2599 = vmatpush.bf16.msra.mxu0 %v892
    %2600 = vmatpush.bf16.msra.mxu0 %v888
    %2601 = vmatpush.bf16.msra.mxu0 %v884
    %2602 = vmatpush.bf16.msra.mxu0 %v880
    %2603 = vmatpush.bf16.msra.mxu0 %v876
    %2604 = vmatpush.bf16.msra.mxu0 %v872
    %2605 = vmatmul.bf16.gmra.mxu0 %v2583
    %v2606 = vpop.f32.mrf.mxu0
    %v2607 = vadd.f32 0.0, %v2606
    %v2608 = vpop.f32.mrf.mxu0
    %2609 = vdwg.mxu0
    %2610 = vmatpush.bf16.msra.mxu0 %v901
    %2611 = vmatpush.bf16.msra.mxu0 %v897
    %2612 = vmatpush.bf16.msra.mxu0 %v893
    %2613 = vmatpush.bf16.msra.mxu0 %v889
    %2614 = vmatpush.bf16.msra.mxu0 %v885
    %2615 = vmatpush.bf16.msra.mxu0 %v881
    %2616 = vmatpush.bf16.msra.mxu0 %v877
    %2617 = vmatpush.bf16.msra.mxu0 %v873
    %2618 = vmatmul.bf16.gmra.mxu0 %v2583
    %v2619 = vpop.f32.mrf.mxu0
    %v2620 = vadd.f32 0.0, %v2619
    %v2621 = vpop.f32.mrf.mxu0
    %2622 = vdwg.mxu0
    %2623 = vmatpush.bf16.msra.mxu0 %v902
    %2624 = vmatpush.bf16.msra.mxu0 %v898
    %2625 = vmatpush.bf16.msra.mxu0 %v894
    %2626 = vmatpush.bf16.msra.mxu0 %v890
    %2627 = vmatpush.bf16.msra.mxu0 %v886
    %2628 = vmatpush.bf16.msra.mxu0 %v882
    %2629 = vmatpush.bf16.msra.mxu0 %v878
    %2630 = vmatpush.bf16.msra.mxu0 %v874
    %2631 = vmatmul.bf16.gmra.mxu0 %v2583
    %v2632 = vpop.f32.mrf.mxu0
    %v2633 = vadd.f32 0.0, %v2632
    %v2634 = vpop.f32.mrf.mxu0
    %2635 = vdwg.mxu0
    %2636 = vmatpush.bf16.msra.mxu0 %v1111
    %2637 = vmatpush.bf16.msra.mxu0 %v1107
    %2638 = vmatpush.bf16.msra.mxu0 %v1103
    %2639 = vmatpush.bf16.msra.mxu0 %v1099
    %2640 = vmatpush.bf16.msra.mxu0 %v1095
    %2641 = vmatpush.bf16.msra.mxu0 %v1091
    %2642 = vmatpush.bf16.msra.mxu0 %v1087
    %2643 = vmatpush.bf16.msra.mxu0 %v1083
    %2644 = vmatmul.bf16.gmra.mxu0 %v2582
    %v2645 = vpop.f32.mrf.mxu0
    %v2646 = vadd.f32 %v2594, %v2645
    %v2647 = vpop.f32.mrf.mxu0
    %2648 = vdwg.mxu0
    %2649 = vmatpush.bf16.msra.mxu0 %v1112
    %2650 = vmatpush.bf16.msra.mxu0 %v1108
    %2651 = vmatpush.bf16.msra.mxu0 %v1104
    %2652 = vmatpush.bf16.msra.mxu0 %v1100
    %2653 = vmatpush.bf16.msra.mxu0 %v1096
    %2654 = vmatpush.bf16.msra.mxu0 %v1092
    %2655 = vmatpush.bf16.msra.mxu0 %v1088
    %2656 = vmatpush.bf16.msra.mxu0 %v1084
    %2657 = vmatmul.bf16.gmra.mxu0 %v2582
    %v2658 = vpop.f32.mrf.mxu0
    %v2659 = vadd.f32 %v2607, %v2658
    %v2660 = vpop.f32.mrf.mxu0
    %2661 = vdwg.mxu0
    %2662 = vmatpush.bf16.msra.mxu0 %v1113
    %2663 = vmatpush.bf16.msra.mxu0 %v1109
    %2664 = vmatpush.bf16.msra.mxu0 %v1105
    %2665 = vmatpush.bf16.msra.mxu0 %v1101
    %2666 = vmatpush.bf16.msra.mxu0 %v1097
    %2667 = vmatpush.bf16.msra.mxu0 %v1093
    %2668 = vmatpush.bf16.msra.mxu0 %v1089
    %2669 = vmatpush.bf16.msra.mxu0 %v1085
    %2670 = vmatmul.bf16.gmra.mxu0 %v2582
    %v2671 = vpop.f32.mrf.mxu0
    %v2672 = vadd.f32 %v2620, %v2671
    %v2673 = vpop.f32.mrf.mxu0
    %2674 = vdwg.mxu0
    %2675 = vmatpush.bf16.msra.mxu0 %v1114
    %2676 = vmatpush.bf16.msra.mxu0 %v1110
    %2677 = vmatpush.bf16.msra.mxu0 %v1106
    %2678 = vmatpush.bf16.msra.mxu0 %v1102
    %2679 = vmatpush.bf16.msra.mxu0 %v1098
    %2680 = vmatpush.bf16.msra.mxu0 %v1094
    %2681 = vmatpush.bf16.msra.mxu0 %v1090
    %2682 = vmatpush.bf16.msra.mxu0 %v1086
    %2683 = vmatmul.bf16.gmra.mxu0 %v2582
    %v2684 = vpop.f32.mrf.mxu0
    %v2685 = vadd.f32 %v2633, %v2684
    %v2686 = vpop.f32.mrf.mxu0
    %2687 = vdwg.mxu0
    %v2688 = vadd.f32 %v2646, %v1200
    %v2689 = vadd.f32 %v2659, %v1201
    %v2690 = vadd.f32 %v2672, %v1202
    %v2691 = vadd.f32 %v2685, %v1203
    %v2692 = vunpack.c.l.bf16 %v390
    %v2693 = vunpack.c.h.bf16 %v390
    %v2694 = vunpack.c.l.bf16 %v391
    %v2695 = vunpack.c.h.bf16 %v391
    %2696 = vmatpush.bf16.msra.mxu0 %v619
    %2697 = vmatpush.bf16.msra.mxu0 %v615
    %2698 = vmatpush.bf16.msra.mxu0 %v611
    %2699 = vmatpush.bf16.msra.mxu0 %v607
    %2700 = vmatpush.bf16.msra.mxu0 %v603
    %2701 = vmatpush.bf16.msra.mxu0 %v599
    %2702 = vmatpush.bf16.msra.mxu0 %v595
    %2703 = vmatpush.bf16.msra.mxu0 %v591
    %2704 = vmatmul.bf16.gmra.mxu0 %v2582
    %v2705 = vpop.f32.mrf.mxu0
    %v2706 = vadd.f32 0.0, %v2705
    %v2707 = vpop.f32.mrf.mxu0
    %2708 = vdwg.mxu0
    %2709 = vmatpush.bf16.msra.mxu0 %v620
    %2710 = vmatpush.bf16.msra.mxu0 %v616
    %2711 = vmatpush.bf16.msra.mxu0 %v612
    %2712 = vmatpush.bf16.msra.mxu0 %v608
    %2713 = vmatpush.bf16.msra.mxu0 %v604
    %2714 = vmatpush.bf16.msra.mxu0 %v600
    %2715 = vmatpush.bf16.msra.mxu0 %v596
    %2716 = vmatpush.bf16.msra.mxu0 %v592
    %2717 = vmatmul.bf16.gmra.mxu0 %v2582
    %v2718 = vpop.f32.mrf.mxu0
    %v2719 = vadd.f32 0.0, %v2718
    %v2720 = vpop.f32.mrf.mxu0
    %2721 = vdwg.mxu0
    %2722 = vmatpush.bf16.msra.mxu0 %v621
    %2723 = vmatpush.bf16.msra.mxu0 %v617
    %2724 = vmatpush.bf16.msra.mxu0 %v613
    %2725 = vmatpush.bf16.msra.mxu0 %v609
    %2726 = vmatpush.bf16.msra.mxu0 %v605
    %2727 = vmatpush.bf16.msra.mxu0 %v601
    %2728 = vmatpush.bf16.msra.mxu0 %v597
    %2729 = vmatpush.bf16.msra.mxu0 %v593
    %2730 = vmatmul.bf16.gmra.mxu0 %v2582
    %v2731 = vpop.f32.mrf.mxu0
    %v2732 = vadd.f32 0.0, %v2731
    %v2733 = vpop.f32.mrf.mxu0
    %2734 = vdwg.mxu0
    %2735 = vmatpush.bf16.msra.mxu0 %v622
    %2736 = vmatpush.bf16.msra.mxu0 %v618
    %2737 = vmatpush.bf16.msra.mxu0 %v614
    %2738 = vmatpush.bf16.msra.mxu0 %v610
    %2739 = vmatpush.bf16.msra.mxu0 %v606
    %2740 = vmatpush.bf16.msra.mxu0 %v602
    %2741 = vmatpush.bf16.msra.mxu0 %v598
    %2742 = vmatpush.bf16.msra.mxu0 %v594
    %2743 = vmatmul.bf16.gmra.mxu0 %v2582
    %v2744 = vpop.f32.mrf.mxu0
    %v2745 = vadd.f32 0.0, %v2744
    %v2746 = vpop.f32.mrf.mxu0
    %2747 = vdwg.mxu0
    %v2748 = vadd.f32 %v2692, %v2706
    %v2749 = vadd.f32 %v2693, %v2719
    %v2750 = vadd.f32 %v2694, %v2732
    %v2751 = vadd.f32 %v2695, %v2745
    %v2752 = vxor.u32 %v2748, 2147483648
    %v2753 = vmul.f32 %v2752, 1.442695
    %v2754 = vpow.pop %v2753
    %v2755 = vadd.f32 %v2754, 1.0
    %v2756 = vrcp.pop %v2755
    %v2757 = vmul.f32 %v2755, %v2756
    %v2758 = vsub.f32 1.0, %v2757
    %v2759 = vmul.f32 %v2756, %v2758
    %v2760 = vadd.f32 %v2756, %v2759
    %vm2761 = vweird.f32 %v2755
    %vm2762 = vweird.f32 %v2756
    %vm2763 = vmor %vm2761, %vm2762
    %v2764 = vsel %vm2763, %v2756, %v2760
    %v2765 = vand.u32 2147483647, %v2755
    %vm2766 = vcmp.eq.f32.partialorder %v2765, 8.507059e+37
    %v2767 = vand.u32 %v2755, 2147483648
    %v2768 = vor.u32 1.1754944e-38, %v2767
    %v2769 = vsel %vm2766, %v2768, %v2764
    %v2770 = vmul.f32 1.0, %v2769
    %v2771 = vxor.u32 %v2749, 2147483648
    %v2772 = vmul.f32 %v2771, 1.442695
    %v2773 = vpow.pop %v2772
    %v2774 = vadd.f32 %v2773, 1.0
    %v2775 = vrcp.pop %v2774
    %v2776 = vmul.f32 %v2774, %v2775
    %v2777 = vsub.f32 1.0, %v2776
    %v2778 = vmul.f32 %v2775, %v2777
    %v2779 = vadd.f32 %v2775, %v2778
    %vm2780 = vweird.f32 %v2774
    %vm2781 = vweird.f32 %v2775
    %vm2782 = vmor %vm2780, %vm2781
    %v2783 = vsel %vm2782, %v2775, %v2779
    %v2784 = vand.u32 2147483647, %v2774
    %vm2785 = vcmp.eq.f32.partialorder %v2784, 8.507059e+37
    %v2786 = vand.u32 %v2774, 2147483648
    %v2787 = vor.u32 1.1754944e-38, %v2786
    %v2788 = vsel %vm2785, %v2787, %v2783
    %v2789 = vmul.f32 1.0, %v2788
    %v2790 = vtanh.pop %v2750
    %v2791 = vxor.u32 %v2751, 2147483648
    %v2792 = vmul.f32 %v2791, 1.442695
    %v2793 = vpow.pop %v2792
    %v2794 = vadd.f32 %v2793, 1.0
    %v2795 = vrcp.pop %v2794
    %v2796 = vmul.f32 %v2794, %v2795
    %v2797 = vsub.f32 1.0, %v2796
    %v2798 = vmul.f32 %v2795, %v2797
    %v2799 = vadd.f32 %v2795, %v2798
    %vm2800 = vweird.f32 %v2794
    %vm2801 = vweird.f32 %v2795
    %vm2802 = vmor %vm2800, %vm2801
    %v2803 = vsel %vm2802, %v2795, %v2799
    %v2804 = vand.u32 2147483647, %v2794
    %vm2805 = vcmp.eq.f32.partialorder %v2804, 8.507059e+37
    %v2806 = vand.u32 %v2794, 2147483648
    %v2807 = vor.u32 1.1754944e-38, %v2806
    %v2808 = vsel %vm2805, %v2807, %v2803
    %v2809 = vmul.f32 1.0, %v2808
    %v2810 = vmul.f32 %v2789, %v2516
    %v2811 = vmul.f32 %v2770, %v2790
    %v2812 = vadd.f32 %v2810, %v2811
    %v2813 = vtanh.pop %v2812
    %v2814 = vmul.f32 %v2809, %v2813
    %v2815 = vxor.u32 %v2688, 2147483648
    %v2816 = vmul.f32 %v2815, 1.442695
    %v2817 = vpow.pop %v2816
    %v2818 = vadd.f32 %v2817, 1.0
    %v2819 = vrcp.pop %v2818
    %v2820 = vmul.f32 %v2818, %v2819
    %v2821 = vsub.f32 1.0, %v2820
    %v2822 = vmul.f32 %v2819, %v2821
    %v2823 = vadd.f32 %v2819, %v2822
    %vm2824 = vweird.f32 %v2818
    %vm2825 = vweird.f32 %v2819
    %vm2826 = vmor %vm2824, %vm2825
    %v2827 = vsel %vm2826, %v2819, %v2823
    %v2828 = vand.u32 2147483647, %v2818
    %vm2829 = vcmp.eq.f32.partialorder %v2828, 8.507059e+37
    %v2830 = vand.u32 %v2818, 2147483648
    %v2831 = vor.u32 1.1754944e-38, %v2830
    %v2832 = vsel %vm2829, %v2831, %v2827
    %v2833 = vmul.f32 1.0, %v2832
    %v2834 = vxor.u32 %v2689, 2147483648
    %v2835 = vmul.f32 %v2834, 1.442695
    %v2836 = vpow.pop %v2835
    %v2837 = vadd.f32 %v2836, 1.0
    %v2838 = vrcp.pop %v2837
    %v2839 = vmul.f32 %v2837, %v2838
    %v2840 = vsub.f32 1.0, %v2839
    %v2841 = vmul.f32 %v2838, %v2840
    %v2842 = vadd.f32 %v2838, %v2841
    %vm2843 = vweird.f32 %v2837
    %vm2844 = vweird.f32 %v2838
    %vm2845 = vmor %vm2843, %vm2844
    %v2846 = vsel %vm2845, %v2838, %v2842
    %v2847 = vand.u32 2147483647, %v2837
    %vm2848 = vcmp.eq.f32.partialorder %v2847, 8.507059e+37
    %v2849 = vand.u32 %v2837, 2147483648
    %v2850 = vor.u32 1.1754944e-38, %v2849
    %v2851 = vsel %vm2848, %v2850, %v2846
    %v2852 = vmul.f32 1.0, %v2851
    %v2853 = vtanh.pop %v2690
    %v2854 = vxor.u32 %v2691, 2147483648
    %v2855 = vmul.f32 %v2854, 1.442695
    %v2856 = vpow.pop %v2855
    %v2857 = vadd.f32 %v2856, 1.0
    %v2858 = vrcp.pop %v2857
    %v2859 = vmul.f32 %v2857, %v2858
    %v2860 = vsub.f32 1.0, %v2859
    %v2861 = vmul.f32 %v2858, %v2860
    %v2862 = vadd.f32 %v2858, %v2861
    %vm2863 = vweird.f32 %v2857
    %vm2864 = vweird.f32 %v2858
    %vm2865 = vmor %vm2863, %vm2864
    %v2866 = vsel %vm2865, %v2858, %v2862
    %v2867 = vand.u32 2147483647, %v2857
    %vm2868 = vcmp.eq.f32.partialorder %v2867, 8.507059e+37
    %v2869 = vand.u32 %v2857, 2147483648
    %v2870 = vor.u32 1.1754944e-38, %v2869
    %v2871 = vsel %vm2868, %v2870, %v2866
    %v2872 = vmul.f32 1.0, %v2871
    %v2873 = vmul.f32 %v2852, %v2579
    %v2874 = vmul.f32 %v2833, %v2853
    %v2875 = vadd.f32 %v2873, %v2874
    %v2876 = vtanh.pop %v2875
    %v2877 = vmul.f32 %v2872, %v2876
    %v2878 = vpack.c.bf16 %v2814, %v2814
    %v2879 = vpack.c.bf16 %v2877, %v2877
    %2880 = vmatpush.bf16.msra.mxu0 %v899
    %2881 = vmatpush.bf16.msra.mxu0 %v895
    %2882 = vmatpush.bf16.msra.mxu0 %v891
    %2883 = vmatpush.bf16.msra.mxu0 %v887
    %2884 = vmatpush.bf16.msra.mxu0 %v883
    %2885 = vmatpush.bf16.msra.mxu0 %v879
    %2886 = vmatpush.bf16.msra.mxu0 %v875
    %2887 = vmatpush.bf16.msra.mxu0 %v871
    %2888 = vmatmul.bf16.gmra.mxu0 %v2879
    %v2889 = vpop.f32.mrf.mxu0
    %v2890 = vadd.f32 0.0, %v2889
    %v2891 = vpop.f32.mrf.mxu0
    %2892 = vdwg.mxu0
    %2893 = vmatpush.bf16.msra.mxu0 %v900
    %2894 = vmatpush.bf16.msra.mxu0 %v896
    %2895 = vmatpush.bf16.msra.mxu0 %v892
    %2896 = vmatpush.bf16.msra.mxu0 %v888
    %2897 = vmatpush.bf16.msra.mxu0 %v884
    %2898 = vmatpush.bf16.msra.mxu0 %v880
    %2899 = vmatpush.bf16.msra.mxu0 %v876
    %2900 = vmatpush.bf16.msra.mxu0 %v872
    %2901 = vmatmul.bf16.gmra.mxu0 %v2879
    %v2902 = vpop.f32.mrf.mxu0
    %v2903 = vadd.f32 0.0, %v2902
    %v2904 = vpop.f32.mrf.mxu0
    %2905 = vdwg.mxu0
    %2906 = vmatpush.bf16.msra.mxu0 %v901
    %2907 = vmatpush.bf16.msra.mxu0 %v897
    %2908 = vmatpush.bf16.msra.mxu0 %v893
    %2909 = vmatpush.bf16.msra.mxu0 %v889
    %2910 = vmatpush.bf16.msra.mxu0 %v885
    %2911 = vmatpush.bf16.msra.mxu0 %v881
    %2912 = vmatpush.bf16.msra.mxu0 %v877
    %2913 = vmatpush.bf16.msra.mxu0 %v873
    %2914 = vmatmul.bf16.gmra.mxu0 %v2879
    %v2915 = vpop.f32.mrf.mxu0
    %v2916 = vadd.f32 0.0, %v2915
    %v2917 = vpop.f32.mrf.mxu0
    %2918 = vdwg.mxu0
    %2919 = vmatpush.bf16.msra.mxu0 %v902
    %2920 = vmatpush.bf16.msra.mxu0 %v898
    %2921 = vmatpush.bf16.msra.mxu0 %v894
    %2922 = vmatpush.bf16.msra.mxu0 %v890
    %2923 = vmatpush.bf16.msra.mxu0 %v886
    %2924 = vmatpush.bf16.msra.mxu0 %v882
    %2925 = vmatpush.bf16.msra.mxu0 %v878
    %2926 = vmatpush.bf16.msra.mxu0 %v874
    %2927 = vmatmul.bf16.gmra.mxu0 %v2879
    %v2928 = vpop.f32.mrf.mxu0
    %v2929 = vadd.f32 0.0, %v2928
    %v2930 = vpop.f32.mrf.mxu0
    %2931 = vdwg.mxu0
    %2932 = vmatpush.bf16.msra.mxu0 %v1111
    %2933 = vmatpush.bf16.msra.mxu0 %v1107
    %2934 = vmatpush.bf16.msra.mxu0 %v1103
    %2935 = vmatpush.bf16.msra.mxu0 %v1099
    %2936 = vmatpush.bf16.msra.mxu0 %v1095
    %2937 = vmatpush.bf16.msra.mxu0 %v1091
    %2938 = vmatpush.bf16.msra.mxu0 %v1087
    %2939 = vmatpush.bf16.msra.mxu0 %v1083
    %2940 = vmatmul.bf16.gmra.mxu0 %v2878
    %v2941 = vpop.f32.mrf.mxu0
    %v2942 = vadd.f32 %v2890, %v2941
    %v2943 = vpop.f32.mrf.mxu0
    %2944 = vdwg.mxu0
    %2945 = vmatpush.bf16.msra.mxu0 %v1112
    %2946 = vmatpush.bf16.msra.mxu0 %v1108
    %2947 = vmatpush.bf16.msra.mxu0 %v1104
    %2948 = vmatpush.bf16.msra.mxu0 %v1100
    %2949 = vmatpush.bf16.msra.mxu0 %v1096
    %2950 = vmatpush.bf16.msra.mxu0 %v1092
    %2951 = vmatpush.bf16.msra.mxu0 %v1088
    %2952 = vmatpush.bf16.msra.mxu0 %v1084
    %2953 = vmatmul.bf16.gmra.mxu0 %v2878
    %v2954 = vpop.f32.mrf.mxu0
    %v2955 = vadd.f32 %v2903, %v2954
    %v2956 = vpop.f32.mrf.mxu0
    %2957 = vdwg.mxu0
    %2958 = vmatpush.bf16.msra.mxu0 %v1113
    %2959 = vmatpush.bf16.msra.mxu0 %v1109
    %2960 = vmatpush.bf16.msra.mxu0 %v1105
    %2961 = vmatpush.bf16.msra.mxu0 %v1101
    %2962 = vmatpush.bf16.msra.mxu0 %v1097
    %2963 = vmatpush.bf16.msra.mxu0 %v1093
    %2964 = vmatpush.bf16.msra.mxu0 %v1089
    %2965 = vmatpush.bf16.msra.mxu0 %v1085
    %2966 = vmatmul.bf16.gmra.mxu0 %v2878
    %v2967 = vpop.f32.mrf.mxu0
    %v2968 = vadd.f32 %v2916, %v2967
    %v2969 = vpop.f32.mrf.mxu0
    %2970 = vdwg.mxu0
    %2971 = vmatpush.bf16.msra.mxu0 %v1114
    %2972 = vmatpush.bf16.msra.mxu0 %v1110
    %2973 = vmatpush.bf16.msra.mxu0 %v1106
    %2974 = vmatpush.bf16.msra.mxu0 %v1102
    %2975 = vmatpush.bf16.msra.mxu0 %v1098
    %2976 = vmatpush.bf16.msra.mxu0 %v1094
    %2977 = vmatpush.bf16.msra.mxu0 %v1090
    %2978 = vmatpush.bf16.msra.mxu0 %v1086
    %2979 = vmatmul.bf16.gmra.mxu0 %v2878
    %v2980 = vpop.f32.mrf.mxu0
    %v2981 = vadd.f32 %v2929, %v2980
    %v2982 = vpop.f32.mrf.mxu0
    %2983 = vdwg.mxu0
    %v2984 = vadd.f32 %v2942, %v1200
    %v2985 = vadd.f32 %v2955, %v1201
    %v2986 = vadd.f32 %v2968, %v1202
    %v2987 = vadd.f32 %v2981, %v1203
    %v2988 = vunpack.c.l.bf16 %v392
    %v2989 = vunpack.c.h.bf16 %v392
    %v2990 = vunpack.c.l.bf16 %v393
    %v2991 = vunpack.c.h.bf16 %v393
    %2992 = vmatpush.bf16.msra.mxu0 %v619
    %2993 = vmatpush.bf16.msra.mxu0 %v615
    %2994 = vmatpush.bf16.msra.mxu0 %v611
    %2995 = vmatpush.bf16.msra.mxu0 %v607
    %2996 = vmatpush.bf16.msra.mxu0 %v603
    %2997 = vmatpush.bf16.msra.mxu0 %v599
    %2998 = vmatpush.bf16.msra.mxu0 %v595
    %2999 = vmatpush.bf16.msra.mxu0 %v591
    %3000 = vmatmul.bf16.gmra.mxu0 %v2878
    %v3001 = vpop.f32.mrf.mxu0
    %v3002 = vadd.f32 0.0, %v3001
    %v3003 = vpop.f32.mrf.mxu0
    %3004 = vdwg.mxu0
    %3005 = vmatpush.bf16.msra.mxu0 %v620
    %3006 = vmatpush.bf16.msra.mxu0 %v616
    %3007 = vmatpush.bf16.msra.mxu0 %v612
    %3008 = vmatpush.bf16.msra.mxu0 %v608
    %3009 = vmatpush.bf16.msra.mxu0 %v604
    %3010 = vmatpush.bf16.msra.mxu0 %v600
    %3011 = vmatpush.bf16.msra.mxu0 %v596
    %3012 = vmatpush.bf16.msra.mxu0 %v592
    %3013 = vmatmul.bf16.gmra.mxu0 %v2878
    %v3014 = vpop.f32.mrf.mxu0
    %v3015 = vadd.f32 0.0, %v3014
    %v3016 = vpop.f32.mrf.mxu0
    %3017 = vdwg.mxu0
    %3018 = vmatpush.bf16.msra.mxu0 %v621
    %3019 = vmatpush.bf16.msra.mxu0 %v617
    %3020 = vmatpush.bf16.msra.mxu0 %v613
    %3021 = vmatpush.bf16.msra.mxu0 %v609
    %3022 = vmatpush.bf16.msra.mxu0 %v605
    %3023 = vmatpush.bf16.msra.mxu0 %v601
    %3024 = vmatpush.bf16.msra.mxu0 %v597
    %3025 = vmatpush.bf16.msra.mxu0 %v593
    %3026 = vmatmul.bf16.gmra.mxu0 %v2878
    %v3027 = vpop.f32.mrf.mxu0
    %v3028 = vadd.f32 0.0, %v3027
    %v3029 = vpop.f32.mrf.mxu0
    %3030 = vdwg.mxu0
    %3031 = vmatpush.bf16.msra.mxu0 %v622
    %3032 = vmatpush.bf16.msra.mxu0 %v618
    %3033 = vmatpush.bf16.msra.mxu0 %v614
    %3034 = vmatpush.bf16.msra.mxu0 %v610
    %3035 = vmatpush.bf16.msra.mxu0 %v606
    %3036 = vmatpush.bf16.msra.mxu0 %v602
    %3037 = vmatpush.bf16.msra.mxu0 %v598
    %3038 = vmatpush.bf16.msra.mxu0 %v594
    %3039 = vmatmul.bf16.gmra.mxu0 %v2878
    %v3040 = vpop.f32.mrf.mxu0
    %v3041 = vadd.f32 0.0, %v3040
    %v3042 = vpop.f32.mrf.mxu0
    %3043 = vdwg.mxu0
    %v3044 = vadd.f32 %v2988, %v3002
    %v3045 = vadd.f32 %v2989, %v3015
    %v3046 = vadd.f32 %v2990, %v3028
    %v3047 = vadd.f32 %v2991, %v3041
    %v3048 = vxor.u32 %v3044, 2147483648
    %v3049 = vmul.f32 %v3048, 1.442695
    %v3050 = vpow.pop %v3049
    %v3051 = vadd.f32 %v3050, 1.0
    %v3052 = vrcp.pop %v3051
    %v3053 = vmul.f32 %v3051, %v3052
    %v3054 = vsub.f32 1.0, %v3053
    %v3055 = vmul.f32 %v3052, %v3054
    %v3056 = vadd.f32 %v3052, %v3055
    %vm3057 = vweird.f32 %v3051
    %vm3058 = vweird.f32 %v3052
    %vm3059 = vmor %vm3057, %vm3058
    %v3060 = vsel %vm3059, %v3052, %v3056
    %v3061 = vand.u32 2147483647, %v3051
    %vm3062 = vcmp.eq.f32.partialorder %v3061, 8.507059e+37
    %v3063 = vand.u32 %v3051, 2147483648
    %v3064 = vor.u32 1.1754944e-38, %v3063
    %v3065 = vsel %vm3062, %v3064, %v3060
    %v3066 = vmul.f32 1.0, %v3065
    %v3067 = vxor.u32 %v3045, 2147483648
    %v3068 = vmul.f32 %v3067, 1.442695
    %v3069 = vpow.pop %v3068
    %v3070 = vadd.f32 %v3069, 1.0
    %v3071 = vrcp.pop %v3070
    %v3072 = vmul.f32 %v3070, %v3071
    %v3073 = vsub.f32 1.0, %v3072
    %v3074 = vmul.f32 %v3071, %v3073
    %v3075 = vadd.f32 %v3071, %v3074
    %vm3076 = vweird.f32 %v3070
    %vm3077 = vweird.f32 %v3071
    %vm3078 = vmor %vm3076, %vm3077
    %v3079 = vsel %vm3078, %v3071, %v3075
    %v3080 = vand.u32 2147483647, %v3070
    %vm3081 = vcmp.eq.f32.partialorder %v3080, 8.507059e+37
    %v3082 = vand.u32 %v3070, 2147483648
    %v3083 = vor.u32 1.1754944e-38, %v3082
    %v3084 = vsel %vm3081, %v3083, %v3079
    %v3085 = vmul.f32 1.0, %v3084
    %v3086 = vtanh.pop %v3046
    %v3087 = vxor.u32 %v3047, 2147483648
    %v3088 = vmul.f32 %v3087, 1.442695
    %v3089 = vpow.pop %v3088
    %v3090 = vadd.f32 %v3089, 1.0
    %v3091 = vrcp.pop %v3090
    %v3092 = vmul.f32 %v3090, %v3091
    %v3093 = vsub.f32 1.0, %v3092
    %v3094 = vmul.f32 %v3091, %v3093
    %v3095 = vadd.f32 %v3091, %v3094
    %vm3096 = vweird.f32 %v3090
    %vm3097 = vweird.f32 %v3091
    %vm3098 = vmor %vm3096, %vm3097
    %v3099 = vsel %vm3098, %v3091, %v3095
    %v3100 = vand.u32 2147483647, %v3090
    %vm3101 = vcmp.eq.f32.partialorder %v3100, 8.507059e+37
    %v3102 = vand.u32 %v3090, 2147483648
    %v3103 = vor.u32 1.1754944e-38, %v3102
    %v3104 = vsel %vm3101, %v3103, %v3099
    %v3105 = vmul.f32 1.0, %v3104
    %v3106 = vmul.f32 %v3085, %v2812
    %v3107 = vmul.f32 %v3066, %v3086
    %v3108 = vadd.f32 %v3106, %v3107
    %v3109 = vtanh.pop %v3108
    %v3110 = vmul.f32 %v3105, %v3109
    %v3111 = vxor.u32 %v2984, 2147483648
    %v3112 = vmul.f32 %v3111, 1.442695
    %v3113 = vpow.pop %v3112
    %v3114 = vadd.f32 %v3113, 1.0
    %v3115 = vrcp.pop %v3114
    %v3116 = vmul.f32 %v3114, %v3115
    %v3117 = vsub.f32 1.0, %v3116
    %v3118 = vmul.f32 %v3115, %v3117
    %v3119 = vadd.f32 %v3115, %v3118
    %vm3120 = vweird.f32 %v3114
    %vm3121 = vweird.f32 %v3115
    %vm3122 = vmor %vm3120, %vm3121
    %v3123 = vsel %vm3122, %v3115, %v3119
    %v3124 = vand.u32 2147483647, %v3114
    %vm3125 = vcmp.eq.f32.partialorder %v3124, 8.507059e+37
    %v3126 = vand.u32 %v3114, 2147483648
    %v3127 = vor.u32 1.1754944e-38, %v3126
    %v3128 = vsel %vm3125, %v3127, %v3123
    %v3129 = vmul.f32 1.0, %v3128
    %v3130 = vxor.u32 %v2985, 2147483648
    %v3131 = vmul.f32 %v3130, 1.442695
    %v3132 = vpow.pop %v3131
    %v3133 = vadd.f32 %v3132, 1.0
    %v3134 = vrcp.pop %v3133
    %v3135 = vmul.f32 %v3133, %v3134
    %v3136 = vsub.f32 1.0, %v3135
    %v3137 = vmul.f32 %v3134, %v3136
    %v3138 = vadd.f32 %v3134, %v3137
    %vm3139 = vweird.f32 %v3133
    %vm3140 = vweird.f32 %v3134
    %vm3141 = vmor %vm3139, %vm3140
    %v3142 = vsel %vm3141, %v3134, %v3138
    %v3143 = vand.u32 2147483647, %v3133
    %vm3144 = vcmp.eq.f32.partialorder %v3143, 8.507059e+37
    %v3145 = vand.u32 %v3133, 2147483648
    %v3146 = vor.u32 1.1754944e-38, %v3145
    %v3147 = vsel %vm3144, %v3146, %v3142
    %v3148 = vmul.f32 1.0, %v3147
    %v3149 = vtanh.pop %v2986
    %v3150 = vxor.u32 %v2987, 2147483648
    %v3151 = vmul.f32 %v3150, 1.442695
    %v3152 = vpow.pop %v3151
    %v3153 = vadd.f32 %v3152, 1.0
    %v3154 = vrcp.pop %v3153
    %v3155 = vmul.f32 %v3153, %v3154
    %v3156 = vsub.f32 1.0, %v3155
    %v3157 = vmul.f32 %v3154, %v3156
    %v3158 = vadd.f32 %v3154, %v3157
    %vm3159 = vweird.f32 %v3153
    %vm3160 = vweird.f32 %v3154
    %vm3161 = vmor %vm3159, %vm3160
    %v3162 = vsel %vm3161, %v3154, %v3158
    %v3163 = vand.u32 2147483647, %v3153
    %vm3164 = vcmp.eq.f32.partialorder %v3163, 8.507059e+37
    %v3165 = vand.u32 %v3153, 2147483648
    %v3166 = vor.u32 1.1754944e-38, %v3165
    %v3167 = vsel %vm3164, %v3166, %v3162
    %v3168 = vmul.f32 1.0, %v3167
    %v3169 = vmul.f32 %v3148, %v2875
    %v3170 = vmul.f32 %v3129, %v3149
    %v3171 = vadd.f32 %v3169, %v3170
    %v3172 = vtanh.pop %v3171
    %v3173 = vmul.f32 %v3168, %v3172
    %v3174 = vpack.c.bf16 %v3110, %v3110
    %v3175 = vpack.c.bf16 %v3173, %v3173
    %3176 = vmatpush.bf16.msra.mxu0 %v899
    %3177 = vmatpush.bf16.msra.mxu0 %v895
    %3178 = vmatpush.bf16.msra.mxu0 %v891
    %3179 = vmatpush.bf16.msra.mxu0 %v887
    %3180 = vmatpush.bf16.msra.mxu0 %v883
    %3181 = vmatpush.bf16.msra.mxu0 %v879
    %3182 = vmatpush.bf16.msra.mxu0 %v875
    %3183 = vmatpush.bf16.msra.mxu0 %v871
    %3184 = vmatmul.bf16.gmra.mxu0 %v3175
    %v3185 = vpop.f32.mrf.mxu0
    %v3186 = vadd.f32 0.0, %v3185
    %v3187 = vpop.f32.mrf.mxu0
    %3188 = vdwg.mxu0
    %3189 = vmatpush.bf16.msra.mxu0 %v900
    %3190 = vmatpush.bf16.msra.mxu0 %v896
    %3191 = vmatpush.bf16.msra.mxu0 %v892
    %3192 = vmatpush.bf16.msra.mxu0 %v888
    %3193 = vmatpush.bf16.msra.mxu0 %v884
    %3194 = vmatpush.bf16.msra.mxu0 %v880
    %3195 = vmatpush.bf16.msra.mxu0 %v876
    %3196 = vmatpush.bf16.msra.mxu0 %v872
    %3197 = vmatmul.bf16.gmra.mxu0 %v3175
    %v3198 = vpop.f32.mrf.mxu0
    %v3199 = vadd.f32 0.0, %v3198
    %v3200 = vpop.f32.mrf.mxu0
    %3201 = vdwg.mxu0
    %3202 = vmatpush.bf16.msra.mxu0 %v901
    %3203 = vmatpush.bf16.msra.mxu0 %v897
    %3204 = vmatpush.bf16.msra.mxu0 %v893
    %3205 = vmatpush.bf16.msra.mxu0 %v889
    %3206 = vmatpush.bf16.msra.mxu0 %v885
    %3207 = vmatpush.bf16.msra.mxu0 %v881
    %3208 = vmatpush.bf16.msra.mxu0 %v877
    %3209 = vmatpush.bf16.msra.mxu0 %v873
    %3210 = vmatmul.bf16.gmra.mxu0 %v3175
    %v3211 = vpop.f32.mrf.mxu0
    %v3212 = vadd.f32 0.0, %v3211
    %v3213 = vpop.f32.mrf.mxu0
    %3214 = vdwg.mxu0
    %3215 = vmatpush.bf16.msra.mxu0 %v902
    %3216 = vmatpush.bf16.msra.mxu0 %v898
    %3217 = vmatpush.bf16.msra.mxu0 %v894
    %3218 = vmatpush.bf16.msra.mxu0 %v890
    %3219 = vmatpush.bf16.msra.mxu0 %v886
    %3220 = vmatpush.bf16.msra.mxu0 %v882
    %3221 = vmatpush.bf16.msra.mxu0 %v878
    %3222 = vmatpush.bf16.msra.mxu0 %v874
    %3223 = vmatmul.bf16.gmra.mxu0 %v3175
    %v3224 = vpop.f32.mrf.mxu0
    %v3225 = vadd.f32 0.0, %v3224
    %v3226 = vpop.f32.mrf.mxu0
    %3227 = vdwg.mxu0
    %3228 = vmatpush.bf16.msra.mxu0 %v1111
    %3229 = vmatpush.bf16.msra.mxu0 %v1107
    %3230 = vmatpush.bf16.msra.mxu0 %v1103
    %3231 = vmatpush.bf16.msra.mxu0 %v1099
    %3232 = vmatpush.bf16.msra.mxu0 %v1095
    %3233 = vmatpush.bf16.msra.mxu0 %v1091
    %3234 = vmatpush.bf16.msra.mxu0 %v1087
    %3235 = vmatpush.bf16.msra.mxu0 %v1083
    %3236 = vmatmul.bf16.gmra.mxu0 %v3174
    %v3237 = vpop.f32.mrf.mxu0
    %v3238 = vadd.f32 %v3186, %v3237
    %v3239 = vpop.f32.mrf.mxu0
    %3240 = vdwg.mxu0
    %3241 = vmatpush.bf16.msra.mxu0 %v1112
    %3242 = vmatpush.bf16.msra.mxu0 %v1108
    %3243 = vmatpush.bf16.msra.mxu0 %v1104
    %3244 = vmatpush.bf16.msra.mxu0 %v1100
    %3245 = vmatpush.bf16.msra.mxu0 %v1096
    %3246 = vmatpush.bf16.msra.mxu0 %v1092
    %3247 = vmatpush.bf16.msra.mxu0 %v1088
    %3248 = vmatpush.bf16.msra.mxu0 %v1084
    %3249 = vmatmul.bf16.gmra.mxu0 %v3174
    %v3250 = vpop.f32.mrf.mxu0
    %v3251 = vadd.f32 %v3199, %v3250
    %v3252 = vpop.f32.mrf.mxu0
    %3253 = vdwg.mxu0
    %3254 = vmatpush.bf16.msra.mxu0 %v1113
    %3255 = vmatpush.bf16.msra.mxu0 %v1109
    %3256 = vmatpush.bf16.msra.mxu0 %v1105
    %3257 = vmatpush.bf16.msra.mxu0 %v1101
    %3258 = vmatpush.bf16.msra.mxu0 %v1097
    %3259 = vmatpush.bf16.msra.mxu0 %v1093
    %3260 = vmatpush.bf16.msra.mxu0 %v1089
    %3261 = vmatpush.bf16.msra.mxu0 %v1085
    %3262 = vmatmul.bf16.gmra.mxu0 %v3174
    %v3263 = vpop.f32.mrf.mxu0
    %v3264 = vadd.f32 %v3212, %v3263
    %v3265 = vpop.f32.mrf.mxu0
    %3266 = vdwg.mxu0
    %3267 = vmatpush.bf16.msra.mxu0 %v1114
    %3268 = vmatpush.bf16.msra.mxu0 %v1110
    %3269 = vmatpush.bf16.msra.mxu0 %v1106
    %3270 = vmatpush.bf16.msra.mxu0 %v1102
    %3271 = vmatpush.bf16.msra.mxu0 %v1098
    %3272 = vmatpush.bf16.msra.mxu0 %v1094
    %3273 = vmatpush.bf16.msra.mxu0 %v1090
    %3274 = vmatpush.bf16.msra.mxu0 %v1086
    %3275 = vmatmul.bf16.gmra.mxu0 %v3174
    %v3276 = vpop.f32.mrf.mxu0
    %v3277 = vadd.f32 %v3225, %v3276
    %v3278 = vpop.f32.mrf.mxu0
    %3279 = vdwg.mxu0
    %v3280 = vadd.f32 %v3238, %v1200
    %v3281 = vadd.f32 %v3251, %v1201
    %v3282 = vadd.f32 %v3264, %v1202
    %v3283 = vadd.f32 %v3277, %v1203
    %v3284 = vxor.u32 %v3280, 2147483648
    %v3285 = vmul.f32 %v3284, 1.442695
    %v3286 = vpow.pop %v3285
    %v3287 = vadd.f32 %v3286, 1.0
    %v3288 = vrcp.pop %v3287
    %v3289 = vmul.f32 %v3287, %v3288
    %v3290 = vsub.f32 1.0, %v3289
    %v3291 = vmul.f32 %v3288, %v3290
    %v3292 = vadd.f32 %v3288, %v3291
    %vm3293 = vweird.f32 %v3287
    %vm3294 = vweird.f32 %v3288
    %vm3295 = vmor %vm3293, %vm3294
    %v3296 = vsel %vm3295, %v3288, %v3292
    %v3297 = vand.u32 2147483647, %v3287
    %vm3298 = vcmp.eq.f32.partialorder %v3297, 8.507059e+37
    %v3299 = vand.u32 %v3287, 2147483648
    %v3300 = vor.u32 1.1754944e-38, %v3299
    %v3301 = vsel %vm3298, %v3300, %v3296
    %v3302 = vmul.f32 1.0, %v3301
    %v3303 = vxor.u32 %v3281, 2147483648
    %v3304 = vmul.f32 %v3303, 1.442695
    %v3305 = vpow.pop %v3304
    %v3306 = vadd.f32 %v3305, 1.0
    %v3307 = vrcp.pop %v3306
    %v3308 = vmul.f32 %v3306, %v3307
    %v3309 = vsub.f32 1.0, %v3308
    %v3310 = vmul.f32 %v3307, %v3309
    %v3311 = vadd.f32 %v3307, %v3310
    %vm3312 = vweird.f32 %v3306
    %vm3313 = vweird.f32 %v3307
    %vm3314 = vmor %vm3312, %vm3313
    %v3315 = vsel %vm3314, %v3307, %v3311
    %v3316 = vand.u32 2147483647, %v3306
    %vm3317 = vcmp.eq.f32.partialorder %v3316, 8.507059e+37
    %v3318 = vand.u32 %v3306, 2147483648
    %v3319 = vor.u32 1.1754944e-38, %v3318
    %v3320 = vsel %vm3317, %v3319, %v3315
    %v3321 = vmul.f32 1.0, %v3320
    %v3322 = vtanh.pop %v3282
    %v3323 = vxor.u32 %v3283, 2147483648
    %v3324 = vmul.f32 %v3323, 1.442695
    %v3325 = vpow.pop %v3324
    %v3326 = vadd.f32 %v3325, 1.0
    %v3327 = vrcp.pop %v3326
    %v3328 = vmul.f32 %v3326, %v3327
    %v3329 = vsub.f32 1.0, %v3328
    %v3330 = vmul.f32 %v3327, %v3329
    %v3331 = vadd.f32 %v3327, %v3330
    %vm3332 = vweird.f32 %v3326
    %vm3333 = vweird.f32 %v3327
    %vm3334 = vmor %vm3332, %vm3333
    %v3335 = vsel %vm3334, %v3327, %v3331
    %v3336 = vand.u32 2147483647, %v3326
    %vm3337 = vcmp.eq.f32.partialorder %v3336, 8.507059e+37
    %v3338 = vand.u32 %v3326, 2147483648
    %v3339 = vor.u32 1.1754944e-38, %v3338
    %v3340 = vsel %vm3337, %v3339, %v3335
    %v3341 = vmul.f32 1.0, %v3340
    %v3342 = vmul.f32 %v3321, %v3171
    %v3343 = vmul.f32 %v3302, %v3322
    %v3344 = vadd.f32 %v3342, %v3343
    %v3345 = vtanh.pop %v3344
    %v3346 = vmul.f32 %v3341, %v3345
    %v3347 = vpack.c.bf16 %v3346, %v3346
    %v3348 = vld [vmem:[#allocation13] sm:$0xff]
    %v3349 = vld [vmem:[#allocation13 + $0x8] sm:$0xff]
    %v3350 = vld [vmem:[#allocation13 + $0x10] sm:$0xff]
    %v3351 = vld [vmem:[#allocation13 + $0x18] sm:$0xff]
    %v3352 = vld [vmem:[#allocation13 + $0x20] sm:$0xff]
    %v3353 = vld [vmem:[#allocation13 + $0x28] sm:$0xff]
    %v3354 = vld [vmem:[#allocation13 + $0x30] sm:$0xff]
    %v3355 = vld [vmem:[#allocation13 + $0x38] sm:$0xff]
    %v3356 = vld [vmem:[#allocation13 + $0x40] sm:$0xff]
    %v3357 = vld [vmem:[#allocation13 + $0x48] sm:$0xff]
    %v3358 = vld [vmem:[#allocation13 + $0x50] sm:$0xff]
    %v3359 = vld [vmem:[#allocation13 + $0x58] sm:$0xff]
    %v3360 = vld [vmem:[#allocation13 + $0x60] sm:$0xff]
    %v3361 = vld [vmem:[#allocation13 + $0x68] sm:$0xff]
    %v3362 = vld [vmem:[#allocation13 + $0x70] sm:$0xff]
    %v3363 = vld [vmem:[#allocation13 + $0x78] sm:$0xff]
    %v3364 = vld [vmem:[#allocation13 + $0x80] sm:$0xff]
    %v3365 = vld [vmem:[#allocation13 + $0x88] sm:$0xff]
    %v3366 = vld [vmem:[#allocation13 + $0x90] sm:$0xff]
    %v3367 = vld [vmem:[#allocation13 + $0x98] sm:$0xff]
    %v3368 = vld [vmem:[#allocation13 + $0xa0] sm:$0xff]
    %v3369 = vld [vmem:[#allocation13 + $0xa8] sm:$0xff]
    %v3370 = vld [vmem:[#allocation13 + $0xb0] sm:$0xff]
    %v3371 = vld [vmem:[#allocation13 + $0xb8] sm:$0xff]
    %v3372 = vld [vmem:[#allocation13 + $0xc0] sm:$0xff]
    %v3373 = vld [vmem:[#allocation13 + $0xc8] sm:$0xff]
    %v3374 = vld [vmem:[#allocation13 + $0xd0] sm:$0xff]
    %v3375 = vld [vmem:[#allocation13 + $0xd8] sm:$0xff]
    %v3376 = vld [vmem:[#allocation13 + $0xe0] sm:$0xff]
    %v3377 = vld [vmem:[#allocation13 + $0xe8] sm:$0xff]
    %v3378 = vld [vmem:[#allocation13 + $0xf0] sm:$0xff]
    %v3379 = vld [vmem:[#allocation13 + $0xf8] sm:$0xff]
    %v3380 = vld [vmem:[#allocation13 + $0x100] sm:$0xff]
    %v3381 = vld [vmem:[#allocation13 + $0x108] sm:$0xff]
    %v3382 = vld [vmem:[#allocation13 + $0x110] sm:$0xff]
    %v3383 = vld [vmem:[#allocation13 + $0x118] sm:$0xff]
    %v3384 = vld [vmem:[#allocation13 + $0x120] sm:$0xff]
    %v3385 = vld [vmem:[#allocation13 + $0x128] sm:$0xff]
    %v3386 = vld [vmem:[#allocation13 + $0x130] sm:$0xff]
    %v3387 = vld [vmem:[#allocation13 + $0x138] sm:$0xff]
    %v3388 = vld [vmem:[#allocation13 + $0x140] sm:$0xff]
    %v3389 = vld [vmem:[#allocation13 + $0x148] sm:$0xff]
    %v3390 = vld [vmem:[#allocation13 + $0x150] sm:$0xff]
    %v3391 = vld [vmem:[#allocation13 + $0x158] sm:$0xff]
    %v3392 = vld [vmem:[#allocation13 + $0x160] sm:$0xff]
    %v3393 = vld [vmem:[#allocation13 + $0x168] sm:$0xff]
    %v3394 = vld [vmem:[#allocation13 + $0x170] sm:$0xff]
    %v3395 = vld [vmem:[#allocation13 + $0x178] sm:$0xff]
    %v3396 = vld [vmem:[#allocation13 + $0x180] sm:$0xff]
    %v3397 = vld [vmem:[#allocation13 + $0x188] sm:$0xff]
    %v3398 = vld [vmem:[#allocation13 + $0x190] sm:$0xff]
    %v3399 = vld [vmem:[#allocation13 + $0x198] sm:$0xff]
    %v3400 = vld [vmem:[#allocation13 + $0x1a0] sm:$0xff]
    %v3401 = vld [vmem:[#allocation13 + $0x1a8] sm:$0xff]
    %v3402 = vld [vmem:[#allocation13 + $0x1b0] sm:$0xff]
    %v3403 = vld [vmem:[#allocation13 + $0x1b8] sm:$0xff]
    %v3404 = vld [vmem:[#allocation13 + $0x1c0] sm:$0xff]
    %v3405 = vld [vmem:[#allocation13 + $0x1c8] sm:$0xff]
    %v3406 = vld [vmem:[#allocation13 + $0x1d0] sm:$0xff]
    %v3407 = vld [vmem:[#allocation13 + $0x1d8] sm:$0xff]
    %v3408 = vld [vmem:[#allocation13 + $0x1e0] sm:$0xff]
    %v3409 = vld [vmem:[#allocation13 + $0x1e8] sm:$0xff]
    %v3410 = vld [vmem:[#allocation13 + $0x1f0] sm:$0xff]
    %v3411 = vld [vmem:[#allocation13 + $0x1f8] sm:$0xff]
    %v3412 = vld [vmem:[#allocation14] sm:$0xff]
    %v3414 = vperm.slane %v3412, 0
    %v3415 = vperm.slane %v3412, 1
    %v3416 = vperm.slane %v3412, 2
    %v3417 = vperm.slane %v3412, 3
    %v3418 = vperm.slane %v3412, 4
    %v3419 = vperm.slane %v3412, 5
    %v3420 = vperm.slane %v3412, 6
    %v3421 = vperm.slane %v3412, 7
    %v3494 = vunpack.c.l.b16 %v3348
    %v3495 = vunpack.c.h.b16 %v3348
    %v3496 = vunpack.c.l.b16 %v3349
    %v3497 = vunpack.c.h.b16 %v3349
    %v3498 = vunpack.c.l.b16 %v3350
    %v3499 = vunpack.c.h.b16 %v3350
    %v3500 = vunpack.c.l.b16 %v3351
    %v3501 = vunpack.c.h.b16 %v3351
    %v3502 = vunpack.c.l.b16 %v3352
    %v3503 = vunpack.c.h.b16 %v3352
    %v3504 = vunpack.c.l.b16 %v3353
    %v3505 = vunpack.c.h.b16 %v3353
    %v3506 = vunpack.c.l.b16 %v3354
    %v3507 = vunpack.c.h.b16 %v3354
    %v3508 = vunpack.c.l.b16 %v3355
    %v3509 = vunpack.c.h.b16 %v3355
    %v3510 = vunpack.c.l.b16 %v3356
    %v3511 = vunpack.c.h.b16 %v3356
    %v3512 = vunpack.c.l.b16 %v3357
    %v3513 = vunpack.c.h.b16 %v3357
    %v3514 = vunpack.c.l.b16 %v3358
    %v3515 = vunpack.c.h.b16 %v3358
    %v3516 = vunpack.c.l.b16 %v3359
    %v3517 = vunpack.c.h.b16 %v3359
    %v3518 = vunpack.c.l.b16 %v3360
    %v3519 = vunpack.c.h.b16 %v3360
    %v3520 = vunpack.c.l.b16 %v3361
    %v3521 = vunpack.c.h.b16 %v3361
    %v3522 = vunpack.c.l.b16 %v3362
    %v3523 = vunpack.c.h.b16 %v3362
    %v3524 = vunpack.c.l.b16 %v3363
    %v3525 = vunpack.c.h.b16 %v3363
    %v3526 = vunpack.c.l.b16 %v3364
    %v3527 = vunpack.c.h.b16 %v3364
    %v3528 = vunpack.c.l.b16 %v3365
    %v3529 = vunpack.c.h.b16 %v3365
    %v3530 = vunpack.c.l.b16 %v3366
    %v3531 = vunpack.c.h.b16 %v3366
    %v3532 = vunpack.c.l.b16 %v3367
    %v3533 = vunpack.c.h.b16 %v3367
    %v3534 = vunpack.c.l.b16 %v3368
    %v3535 = vunpack.c.h.b16 %v3368
    %v3536 = vunpack.c.l.b16 %v3369
    %v3537 = vunpack.c.h.b16 %v3369
    %v3538 = vunpack.c.l.b16 %v3370
    %v3539 = vunpack.c.h.b16 %v3370
    %v3540 = vunpack.c.l.b16 %v3371
    %v3541 = vunpack.c.h.b16 %v3371
    %v3542 = vunpack.c.l.b16 %v3372
    %v3543 = vunpack.c.h.b16 %v3372
    %v3544 = vunpack.c.l.b16 %v3373
    %v3545 = vunpack.c.h.b16 %v3373
    %v3546 = vunpack.c.l.b16 %v3374
    %v3547 = vunpack.c.h.b16 %v3374
    %v3548 = vunpack.c.l.b16 %v3375
    %v3549 = vunpack.c.h.b16 %v3375
    %v3550 = vunpack.c.l.b16 %v3376
    %v3551 = vunpack.c.h.b16 %v3376
    %v3552 = vunpack.c.l.b16 %v3377
    %v3553 = vunpack.c.h.b16 %v3377
    %v3554 = vunpack.c.l.b16 %v3378
    %v3555 = vunpack.c.h.b16 %v3378
    %v3556 = vunpack.c.l.b16 %v3379
    %v3557 = vunpack.c.h.b16 %v3379
    %v3558 = vunpack.c.l.b16 %v3380
    %v3559 = vunpack.c.h.b16 %v3380
    %v3560 = vunpack.c.l.b16 %v3381
    %v3561 = vunpack.c.h.b16 %v3381
    %v3562 = vunpack.c.l.b16 %v3382
    %v3563 = vunpack.c.h.b16 %v3382
    %v3564 = vunpack.c.l.b16 %v3383
    %v3565 = vunpack.c.h.b16 %v3383
    %v3566 = vunpack.c.l.b16 %v3384
    %v3567 = vunpack.c.h.b16 %v3384
    %v3568 = vunpack.c.l.b16 %v3385
    %v3569 = vunpack.c.h.b16 %v3385
    %v3570 = vunpack.c.l.b16 %v3386
    %v3571 = vunpack.c.h.b16 %v3386
    %v3572 = vunpack.c.l.b16 %v3387
    %v3573 = vunpack.c.h.b16 %v3387
    %v3574 = vunpack.c.l.b16 %v3388
    %v3575 = vunpack.c.h.b16 %v3388
    %v3576 = vunpack.c.l.b16 %v3389
    %v3577 = vunpack.c.h.b16 %v3389
    %v3578 = vunpack.c.l.b16 %v3390
    %v3579 = vunpack.c.h.b16 %v3390
    %v3580 = vunpack.c.l.b16 %v3391
    %v3581 = vunpack.c.h.b16 %v3391
    %v3582 = vunpack.c.l.b16 %v3392
    %v3583 = vunpack.c.h.b16 %v3392
    %v3584 = vunpack.c.l.b16 %v3393
    %v3585 = vunpack.c.h.b16 %v3393
    %v3586 = vunpack.c.l.b16 %v3394
    %v3587 = vunpack.c.h.b16 %v3394
    %v3588 = vunpack.c.l.b16 %v3395
    %v3589 = vunpack.c.h.b16 %v3395
    %v3590 = vunpack.c.l.b16 %v3396
    %v3591 = vunpack.c.h.b16 %v3396
    %v3592 = vunpack.c.l.b16 %v3397
    %v3593 = vunpack.c.h.b16 %v3397
    %v3594 = vunpack.c.l.b16 %v3398
    %v3595 = vunpack.c.h.b16 %v3398
    %v3596 = vunpack.c.l.b16 %v3399
    %v3597 = vunpack.c.h.b16 %v3399
    %v3598 = vunpack.c.l.b16 %v3400
    %v3599 = vunpack.c.h.b16 %v3400
    %v3600 = vunpack.c.l.b16 %v3401
    %v3601 = vunpack.c.h.b16 %v3401
    %v3602 = vunpack.c.l.b16 %v3402
    %v3603 = vunpack.c.h.b16 %v3402
    %v3604 = vunpack.c.l.b16 %v3403
    %v3605 = vunpack.c.h.b16 %v3403
    %v3606 = vunpack.c.l.b16 %v3404
    %v3607 = vunpack.c.h.b16 %v3404
    %v3608 = vunpack.c.l.b16 %v3405
    %v3609 = vunpack.c.h.b16 %v3405
    %v3610 = vunpack.c.l.b16 %v3406
    %v3611 = vunpack.c.h.b16 %v3406
    %v3612 = vunpack.c.l.b16 %v3407
    %v3613 = vunpack.c.h.b16 %v3407
    %v3614 = vunpack.c.l.b16 %v3408
    %v3615 = vunpack.c.h.b16 %v3408
    %v3616 = vunpack.c.l.b16 %v3409
    %v3617 = vunpack.c.h.b16 %v3409
    %v3618 = vunpack.c.l.b16 %v3410
    %v3619 = vunpack.c.h.b16 %v3410
    %v3620 = vunpack.c.l.b16 %v3411
    %v3621 = vunpack.c.h.b16 %v3411
    %v3622 = vpack.c.b16 %v3502, %v3494
    %v3623 = vpack.c.b16 %v3503, %v3495
    %v3624 = vpack.c.b16 %v3504, %v3496
    %v3625 = vpack.c.b16 %v3505, %v3497
    %v3626 = vpack.c.b16 %v3506, %v3498
    %v3627 = vpack.c.b16 %v3507, %v3499
    %v3628 = vpack.c.b16 %v3508, %v3500
    %v3629 = vpack.c.b16 %v3509, %v3501
    %v3630 = vpack.c.b16 %v3518, %v3510
    %v3631 = vpack.c.b16 %v3519, %v3511
    %v3632 = vpack.c.b16 %v3520, %v3512
    %v3633 = vpack.c.b16 %v3521, %v3513
    %v3634 = vpack.c.b16 %v3522, %v3514
    %v3635 = vpack.c.b16 %v3523, %v3515
    %v3636 = vpack.c.b16 %v3524, %v3516
    %v3637 = vpack.c.b16 %v3525, %v3517
    %v3638 = vpack.c.b16 %v3534, %v3526
    %v3639 = vpack.c.b16 %v3535, %v3527
    %v3640 = vpack.c.b16 %v3536, %v3528
    %v3641 = vpack.c.b16 %v3537, %v3529
    %v3642 = vpack.c.b16 %v3538, %v3530
    %v3643 = vpack.c.b16 %v3539, %v3531
    %v3644 = vpack.c.b16 %v3540, %v3532
    %v3645 = vpack.c.b16 %v3541, %v3533
    %v3646 = vpack.c.b16 %v3550, %v3542
    %v3647 = vpack.c.b16 %v3551, %v3543
    %v3648 = vpack.c.b16 %v3552, %v3544
    %v3649 = vpack.c.b16 %v3553, %v3545
    %v3650 = vpack.c.b16 %v3554, %v3546
    %v3651 = vpack.c.b16 %v3555, %v3547
    %v3652 = vpack.c.b16 %v3556, %v3548
    %v3653 = vpack.c.b16 %v3557, %v3549
    %v3654 = vpack.c.b16 %v3566, %v3558
    %v3655 = vpack.c.b16 %v3567, %v3559
    %v3656 = vpack.c.b16 %v3568, %v3560
    %v3657 = vpack.c.b16 %v3569, %v3561
    %v3658 = vpack.c.b16 %v3570, %v3562
    %v3659 = vpack.c.b16 %v3571, %v3563
    %v3660 = vpack.c.b16 %v3572, %v3564
    %v3661 = vpack.c.b16 %v3573, %v3565
    %v3662 = vpack.c.b16 %v3582, %v3574
    %v3663 = vpack.c.b16 %v3583, %v3575
    %v3664 = vpack.c.b16 %v3584, %v3576
    %v3665 = vpack.c.b16 %v3585, %v3577
    %v3666 = vpack.c.b16 %v3586, %v3578
    %v3667 = vpack.c.b16 %v3587, %v3579
    %v3668 = vpack.c.b16 %v3588, %v3580
    %v3669 = vpack.c.b16 %v3589, %v3581
    %v3670 = vpack.c.b16 %v3598, %v3590
    %v3671 = vpack.c.b16 %v3599, %v3591
    %v3672 = vpack.c.b16 %v3600, %v3592
    %v3673 = vpack.c.b16 %v3601, %v3593
    %v3674 = vpack.c.b16 %v3602, %v3594
    %v3675 = vpack.c.b16 %v3603, %v3595
    %v3676 = vpack.c.b16 %v3604, %v3596
    %v3677 = vpack.c.b16 %v3605, %v3597
    %v3678 = vpack.c.b16 %v3614, %v3606
    %v3679 = vpack.c.b16 %v3615, %v3607
    %v3680 = vpack.c.b16 %v3616, %v3608
    %v3681 = vpack.c.b16 %v3617, %v3609
    %v3682 = vpack.c.b16 %v3618, %v3610
    %v3683 = vpack.c.b16 %v3619, %v3611
    %v3684 = vpack.c.b16 %v3620, %v3612
    %v3685 = vpack.c.b16 %v3621, %v3613
    %3750 = vmatpush.bf16.msra.mxu0 %v3678
    %3751 = vmatpush.bf16.msra.mxu0 %v3670
    %3752 = vmatpush.bf16.msra.mxu0 %v3662
    %3753 = vmatpush.bf16.msra.mxu0 %v3654
    %3754 = vmatpush.bf16.msra.mxu0 %v3646
    %3755 = vmatpush.bf16.msra.mxu0 %v3638
    %3756 = vmatpush.bf16.msra.mxu0 %v3630
    %3757 = vmatpush.bf16.msra.mxu0 %v3622
    %3758 = vmatmul.bf16.gmra.mxu0 %v3347
    %v3759 = vpop.f32.mrf.mxu0
    %v3760 = vadd.f32 %v3414, %v3759
    %v3761 = vpop.f32.mrf.mxu0
    %3762 = vdwg.mxu0
    %3763 = vmatpush.bf16.msra.mxu0 %v3679
    %3764 = vmatpush.bf16.msra.mxu0 %v3671
    %3765 = vmatpush.bf16.msra.mxu0 %v3663
    %3766 = vmatpush.bf16.msra.mxu0 %v3655
    %3767 = vmatpush.bf16.msra.mxu0 %v3647
    %3768 = vmatpush.bf16.msra.mxu0 %v3639
    %3769 = vmatpush.bf16.msra.mxu0 %v3631
    %3770 = vmatpush.bf16.msra.mxu0 %v3623
    %3771 = vmatmul.bf16.gmra.mxu0 %v3347
    %v3772 = vpop.f32.mrf.mxu0
    %v3773 = vadd.f32 %v3415, %v3772
    %v3774 = vpop.f32.mrf.mxu0
    %3775 = vdwg.mxu0
    %3776 = vmatpush.bf16.msra.mxu0 %v3680
    %3777 = vmatpush.bf16.msra.mxu0 %v3672
    %3778 = vmatpush.bf16.msra.mxu0 %v3664
    %3779 = vmatpush.bf16.msra.mxu0 %v3656
    %3780 = vmatpush.bf16.msra.mxu0 %v3648
    %3781 = vmatpush.bf16.msra.mxu0 %v3640
    %3782 = vmatpush.bf16.msra.mxu0 %v3632
    %3783 = vmatpush.bf16.msra.mxu0 %v3624
    %3784 = vmatmul.bf16.gmra.mxu0 %v3347
    %v3785 = vpop.f32.mrf.mxu0
    %v3786 = vadd.f32 %v3416, %v3785
    %v3787 = vpop.f32.mrf.mxu0
    %3788 = vdwg.mxu0
    %3789 = vmatpush.bf16.msra.mxu0 %v3681
    %3790 = vmatpush.bf16.msra.mxu0 %v3673
    %3791 = vmatpush.bf16.msra.mxu0 %v3665
    %3792 = vmatpush.bf16.msra.mxu0 %v3657
    %3793 = vmatpush.bf16.msra.mxu0 %v3649
    %3794 = vmatpush.bf16.msra.mxu0 %v3641
    %3795 = vmatpush.bf16.msra.mxu0 %v3633
    %3796 = vmatpush.bf16.msra.mxu0 %v3625
    %3797 = vmatmul.bf16.gmra.mxu0 %v3347
    %v3798 = vpop.f32.mrf.mxu0
    %v3799 = vadd.f32 %v3417, %v3798
    %v3800 = vpop.f32.mrf.mxu0
    %3801 = vdwg.mxu0
    %3802 = vmatpush.bf16.msra.mxu0 %v3682
    %3803 = vmatpush.bf16.msra.mxu0 %v3674
    %3804 = vmatpush.bf16.msra.mxu0 %v3666
    %3805 = vmatpush.bf16.msra.mxu0 %v3658
    %3806 = vmatpush.bf16.msra.mxu0 %v3650
    %3807 = vmatpush.bf16.msra.mxu0 %v3642
    %3808 = vmatpush.bf16.msra.mxu0 %v3634
    %3809 = vmatpush.bf16.msra.mxu0 %v3626
    %3810 = vmatmul.bf16.gmra.mxu0 %v3347
    %v3811 = vpop.f32.mrf.mxu0
    %v3812 = vadd.f32 %v3418, %v3811
    %v3813 = vpop.f32.mrf.mxu0
    %3814 = vdwg.mxu0
    %3815 = vmatpush.bf16.msra.mxu0 %v3683
    %3816 = vmatpush.bf16.msra.mxu0 %v3675
    %3817 = vmatpush.bf16.msra.mxu0 %v3667
    %3818 = vmatpush.bf16.msra.mxu0 %v3659
    %3819 = vmatpush.bf16.msra.mxu0 %v3651
    %3820 = vmatpush.bf16.msra.mxu0 %v3643
    %3821 = vmatpush.bf16.msra.mxu0 %v3635
    %3822 = vmatpush.bf16.msra.mxu0 %v3627
    %3823 = vmatmul.bf16.gmra.mxu0 %v3347
    %v3824 = vpop.f32.mrf.mxu0
    %v3825 = vadd.f32 %v3419, %v3824
    %v3826 = vpop.f32.mrf.mxu0
    %3827 = vdwg.mxu0
    %3828 = vmatpush.bf16.msra.mxu0 %v3684
    %3829 = vmatpush.bf16.msra.mxu0 %v3676
    %3830 = vmatpush.bf16.msra.mxu0 %v3668
    %3831 = vmatpush.bf16.msra.mxu0 %v3660
    %3832 = vmatpush.bf16.msra.mxu0 %v3652
    %3833 = vmatpush.bf16.msra.mxu0 %v3644
    %3834 = vmatpush.bf16.msra.mxu0 %v3636
    %3835 = vmatpush.bf16.msra.mxu0 %v3628
    %3836 = vmatmul.bf16.gmra.mxu0 %v3347
    %v3837 = vpop.f32.mrf.mxu0
    %v3838 = vadd.f32 %v3420, %v3837
    %v3839 = vpop.f32.mrf.mxu0
    %3840 = vdwg.mxu0
    %3841 = vmatpush.bf16.msra.mxu0 %v3685
    %3842 = vmatpush.bf16.msra.mxu0 %v3677
    %3843 = vmatpush.bf16.msra.mxu0 %v3669
    %3844 = vmatpush.bf16.msra.mxu0 %v3661
    %3845 = vmatpush.bf16.msra.mxu0 %v3653
    %3846 = vmatpush.bf16.msra.mxu0 %v3645
    %3847 = vmatpush.bf16.msra.mxu0 %v3637
    %3848 = vmatpush.bf16.msra.mxu0 %v3629
    %3849 = vmatmul.bf16.gmra.mxu0 %v3347
    %v3850 = vpop.f32.mrf.mxu0
    %v3851 = vadd.f32 %v3421, %v3850
    %v3852 = vpop.f32.mrf.mxu0
    %3853 = vdwg.mxu0
    %3854 = vst [vmem:[#allocation16] sm:$0xff] %v3760
    %3855 = vst [vmem:[#allocation16 + $0x8] sm:$0xff] %v3773
    %3856 = vst [vmem:[#allocation16 + $0x10] sm:$0xff] %v3786
    %3857 = vst [vmem:[#allocation16 + $0x18] sm:$0xff] %v3799
    %3858 = vst [vmem:[#allocation16 + $0x20] sm:$0xff] %v3812
    %3859 = vst [vmem:[#allocation16 + $0x28] sm:$0xff] %v3825
    %3860 = vst [vmem:[#allocation16 + $0x30] sm:$0xff] %v3838
    %3861 = vst [vmem:[#allocation16 + $0x38] sm:$0xff] %v3851
    // Predicated region
    $region70: #{tpu_custom_call.1} parent=1 // pred_check
      _
    $region71: #{tpu_custom_call.1} parent=1 // pred_check_branch
      %3863 = sbr.rel (0) target = $region73
    $region72: #{tpu_custom_call.1} parent=1 // pred_region
      %3865 = vsyncadd [#allocation4], 0
      %s3867 = sshll.u32 [#allocation16], 4
      %s3868 = int_to_ptr.vmem [resolvable:$true] %s3867
      %s3869 = sshll.u32 %s9, 4
      %s3870 = int_to_ptr.hbm [resolvable:$true] %s3869
      %3872 = dma.vmem_to_hbm [thread:$0]  %s3868, 1024, %s3870, [#allocation4]
    $region73: #{tpu_custom_call.1} parent=1 // pred_fallthru
      _
    // Predicated region
    $region74: #{tpu_custom_call.1} parent=1 // pred_check
      _
    $region75: #{tpu_custom_call.1} parent=1 // pred_check_branch
      %3874 = sbr.rel (0) target = $region77
    $region76: #{tpu_custom_call.1} parent=1 // pred_region
      %3876 = dma.done [#allocation4], 1024
    $region77: #{tpu_custom_call.1} parent=1 // pred_fallthru
      _
    %3877 = vsyncpa [#allocation3], 1
    %3878 = vsyncpa [#allocation6], 1
    %3879 = vsyncpa [#allocation9], 1
    %3880 = vsyncpa [#allocation12], 1
    %3881 = vsyncpa [#allocation15], 1
    %3882 = vsyncpa [#allocation4], 1

</llo_original>
